<compile_context>
chip_gen: v7x
topology: tpu7x:2x2x1
jax: 0.10.0
libtpu: 0.0.40
codegen_flags: <defaults>
</compile_context>

<pallas_src>
import jax
import jax.numpy as jnp
from jax.experimental import pallas as pl
from jax.experimental.pallas import tpu as pltpu

INPUT_DIM = 6        # sum(data_sensor_dims) = 3 + 3
HIDDEN_DIM = 32
LAYER_COUNT = 3
CLASS_COUNT = 3


def _lstm_classifier_kernel(x_ref, wih_ref, whh_ref, b_ref, fcw_ref, fcb_ref,
                            out_ref):
    Bp = out_ref.shape[0]                 # padded batch (multiple of 8)
    H = whh_ref.shape[1]                  # hidden dim
    L = wih_ref.shape[0]                  # layer count
    T = x_ref.shape[0] // Bp              # sequence length

    def cell(gates, c_prev):
        # gate packing is (i, f, o, g): ONE wide sigmoid + ONE tanh per step
        ifo = jax.nn.sigmoid(gates[:, :3 * H])
        g = jnp.tanh(gates[:, 3 * H:])
        c_new = ifo[:, H:2 * H] * c_prev + ifo[:, :H] * g
        h_new = ifo[:, 2 * H:3 * H] * jnp.tanh(c_new)
        return h_new, c_new

    # Layer-0 input projection + bias hoisted out of the recurrence:
    # one (T*Bp, H) @ (H, 4H) matmul that depends only on the input.
    pg0 = (jnp.dot(x_ref[...], wih_ref[0],
                   preferred_element_type=jnp.float32)
           + b_ref[0])                                   # (T*Bp, 4H), in vregs

    h = [jnp.zeros((Bp, H), jnp.float32) for _ in range(L)]
    c = [jnp.zeros((Bp, H), jnp.float32) for _ in range(L)]
    outs = [[None] * T for _ in range(L)]

    # Wavefront over anti-diagonals d = l + t: cell (l, t) depends only on
    # (l, t-1) and (l-1, t), so the three layer chains overlap (dependency
    # depth L + T - 1 instead of L * T).  Fully unrolled; everything stays in
    # registers — no VMEM traffic on the recurrent chain.
    for d in range(L + T - 1):
        for l in range(min(L - 1, d), max(0, d - T + 1) - 1, -1):
            t = d - l
            if l == 0:
                pre = pg0[t * Bp:(t + 1) * Bp, :]        # tile-aligned vreg slice
            else:
                # per-step input projection: NOT on layer l's recurrent chain
                pre = (jnp.dot(outs[l - 1][t], wih_ref[l],
                               preferred_element_type=jnp.float32)
                       + b_ref[l])
            gates = (jnp.dot(h[l], whh_ref[l],
                             preferred_element_type=jnp.float32)
                     + pre)                              # (Bp, 4H)
            h[l], c[l] = cell(gates, c[l])
            outs[l][t] = h[l]

    # x = x[:, -1, :] ; x = fc(x) ; y = log_softmax(x, dim=1)
    h_last = outs[L - 1][T - 1]
    logits = (jnp.dot(h_last, fcw_ref[...], preferred_element_type=jnp.float32)
              + fcb_ref[...])                            # (Bp, C)
    m = jnp.max(logits, axis=1, keepdims=True)
    shifted = logits - m
    lse = jnp.log(jnp.sum(jnp.exp(shifted), axis=1, keepdims=True))
    out_ref[...] = (shifted - lse).astype(out_ref.dtype)


def init_params(key):
    """Deterministic parameters matching nn.LSTM / nn.Linear shapes."""
    k = 1.0 / jnp.sqrt(jnp.float32(HIDDEN_DIM))
    keys = jax.random.split(key, 4 * LAYER_COUNT + 2)
    params = {"lstm": []}
    for l in range(LAYER_COUNT):
        in_l = INPUT_DIM if l == 0 else HIDDEN_DIM
        kw = keys[4 * l:4 * l + 4]
        params["lstm"].append({
            "w_ih": jax.random.uniform(kw[0], (4 * HIDDEN_DIM, in_l),
                                       jnp.float32, -k, k),
            "w_hh": jax.random.uniform(kw[1], (4 * HIDDEN_DIM, HIDDEN_DIM),
                                       jnp.float32, -k, k),
            "b_ih": jax.random.uniform(kw[2], (4 * HIDDEN_DIM,),
                                       jnp.float32, -k, k),
            "b_hh": jax.random.uniform(kw[3], (4 * HIDDEN_DIM,),
                                       jnp.float32, -k, k),
        })
    kf = 1.0 / jnp.sqrt(jnp.float32(HIDDEN_DIM))
    params["fc_w"] = jax.random.uniform(keys[-2], (CLASS_COUNT, HIDDEN_DIM),
                                        jnp.float32, -kf, kf)
    params["fc_b"] = jax.random.uniform(keys[-1], (CLASS_COUNT,),
                                        jnp.float32, -kf, kf)
    return params


def classifier_forward(x, params):
    """x: (B, T, INPUT_DIM) float32  ->  (B, CLASS_COUNT) log-probs."""
    B, T, D = x.shape
    H, L, C = HIDDEN_DIM, LAYER_COUNT, CLASS_COUNT
    Bp = max(8, ((B + 7) // 8) * 8)       # pad batch to a full sublane group

    # Permutation of the 4H gate axis: PyTorch order (i, f, g, o) -> (i, f, o, g)
    gate_perm = jnp.concatenate([
        jnp.arange(0, H), jnp.arange(H, 2 * H),
        jnp.arange(3 * H, 4 * H), jnp.arange(2 * H, 3 * H)])

    # Pack / pad / permute parameters into uniform kernel-friendly tensors.
    wih_t, whh_t, bias = [], [], []
    for l in range(L):
        p = params["lstm"][l]
        w_ih = p["w_ih"][gate_perm]                      # (4H, in_l), reordered
        w_hh = p["w_hh"][gate_perm]                      # (4H, H),    reordered
        b = (p["b_ih"] + p["b_hh"])[gate_perm]           # (4H,)
        w_ih_pad = jnp.zeros((H, 4 * H), jnp.float32).at[:w_ih.shape[1], :].set(
            w_ih.T)                                      # pad input dim -> H
        wih_t.append(w_ih_pad)
        whh_t.append(w_hh.T)                             # (H, 4H)
        bias.append(b)
    wih_t = jnp.stack(wih_t)                             # (L, H, 4H)
    whh_t = jnp.stack(whh_t)                             # (L, H, 4H)
    bias = jnp.stack(bias).reshape(L, 1, 4 * H)          # (L, 1, 4H)
    fcw_t = params["fc_w"].T                             # (H, C)
    fcb = params["fc_b"].reshape(1, C)                   # (1, C)

    # Pad features 6 -> H and batch B -> Bp, go time-major, flatten to (T*Bp, H)
    x_pad = jnp.zeros((Bp, T, H), jnp.float32).at[:B, :, :D].set(x)
    x_tm = jnp.transpose(x_pad, (1, 0, 2)).reshape(T * Bp, H)

    vmem = pl.BlockSpec(memory_space=pltpu.MemorySpace.VMEM)
    out = pl.pallas_call(
        _lstm_classifier_kernel,
        out_shape=jax.ShapeDtypeStruct((Bp, C), jnp.float32),
        in_specs=[vmem] * 6,
        out_specs=vmem,
    )(x_tm, wih_t, whh_t, bias, fcw_t, fcb)
    return out[:B]


def classifier_reference(x, params):
    """Pure-JAX reference identical to the PyTorch forward semantics."""
    B, T, _ = x.shape
    H = HIDDEN_DIM
    seq = x
    for l in range(LAYER_COUNT):
        p = params["lstm"][l]
        h = jnp.zeros((B, H), jnp.float32)
        c = jnp.zeros((B, H), jnp.float32)
        outs = []
        for t in range(T):
            gates = seq[:, t, :] @ p["w_ih"].T + p["b_ih"] \
                    + h @ p["w_hh"].T + p["b_hh"]
            i = jax.nn.sigmoid(gates[:, 0 * H:1 * H])
            f = jax.nn.sigmoid(gates[:, 1 * H:2 * H])
            g = jnp.tanh(gates[:, 2 * H:3 * H])
            o = jax.nn.sigmoid(gates[:, 3 * H:4 * H])
            c = f * c + i * g
            h = o * jnp.tanh(c)
            outs.append(h)
        seq = jnp.stack(outs, axis=1)
    logits = seq[:, -1, :] @ params["fc_w"].T + params["fc_b"]
    return jax.nn.log_softmax(logits, axis=1)


if __name__ == "__main__":
    key = jax.random.PRNGKey(0)
    k_param, k_x = jax.random.split(key)

    B, T = 2, 8
    x = jax.random.normal(k_x, (B, T, INPUT_DIM), jnp.float32)
    params = init_params(k_param)

    y = classifier_forward(x, params)
    y = jax.block_until_ready(y)

    y_ref = classifier_reference(x, params)
    assert y.shape == (B, CLASS_COUNT)
    assert jnp.allclose(y, y_ref, atol=1e-4, rtol=1e-4), (y, y_ref)

    print("KERNEL_OK")
</pallas_src>

<mosaic_0001>
module attributes {stable_mosaic.version = 11 : i64} {
  func.func @_lstm_classifier_kernel(%arg0: memref<64x32xf32, #tpu.memory_space<vmem>>, %arg1: memref<3x32x128xf32, #tpu.memory_space<vmem>>, %arg2: memref<3x32x128xf32, #tpu.memory_space<vmem>>, %arg3: memref<3x1x128xf32, #tpu.memory_space<vmem>>, %arg4: memref<32x3xf32, #tpu.memory_space<vmem>>, %arg5: memref<1x3xf32, #tpu.memory_space<vmem>>, %arg6: memref<8x3xf32, #tpu.memory_space<vmem>>) attributes {dimension_semantics = [], scalar_prefetch = 0 : i64, scratch_operands = 0 : i64, tpu.core_type = #tpu.core_type<tc>} {
    %c0 = arith.constant 0 : index
    %c0_0 = arith.constant 0 : index
    %0 = vector.load %arg0[%c0, %c0_0] : memref<64x32xf32, #tpu.memory_space<vmem>>, vector<64x32xf32>
    %c0_1 = arith.constant 0 : index
    %c0_2 = arith.constant 0 : index
    %c0_3 = arith.constant 0 : index
    %1 = vector.load %arg1[%c0_1, %c0_2, %c0_3] : memref<3x32x128xf32, #tpu.memory_space<vmem>>, vector<1x32x128xf32>
    %2 = vector.shape_cast %1 : vector<1x32x128xf32> to vector<32x128xf32>
    %cst = arith.constant dense<0.000000e+00> : vector<64x128xf32>
    %3 = tpu.matmul %0, %2, %cst {dimension_numbers = #tpu.dot_dimension_numbers<[1], [0], [0], [1], [0, 0, 1, 1], [], []>} : vector<64x32xf32>, vector<32x128xf32>, vector<64x128xf32> -> vector<64x128xf32>
    %c0_4 = arith.constant 0 : index
    %c0_5 = arith.constant 0 : index
    %c0_6 = arith.constant 0 : index
    %4 = vector.load %arg3[%c0_4, %c0_5, %c0_6] : memref<3x1x128xf32, #tpu.memory_space<vmem>>, vector<1x1x128xf32>
    %5 = vector.shape_cast %4 : vector<1x1x128xf32> to vector<1x128xf32>
    %6 = vector.broadcast %5 : vector<1x128xf32> to vector<64x128xf32>
    %7 = arith.addf %3, %6 : vector<64x128xf32>
    %cst_7 = arith.constant 0.000000e+00 : f32
    %8 = vector.broadcast %cst_7 : f32 to vector<8x32xf32>
    %cst_8 = arith.constant 0.000000e+00 : f32
    %9 = vector.broadcast %cst_8 : f32 to vector<8x32xf32>
    %cst_9 = arith.constant 0.000000e+00 : f32
    %10 = vector.broadcast %cst_9 : f32 to vector<8x32xf32>
    %cst_10 = arith.constant 0.000000e+00 : f32
    %11 = vector.broadcast %cst_10 : f32 to vector<8x32xf32>
    %cst_11 = arith.constant 0.000000e+00 : f32
    %12 = vector.broadcast %cst_11 : f32 to vector<8x32xf32>
    %cst_12 = arith.constant 0.000000e+00 : f32
    %13 = vector.broadcast %cst_12 : f32 to vector<8x32xf32>
    %14 = vector.extract_strided_slice %7 {offsets = [0, 0], sizes = [8, 128], strides = [1, 1]} : vector<64x128xf32> to vector<8x128xf32>
    %c0_13 = arith.constant 0 : index
    %c0_14 = arith.constant 0 : index
    %c0_15 = arith.constant 0 : index
    %15 = vector.load %arg2[%c0_13, %c0_14, %c0_15] : memref<3x32x128xf32, #tpu.memory_space<vmem>>, vector<1x32x128xf32>
    %16 = vector.shape_cast %15 : vector<1x32x128xf32> to vector<32x128xf32>
    %cst_16 = arith.constant dense<0.000000e+00> : vector<8x128xf32>
    %17 = tpu.matmul %8, %16, %cst_16 {dimension_numbers = #tpu.dot_dimension_numbers<[1], [0], [0], [1], [0, 0, 1, 1], [], []>} : vector<8x32xf32>, vector<32x128xf32>, vector<8x128xf32> -> vector<8x128xf32>
    %18 = arith.addf %17, %14 : vector<8x128xf32>
    %19 = vector.extract_strided_slice %18 {offsets = [0, 0], sizes = [8, 96], strides = [1, 1]} : vector<8x128xf32> to vector<8x96xf32>
    %20 = arith.negf %19 : vector<8x96xf32>
    %21 = math.exp %20 : vector<8x96xf32>
    %cst_17 = arith.constant 1.000000e+00 : f32
    %22 = vector.broadcast %cst_17 : f32 to vector<8x96xf32>
    %23 = arith.addf %22, %21 : vector<8x96xf32>
    %24 = arith.divf %22, %23 : vector<8x96xf32>
    %25 = vector.extract_strided_slice %18 {offsets = [0, 96], sizes = [8, 32], strides = [1, 1]} : vector<8x128xf32> to vector<8x32xf32>
    %26 = math.tanh %25 : vector<8x32xf32>
    %27 = vector.extract_strided_slice %24 {offsets = [0, 32], sizes = [8, 32], strides = [1, 1]} : vector<8x96xf32> to vector<8x32xf32>
    %28 = arith.mulf %27, %11 : vector<8x32xf32>
    %29 = vector.extract_strided_slice %24 {offsets = [0, 0], sizes = [8, 32], strides = [1, 1]} : vector<8x96xf32> to vector<8x32xf32>
    %30 = arith.mulf %29, %26 : vector<8x32xf32>
    %31 = arith.addf %28, %30 : vector<8x32xf32>
    %32 = vector.extract_strided_slice %24 {offsets = [0, 64], sizes = [8, 32], strides = [1, 1]} : vector<8x96xf32> to vector<8x32xf32>
    %33 = math.tanh %31 : vector<8x32xf32>
    %34 = arith.mulf %32, %33 : vector<8x32xf32>
    %c1 = arith.constant 1 : index
    %c0_18 = arith.constant 0 : index
    %c0_19 = arith.constant 0 : index
    %35 = vector.load %arg1[%c1, %c0_18, %c0_19] : memref<3x32x128xf32, #tpu.memory_space<vmem>>, vector<1x32x128xf32>
    %36 = vector.shape_cast %35 : vector<1x32x128xf32> to vector<32x128xf32>
    %cst_20 = arith.constant dense<0.000000e+00> : vector<8x128xf32>
    %37 = tpu.matmul %34, %36, %cst_20 {dimension_numbers = #tpu.dot_dimension_numbers<[1], [0], [0], [1], [0, 0, 1, 1], [], []>} : vector<8x32xf32>, vector<32x128xf32>, vector<8x128xf32> -> vector<8x128xf32>
    %c1_21 = arith.constant 1 : index
    %c0_22 = arith.constant 0 : index
    %c0_23 = arith.constant 0 : index
    %38 = vector.load %arg3[%c1_21, %c0_22, %c0_23] : memref<3x1x128xf32, #tpu.memory_space<vmem>>, vector<1x1x128xf32>
    %39 = vector.shape_cast %38 : vector<1x1x128xf32> to vector<1x128xf32>
    %40 = vector.broadcast %39 : vector<1x128xf32> to vector<8x128xf32>
    %41 = arith.addf %37, %40 : vector<8x128xf32>
    %c1_24 = arith.constant 1 : index
    %c0_25 = arith.constant 0 : index
    %c0_26 = arith.constant 0 : index
    %42 = vector.load %arg2[%c1_24, %c0_25, %c0_26] : memref<3x32x128xf32, #tpu.memory_space<vmem>>, vector<1x32x128xf32>
    %43 = vector.shape_cast %42 : vector<1x32x128xf32> to vector<32x128xf32>
    %cst_27 = arith.constant dense<0.000000e+00> : vector<8x128xf32>
    %44 = tpu.matmul %9, %43, %cst_27 {dimension_numbers = #tpu.dot_dimension_numbers<[1], [0], [0], [1], [0, 0, 1, 1], [], []>} : vector<8x32xf32>, vector<32x128xf32>, vector<8x128xf32> -> vector<8x128xf32>
    %45 = arith.addf %44, %41 : vector<8x128xf32>
    %46 = vector.extract_strided_slice %45 {offsets = [0, 0], sizes = [8, 96], strides = [1, 1]} : vector<8x128xf32> to vector<8x96xf32>
    %47 = arith.negf %46 : vector<8x96xf32>
    %48 = math.exp %47 : vector<8x96xf32>
    %cst_28 = arith.constant 1.000000e+00 : f32
    %49 = vector.broadcast %cst_28 : f32 to vector<8x96xf32>
    %50 = arith.addf %49, %48 : vector<8x96xf32>
    %51 = arith.divf %49, %50 : vector<8x96xf32>
    %52 = vector.extract_strided_slice %45 {offsets = [0, 96], sizes = [8, 32], strides = [1, 1]} : vector<8x128xf32> to vector<8x32xf32>
    %53 = math.tanh %52 : vector<8x32xf32>
    %54 = vector.extract_strided_slice %51 {offsets = [0, 32], sizes = [8, 32], strides = [1, 1]} : vector<8x96xf32> to vector<8x32xf32>
    %55 = arith.mulf %54, %12 : vector<8x32xf32>
    %56 = vector.extract_strided_slice %51 {offsets = [0, 0], sizes = [8, 32], strides = [1, 1]} : vector<8x96xf32> to vector<8x32xf32>
    %57 = arith.mulf %56, %53 : vector<8x32xf32>
    %58 = arith.addf %55, %57 : vector<8x32xf32>
    %59 = vector.extract_strided_slice %51 {offsets = [0, 64], sizes = [8, 32], strides = [1, 1]} : vector<8x96xf32> to vector<8x32xf32>
    %60 = math.tanh %58 : vector<8x32xf32>
    %61 = arith.mulf %59, %60 : vector<8x32xf32>
    %62 = vector.extract_strided_slice %7 {offsets = [8, 0], sizes = [8, 128], strides = [1, 1]} : vector<64x128xf32> to vector<8x128xf32>
    %c0_29 = arith.constant 0 : index
    %c0_30 = arith.constant 0 : index
    %c0_31 = arith.constant 0 : index
    %63 = vector.load %arg2[%c0_29, %c0_30, %c0_31] : memref<3x32x128xf32, #tpu.memory_space<vmem>>, vector<1x32x128xf32>
    %64 = vector.shape_cast %63 : vector<1x32x128xf32> to vector<32x128xf32>
    %cst_32 = arith.constant dense<0.000000e+00> : vector<8x128xf32>
    %65 = tpu.matmul %34, %64, %cst_32 {dimension_numbers = #tpu.dot_dimension_numbers<[1], [0], [0], [1], [0, 0, 1, 1], [], []>} : vector<8x32xf32>, vector<32x128xf32>, vector<8x128xf32> -> vector<8x128xf32>
    %66 = arith.addf %65, %62 : vector<8x128xf32>
    %67 = vector.extract_strided_slice %66 {offsets = [0, 0], sizes = [8, 96], strides = [1, 1]} : vector<8x128xf32> to vector<8x96xf32>
    %68 = arith.negf %67 : vector<8x96xf32>
    %69 = math.exp %68 : vector<8x96xf32>
    %cst_33 = arith.constant 1.000000e+00 : f32
    %70 = vector.broadcast %cst_33 : f32 to vector<8x96xf32>
    %71 = arith.addf %70, %69 : vector<8x96xf32>
    %72 = arith.divf %70, %71 : vector<8x96xf32>
    %73 = vector.extract_strided_slice %66 {offsets = [0, 96], sizes = [8, 32], strides = [1, 1]} : vector<8x128xf32> to vector<8x32xf32>
    %74 = math.tanh %73 : vector<8x32xf32>
    %75 = vector.extract_strided_slice %72 {offsets = [0, 32], sizes = [8, 32], strides = [1, 1]} : vector<8x96xf32> to vector<8x32xf32>
    %76 = arith.mulf %75, %31 : vector<8x32xf32>
    %77 = vector.extract_strided_slice %72 {offsets = [0, 0], sizes = [8, 32], strides = [1, 1]} : vector<8x96xf32> to vector<8x32xf32>
    %78 = arith.mulf %77, %74 : vector<8x32xf32>
    %79 = arith.addf %76, %78 : vector<8x32xf32>
    %80 = vector.extract_strided_slice %72 {offsets = [0, 64], sizes = [8, 32], strides = [1, 1]} : vector<8x96xf32> to vector<8x32xf32>
    %81 = math.tanh %79 : vector<8x32xf32>
    %82 = arith.mulf %80, %81 : vector<8x32xf32>
    %c2 = arith.constant 2 : index
    %c0_34 = arith.constant 0 : index
    %c0_35 = arith.constant 0 : index
    %83 = vector.load %arg1[%c2, %c0_34, %c0_35] : memref<3x32x128xf32, #tpu.memory_space<vmem>>, vector<1x32x128xf32>
    %84 = vector.shape_cast %83 : vector<1x32x128xf32> to vector<32x128xf32>
    %cst_36 = arith.constant dense<0.000000e+00> : vector<8x128xf32>
    %85 = tpu.matmul %61, %84, %cst_36 {dimension_numbers = #tpu.dot_dimension_numbers<[1], [0], [0], [1], [0, 0, 1, 1], [], []>} : vector<8x32xf32>, vector<32x128xf32>, vector<8x128xf32> -> vector<8x128xf32>
    %c2_37 = arith.constant 2 : index
    %c0_38 = arith.constant 0 : index
    %c0_39 = arith.constant 0 : index
    %86 = vector.load %arg3[%c2_37, %c0_38, %c0_39] : memref<3x1x128xf32, #tpu.memory_space<vmem>>, vector<1x1x128xf32>
    %87 = vector.shape_cast %86 : vector<1x1x128xf32> to vector<1x128xf32>
    %88 = vector.broadcast %87 : vector<1x128xf32> to vector<8x128xf32>
    %89 = arith.addf %85, %88 : vector<8x128xf32>
    %c2_40 = arith.constant 2 : index
    %c0_41 = arith.constant 0 : index
    %c0_42 = arith.constant 0 : index
    %90 = vector.load %arg2[%c2_40, %c0_41, %c0_42] : memref<3x32x128xf32, #tpu.memory_space<vmem>>, vector<1x32x128xf32>
    %91 = vector.shape_cast %90 : vector<1x32x128xf32> to vector<32x128xf32>
    %cst_43 = arith.constant dense<0.000000e+00> : vector<8x128xf32>
    %92 = tpu.matmul %10, %91, %cst_43 {dimension_numbers = #tpu.dot_dimension_numbers<[1], [0], [0], [1], [0, 0, 1, 1], [], []>} : vector<8x32xf32>, vector<32x128xf32>, vector<8x128xf32> -> vector<8x128xf32>
    %93 = arith.addf %92, %89 : vector<8x128xf32>
    %94 = vector.extract_strided_slice %93 {offsets = [0, 0], sizes = [8, 96], strides = [1, 1]} : vector<8x128xf32> to vector<8x96xf32>
    %95 = arith.negf %94 : vector<8x96xf32>
    %96 = math.exp %95 : vector<8x96xf32>
    %cst_44 = arith.constant 1.000000e+00 : f32
    %97 = vector.broadcast %cst_44 : f32 to vector<8x96xf32>
    %98 = arith.addf %97, %96 : vector<8x96xf32>
    %99 = arith.divf %97, %98 : vector<8x96xf32>
    %100 = vector.extract_strided_slice %93 {offsets = [0, 96], sizes = [8, 32], strides = [1, 1]} : vector<8x128xf32> to vector<8x32xf32>
    %101 = math.tanh %100 : vector<8x32xf32>
    %102 = vector.extract_strided_slice %99 {offsets = [0, 32], sizes = [8, 32], strides = [1, 1]} : vector<8x96xf32> to vector<8x32xf32>
    %103 = arith.mulf %102, %13 : vector<8x32xf32>
    %104 = vector.extract_strided_slice %99 {offsets = [0, 0], sizes = [8, 32], strides = [1, 1]} : vector<8x96xf32> to vector<8x32xf32>
    %105 = arith.mulf %104, %101 : vector<8x32xf32>
    %106 = arith.addf %103, %105 : vector<8x32xf32>
    %107 = vector.extract_strided_slice %99 {offsets = [0, 64], sizes = [8, 32], strides = [1, 1]} : vector<8x96xf32> to vector<8x32xf32>
    %108 = math.tanh %106 : vector<8x32xf32>
    %109 = arith.mulf %107, %108 : vector<8x32xf32>
    %c1_45 = arith.constant 1 : index
    %c0_46 = arith.constant 0 : index
    %c0_47 = arith.constant 0 : index
    %110 = vector.load %arg1[%c1_45, %c0_46, %c0_47] : memref<3x32x128xf32, #tpu.memory_space<vmem>>, vector<1x32x128xf32>
    %111 = vector.shape_cast %110 : vector<1x32x128xf32> to vector<32x128xf32>
    %cst_48 = arith.constant dense<0.000000e+00> : vector<8x128xf32>
    %112 = tpu.matmul %82, %111, %cst_48 {dimension_numbers = #tpu.dot_dimension_numbers<[1], [0], [0], [1], [0, 0, 1, 1], [], []>} : vector<8x32xf32>, vector<32x128xf32>, vector<8x128xf32> -> vector<8x128xf32>
    %c1_49 = arith.constant 1 : index
    %c0_50 = arith.constant 0 : index
    %c0_51 = arith.constant 0 : index
    %113 = vector.load %arg3[%c1_49, %c0_50, %c0_51] : memref<3x1x128xf32, #tpu.memory_space<vmem>>, vector<1x1x128xf32>
    %114 = vector.shape_cast %113 : vector<1x1x128xf32> to vector<1x128xf32>
    %115 = vector.broadcast %114 : vector<1x128xf32> to vector<8x128xf32>
    %116 = arith.addf %112, %115 : vector<8x128xf32>
    %c1_52 = arith.constant 1 : index
    %c0_53 = arith.constant 0 : index
    %c0_54 = arith.constant 0 : index
    %117 = vector.load %arg2[%c1_52, %c0_53, %c0_54] : memref<3x32x128xf32, #tpu.memory_space<vmem>>, vector<1x32x128xf32>
    %118 = vector.shape_cast %117 : vector<1x32x128xf32> to vector<32x128xf32>
    %cst_55 = arith.constant dense<0.000000e+00> : vector<8x128xf32>
    %119 = tpu.matmul %61, %118, %cst_55 {dimension_numbers = #tpu.dot_dimension_numbers<[1], [0], [0], [1], [0, 0, 1, 1], [], []>} : vector<8x32xf32>, vector<32x128xf32>, vector<8x128xf32> -> vector<8x128xf32>
    %120 = arith.addf %119, %116 : vector<8x128xf32>
    %121 = vector.extract_strided_slice %120 {offsets = [0, 0], sizes = [8, 96], strides = [1, 1]} : vector<8x128xf32> to vector<8x96xf32>
    %122 = arith.negf %121 : vector<8x96xf32>
    %123 = math.exp %122 : vector<8x96xf32>
    %cst_56 = arith.constant 1.000000e+00 : f32
    %124 = vector.broadcast %cst_56 : f32 to vector<8x96xf32>
    %125 = arith.addf %124, %123 : vector<8x96xf32>
    %126 = arith.divf %124, %125 : vector<8x96xf32>
    %127 = vector.extract_strided_slice %120 {offsets = [0, 96], sizes = [8, 32], strides = [1, 1]} : vector<8x128xf32> to vector<8x32xf32>
    %128 = math.tanh %127 : vector<8x32xf32>
    %129 = vector.extract_strided_slice %126 {offsets = [0, 32], sizes = [8, 32], strides = [1, 1]} : vector<8x96xf32> to vector<8x32xf32>
    %130 = arith.mulf %129, %58 : vector<8x32xf32>
    %131 = vector.extract_strided_slice %126 {offsets = [0, 0], sizes = [8, 32], strides = [1, 1]} : vector<8x96xf32> to vector<8x32xf32>
    %132 = arith.mulf %131, %128 : vector<8x32xf32>
    %133 = arith.addf %130, %132 : vector<8x32xf32>
    %134 = vector.extract_strided_slice %126 {offsets = [0, 64], sizes = [8, 32], strides = [1, 1]} : vector<8x96xf32> to vector<8x32xf32>
    %135 = math.tanh %133 : vector<8x32xf32>
    %136 = arith.mulf %134, %135 : vector<8x32xf32>
    %137 = vector.extract_strided_slice %7 {offsets = [16, 0], sizes = [8, 128], strides = [1, 1]} : vector<64x128xf32> to vector<8x128xf32>
    %c0_57 = arith.constant 0 : index
    %c0_58 = arith.constant 0 : index
    %c0_59 = arith.constant 0 : index
    %138 = vector.load %arg2[%c0_57, %c0_58, %c0_59] : memref<3x32x128xf32, #tpu.memory_space<vmem>>, vector<1x32x128xf32>
    %139 = vector.shape_cast %138 : vector<1x32x128xf32> to vector<32x128xf32>
    %cst_60 = arith.constant dense<0.000000e+00> : vector<8x128xf32>
    %140 = tpu.matmul %82, %139, %cst_60 {dimension_numbers = #tpu.dot_dimension_numbers<[1], [0], [0], [1], [0, 0, 1, 1], [], []>} : vector<8x32xf32>, vector<32x128xf32>, vector<8x128xf32> -> vector<8x128xf32>
    %141 = arith.addf %140, %137 : vector<8x128xf32>
    %142 = vector.extract_strided_slice %141 {offsets = [0, 0], sizes = [8, 96], strides = [1, 1]} : vector<8x128xf32> to vector<8x96xf32>
    %143 = arith.negf %142 : vector<8x96xf32>
    %144 = math.exp %143 : vector<8x96xf32>
    %cst_61 = arith.constant 1.000000e+00 : f32
    %145 = vector.broadcast %cst_61 : f32 to vector<8x96xf32>
    %146 = arith.addf %145, %144 : vector<8x96xf32>
    %147 = arith.divf %145, %146 : vector<8x96xf32>
    %148 = vector.extract_strided_slice %141 {offsets = [0, 96], sizes = [8, 32], strides = [1, 1]} : vector<8x128xf32> to vector<8x32xf32>
    %149 = math.tanh %148 : vector<8x32xf32>
    %150 = vector.extract_strided_slice %147 {offsets = [0, 32], sizes = [8, 32], strides = [1, 1]} : vector<8x96xf32> to vector<8x32xf32>
    %151 = arith.mulf %150, %79 : vector<8x32xf32>
    %152 = vector.extract_strided_slice %147 {offsets = [0, 0], sizes = [8, 32], strides = [1, 1]} : vector<8x96xf32> to vector<8x32xf32>
    %153 = arith.mulf %152, %149 : vector<8x32xf32>
    %154 = arith.addf %151, %153 : vector<8x32xf32>
    %155 = vector.extract_strided_slice %147 {offsets = [0, 64], sizes = [8, 32], strides = [1, 1]} : vector<8x96xf32> to vector<8x32xf32>
    %156 = math.tanh %154 : vector<8x32xf32>
    %157 = arith.mulf %155, %156 : vector<8x32xf32>
    %c2_62 = arith.constant 2 : index
    %c0_63 = arith.constant 0 : index
    %c0_64 = arith.constant 0 : index
    %158 = vector.load %arg1[%c2_62, %c0_63, %c0_64] : memref<3x32x128xf32, #tpu.memory_space<vmem>>, vector<1x32x128xf32>
    %159 = vector.shape_cast %158 : vector<1x32x128xf32> to vector<32x128xf32>
    %cst_65 = arith.constant dense<0.000000e+00> : vector<8x128xf32>
    %160 = tpu.matmul %136, %159, %cst_65 {dimension_numbers = #tpu.dot_dimension_numbers<[1], [0], [0], [1], [0, 0, 1, 1], [], []>} : vector<8x32xf32>, vector<32x128xf32>, vector<8x128xf32> -> vector<8x128xf32>
    %c2_66 = arith.constant 2 : index
    %c0_67 = arith.constant 0 : index
    %c0_68 = arith.constant 0 : index
    %161 = vector.load %arg3[%c2_66, %c0_67, %c0_68] : memref<3x1x128xf32, #tpu.memory_space<vmem>>, vector<1x1x128xf32>
    %162 = vector.shape_cast %161 : vector<1x1x128xf32> to vector<1x128xf32>
    %163 = vector.broadcast %162 : vector<1x128xf32> to vector<8x128xf32>
    %164 = arith.addf %160, %163 : vector<8x128xf32>
    %c2_69 = arith.constant 2 : index
    %c0_70 = arith.constant 0 : index
    %c0_71 = arith.constant 0 : index
    %165 = vector.load %arg2[%c2_69, %c0_70, %c0_71] : memref<3x32x128xf32, #tpu.memory_space<vmem>>, vector<1x32x128xf32>
    %166 = vector.shape_cast %165 : vector<1x32x128xf32> to vector<32x128xf32>
    %cst_72 = arith.constant dense<0.000000e+00> : vector<8x128xf32>
    %167 = tpu.matmul %109, %166, %cst_72 {dimension_numbers = #tpu.dot_dimension_numbers<[1], [0], [0], [1], [0, 0, 1, 1], [], []>} : vector<8x32xf32>, vector<32x128xf32>, vector<8x128xf32> -> vector<8x128xf32>
    %168 = arith.addf %167, %164 : vector<8x128xf32>
    %169 = vector.extract_strided_slice %168 {offsets = [0, 0], sizes = [8, 96], strides = [1, 1]} : vector<8x128xf32> to vector<8x96xf32>
    %170 = arith.negf %169 : vector<8x96xf32>
    %171 = math.exp %170 : vector<8x96xf32>
    %cst_73 = arith.constant 1.000000e+00 : f32
    %172 = vector.broadcast %cst_73 : f32 to vector<8x96xf32>
    %173 = arith.addf %172, %171 : vector<8x96xf32>
    %174 = arith.divf %172, %173 : vector<8x96xf32>
    %175 = vector.extract_strided_slice %168 {offsets = [0, 96], sizes = [8, 32], strides = [1, 1]} : vector<8x128xf32> to vector<8x32xf32>
    %176 = math.tanh %175 : vector<8x32xf32>
    %177 = vector.extract_strided_slice %174 {offsets = [0, 32], sizes = [8, 32], strides = [1, 1]} : vector<8x96xf32> to vector<8x32xf32>
    %178 = arith.mulf %177, %106 : vector<8x32xf32>
    %179 = vector.extract_strided_slice %174 {offsets = [0, 0], sizes = [8, 32], strides = [1, 1]} : vector<8x96xf32> to vector<8x32xf32>
    %180 = arith.mulf %179, %176 : vector<8x32xf32>
    %181 = arith.addf %178, %180 : vector<8x32xf32>
    %182 = vector.extract_strided_slice %174 {offsets = [0, 64], sizes = [8, 32], strides = [1, 1]} : vector<8x96xf32> to vector<8x32xf32>
    %183 = math.tanh %181 : vector<8x32xf32>
    %184 = arith.mulf %182, %183 : vector<8x32xf32>
    %c1_74 = arith.constant 1 : index
    %c0_75 = arith.constant 0 : index
    %c0_76 = arith.constant 0 : index
    %185 = vector.load %arg1[%c1_74, %c0_75, %c0_76] : memref<3x32x128xf32, #tpu.memory_space<vmem>>, vector<1x32x128xf32>
    %186 = vector.shape_cast %185 : vector<1x32x128xf32> to vector<32x128xf32>
    %cst_77 = arith.constant dense<0.000000e+00> : vector<8x128xf32>
    %187 = tpu.matmul %157, %186, %cst_77 {dimension_numbers = #tpu.dot_dimension_numbers<[1], [0], [0], [1], [0, 0, 1, 1], [], []>} : vector<8x32xf32>, vector<32x128xf32>, vector<8x128xf32> -> vector<8x128xf32>
    %c1_78 = arith.constant 1 : index
    %c0_79 = arith.constant 0 : index
    %c0_80 = arith.constant 0 : index
    %188 = vector.load %arg3[%c1_78, %c0_79, %c0_80] : memref<3x1x128xf32, #tpu.memory_space<vmem>>, vector<1x1x128xf32>
    %189 = vector.shape_cast %188 : vector<1x1x128xf32> to vector<1x128xf32>
    %190 = vector.broadcast %189 : vector<1x128xf32> to vector<8x128xf32>
    %191 = arith.addf %187, %190 : vector<8x128xf32>
    %c1_81 = arith.constant 1 : index
    %c0_82 = arith.constant 0 : index
    %c0_83 = arith.constant 0 : index
    %192 = vector.load %arg2[%c1_81, %c0_82, %c0_83] : memref<3x32x128xf32, #tpu.memory_space<vmem>>, vector<1x32x128xf32>
    %193 = vector.shape_cast %192 : vector<1x32x128xf32> to vector<32x128xf32>
    %cst_84 = arith.constant dense<0.000000e+00> : vector<8x128xf32>
    %194 = tpu.matmul %136, %193, %cst_84 {dimension_numbers = #tpu.dot_dimension_numbers<[1], [0], [0], [1], [0, 0, 1, 1], [], []>} : vector<8x32xf32>, vector<32x128xf32>, vector<8x128xf32> -> vector<8x128xf32>
    %195 = arith.addf %194, %191 : vector<8x128xf32>
    %196 = vector.extract_strided_slice %195 {offsets = [0, 0], sizes = [8, 96], strides = [1, 1]} : vector<8x128xf32> to vector<8x96xf32>
    %197 = arith.negf %196 : vector<8x96xf32>
    %198 = math.exp %197 : vector<8x96xf32>
    %cst_85 = arith.constant 1.000000e+00 : f32
    %199 = vector.broadcast %cst_85 : f32 to vector<8x96xf32>
    %200 = arith.addf %199, %198 : vector<8x96xf32>
    %201 = arith.divf %199, %200 : vector<8x96xf32>
    %202 = vector.extract_strided_slice %195 {offsets = [0, 96], sizes = [8, 32], strides = [1, 1]} : vector<8x128xf32> to vector<8x32xf32>
    %203 = math.tanh %202 : vector<8x32xf32>
    %204 = vector.extract_strided_slice %201 {offsets = [0, 32], sizes = [8, 32], strides = [1, 1]} : vector<8x96xf32> to vector<8x32xf32>
    %205 = arith.mulf %204, %133 : vector<8x32xf32>
    %206 = vector.extract_strided_slice %201 {offsets = [0, 0], sizes = [8, 32], strides = [1, 1]} : vector<8x96xf32> to vector<8x32xf32>
    %207 = arith.mulf %206, %203 : vector<8x32xf32>
    %208 = arith.addf %205, %207 : vector<8x32xf32>
    %209 = vector.extract_strided_slice %201 {offsets = [0, 64], sizes = [8, 32], strides = [1, 1]} : vector<8x96xf32> to vector<8x32xf32>
    %210 = math.tanh %208 : vector<8x32xf32>
    %211 = arith.mulf %209, %210 : vector<8x32xf32>
    %212 = vector.extract_strided_slice %7 {offsets = [24, 0], sizes = [8, 128], strides = [1, 1]} : vector<64x128xf32> to vector<8x128xf32>
    %c0_86 = arith.constant 0 : index
    %c0_87 = arith.constant 0 : index
    %c0_88 = arith.constant 0 : index
    %213 = vector.load %arg2[%c0_86, %c0_87, %c0_88] : memref<3x32x128xf32, #tpu.memory_space<vmem>>, vector<1x32x128xf32>
    %214 = vector.shape_cast %213 : vector<1x32x128xf32> to vector<32x128xf32>
    %cst_89 = arith.constant dense<0.000000e+00> : vector<8x128xf32>
    %215 = tpu.matmul %157, %214, %cst_89 {dimension_numbers = #tpu.dot_dimension_numbers<[1], [0], [0], [1], [0, 0, 1, 1], [], []>} : vector<8x32xf32>, vector<32x128xf32>, vector<8x128xf32> -> vector<8x128xf32>
    %216 = arith.addf %215, %212 : vector<8x128xf32>
    %217 = vector.extract_strided_slice %216 {offsets = [0, 0], sizes = [8, 96], strides = [1, 1]} : vector<8x128xf32> to vector<8x96xf32>
    %218 = arith.negf %217 : vector<8x96xf32>
    %219 = math.exp %218 : vector<8x96xf32>
    %cst_90 = arith.constant 1.000000e+00 : f32
    %220 = vector.broadcast %cst_90 : f32 to vector<8x96xf32>
    %221 = arith.addf %220, %219 : vector<8x96xf32>
    %222 = arith.divf %220, %221 : vector<8x96xf32>
    %223 = vector.extract_strided_slice %216 {offsets = [0, 96], sizes = [8, 32], strides = [1, 1]} : vector<8x128xf32> to vector<8x32xf32>
    %224 = math.tanh %223 : vector<8x32xf32>
    %225 = vector.extract_strided_slice %222 {offsets = [0, 32], sizes = [8, 32], strides = [1, 1]} : vector<8x96xf32> to vector<8x32xf32>
    %226 = arith.mulf %225, %154 : vector<8x32xf32>
    %227 = vector.extract_strided_slice %222 {offsets = [0, 0], sizes = [8, 32], strides = [1, 1]} : vector<8x96xf32> to vector<8x32xf32>
    %228 = arith.mulf %227, %224 : vector<8x32xf32>
    %229 = arith.addf %226, %228 : vector<8x32xf32>
    %230 = vector.extract_strided_slice %222 {offsets = [0, 64], sizes = [8, 32], strides = [1, 1]} : vector<8x96xf32> to vector<8x32xf32>
    %231 = math.tanh %229 : vector<8x32xf32>
    %232 = arith.mulf %230, %231 : vector<8x32xf32>
    %c2_91 = arith.constant 2 : index
    %c0_92 = arith.constant 0 : index
    %c0_93 = arith.constant 0 : index
    %233 = vector.load %arg1[%c2_91, %c0_92, %c0_93] : memref<3x32x128xf32, #tpu.memory_space<vmem>>, vector<1x32x128xf32>
    %234 = vector.shape_cast %233 : vector<1x32x128xf32> to vector<32x128xf32>
    %cst_94 = arith.constant dense<0.000000e+00> : vector<8x128xf32>
    %235 = tpu.matmul %211, %234, %cst_94 {dimension_numbers = #tpu.dot_dimension_numbers<[1], [0], [0], [1], [0, 0, 1, 1], [], []>} : vector<8x32xf32>, vector<32x128xf32>, vector<8x128xf32> -> vector<8x128xf32>
    %c2_95 = arith.constant 2 : index
    %c0_96 = arith.constant 0 : index
    %c0_97 = arith.constant 0 : index
    %236 = vector.load %arg3[%c2_95, %c0_96, %c0_97] : memref<3x1x128xf32, #tpu.memory_space<vmem>>, vector<1x1x128xf32>
    %237 = vector.shape_cast %236 : vector<1x1x128xf32> to vector<1x128xf32>
    %238 = vector.broadcast %237 : vector<1x128xf32> to vector<8x128xf32>
    %239 = arith.addf %235, %238 : vector<8x128xf32>
    %c2_98 = arith.constant 2 : index
    %c0_99 = arith.constant 0 : index
    %c0_100 = arith.constant 0 : index
    %240 = vector.load %arg2[%c2_98, %c0_99, %c0_100] : memref<3x32x128xf32, #tpu.memory_space<vmem>>, vector<1x32x128xf32>
    %241 = vector.shape_cast %240 : vector<1x32x128xf32> to vector<32x128xf32>
    %cst_101 = arith.constant dense<0.000000e+00> : vector<8x128xf32>
    %242 = tpu.matmul %184, %241, %cst_101 {dimension_numbers = #tpu.dot_dimension_numbers<[1], [0], [0], [1], [0, 0, 1, 1], [], []>} : vector<8x32xf32>, vector<32x128xf32>, vector<8x128xf32> -> vector<8x128xf32>
    %243 = arith.addf %242, %239 : vector<8x128xf32>
    %244 = vector.extract_strided_slice %243 {offsets = [0, 0], sizes = [8, 96], strides = [1, 1]} : vector<8x128xf32> to vector<8x96xf32>
    %245 = arith.negf %244 : vector<8x96xf32>
    %246 = math.exp %245 : vector<8x96xf32>
    %cst_102 = arith.constant 1.000000e+00 : f32
    %247 = vector.broadcast %cst_102 : f32 to vector<8x96xf32>
    %248 = arith.addf %247, %246 : vector<8x96xf32>
    %249 = arith.divf %247, %248 : vector<8x96xf32>
    %250 = vector.extract_strided_slice %243 {offsets = [0, 96], sizes = [8, 32], strides = [1, 1]} : vector<8x128xf32> to vector<8x32xf32>
    %251 = math.tanh %250 : vector<8x32xf32>
    %252 = vector.extract_strided_slice %249 {offsets = [0, 32], sizes = [8, 32], strides = [1, 1]} : vector<8x96xf32> to vector<8x32xf32>
    %253 = arith.mulf %252, %181 : vector<8x32xf32>
    %254 = vector.extract_strided_slice %249 {offsets = [0, 0], sizes = [8, 32], strides = [1, 1]} : vector<8x96xf32> to vector<8x32xf32>
    %255 = arith.mulf %254, %251 : vector<8x32xf32>
    %256 = arith.addf %253, %255 : vector<8x32xf32>
    %257 = vector.extract_strided_slice %249 {offsets = [0, 64], sizes = [8, 32], strides = [1, 1]} : vector<8x96xf32> to vector<8x32xf32>
    %258 = math.tanh %256 : vector<8x32xf32>
    %259 = arith.mulf %257, %258 : vector<8x32xf32>
    %c1_103 = arith.constant 1 : index
    %c0_104 = arith.constant 0 : index
    %c0_105 = arith.constant 0 : index
    %260 = vector.load %arg1[%c1_103, %c0_104, %c0_105] : memref<3x32x128xf32, #tpu.memory_space<vmem>>, vector<1x32x128xf32>
    %261 = vector.shape_cast %260 : vector<1x32x128xf32> to vector<32x128xf32>
    %cst_106 = arith.constant dense<0.000000e+00> : vector<8x128xf32>
    %262 = tpu.matmul %232, %261, %cst_106 {dimension_numbers = #tpu.dot_dimension_numbers<[1], [0], [0], [1], [0, 0, 1, 1], [], []>} : vector<8x32xf32>, vector<32x128xf32>, vector<8x128xf32> -> vector<8x128xf32>
    %c1_107 = arith.constant 1 : index
    %c0_108 = arith.constant 0 : index
    %c0_109 = arith.constant 0 : index
    %263 = vector.load %arg3[%c1_107, %c0_108, %c0_109] : memref<3x1x128xf32, #tpu.memory_space<vmem>>, vector<1x1x128xf32>
    %264 = vector.shape_cast %263 : vector<1x1x128xf32> to vector<1x128xf32>
    %265 = vector.broadcast %264 : vector<1x128xf32> to vector<8x128xf32>
    %266 = arith.addf %262, %265 : vector<8x128xf32>
    %c1_110 = arith.constant 1 : index
    %c0_111 = arith.constant 0 : index
    %c0_112 = arith.constant 0 : index
    %267 = vector.load %arg2[%c1_110, %c0_111, %c0_112] : memref<3x32x128xf32, #tpu.memory_space<vmem>>, vector<1x32x128xf32>
    %268 = vector.shape_cast %267 : vector<1x32x128xf32> to vector<32x128xf32>
    %cst_113 = arith.constant dense<0.000000e+00> : vector<8x128xf32>
    %269 = tpu.matmul %211, %268, %cst_113 {dimension_numbers = #tpu.dot_dimension_numbers<[1], [0], [0], [1], [0, 0, 1, 1], [], []>} : vector<8x32xf32>, vector<32x128xf32>, vector<8x128xf32> -> vector<8x128xf32>
    %270 = arith.addf %269, %266 : vector<8x128xf32>
    %271 = vector.extract_strided_slice %270 {offsets = [0, 0], sizes = [8, 96], strides = [1, 1]} : vector<8x128xf32> to vector<8x96xf32>
    %272 = arith.negf %271 : vector<8x96xf32>
    %273 = math.exp %272 : vector<8x96xf32>
    %cst_114 = arith.constant 1.000000e+00 : f32
    %274 = vector.broadcast %cst_114 : f32 to vector<8x96xf32>
    %275 = arith.addf %274, %273 : vector<8x96xf32>
    %276 = arith.divf %274, %275 : vector<8x96xf32>
    %277 = vector.extract_strided_slice %270 {offsets = [0, 96], sizes = [8, 32], strides = [1, 1]} : vector<8x128xf32> to vector<8x32xf32>
    %278 = math.tanh %277 : vector<8x32xf32>
    %279 = vector.extract_strided_slice %276 {offsets = [0, 32], sizes = [8, 32], strides = [1, 1]} : vector<8x96xf32> to vector<8x32xf32>
    %280 = arith.mulf %279, %208 : vector<8x32xf32>
    %281 = vector.extract_strided_slice %276 {offsets = [0, 0], sizes = [8, 32], strides = [1, 1]} : vector<8x96xf32> to vector<8x32xf32>
    %282 = arith.mulf %281, %278 : vector<8x32xf32>
    %283 = arith.addf %280, %282 : vector<8x32xf32>
    %284 = vector.extract_strided_slice %276 {offsets = [0, 64], sizes = [8, 32], strides = [1, 1]} : vector<8x96xf32> to vector<8x32xf32>
    %285 = math.tanh %283 : vector<8x32xf32>
    %286 = arith.mulf %284, %285 : vector<8x32xf32>
    %287 = vector.extract_strided_slice %7 {offsets = [32, 0], sizes = [8, 128], strides = [1, 1]} : vector<64x128xf32> to vector<8x128xf32>
    %c0_115 = arith.constant 0 : index
    %c0_116 = arith.constant 0 : index
    %c0_117 = arith.constant 0 : index
    %288 = vector.load %arg2[%c0_115, %c0_116, %c0_117] : memref<3x32x128xf32, #tpu.memory_space<vmem>>, vector<1x32x128xf32>
    %289 = vector.shape_cast %288 : vector<1x32x128xf32> to vector<32x128xf32>
    %cst_118 = arith.constant dense<0.000000e+00> : vector<8x128xf32>
    %290 = tpu.matmul %232, %289, %cst_118 {dimension_numbers = #tpu.dot_dimension_numbers<[1], [0], [0], [1], [0, 0, 1, 1], [], []>} : vector<8x32xf32>, vector<32x128xf32>, vector<8x128xf32> -> vector<8x128xf32>
    %291 = arith.addf %290, %287 : vector<8x128xf32>
    %292 = vector.extract_strided_slice %291 {offsets = [0, 0], sizes = [8, 96], strides = [1, 1]} : vector<8x128xf32> to vector<8x96xf32>
    %293 = arith.negf %292 : vector<8x96xf32>
    %294 = math.exp %293 : vector<8x96xf32>
    %cst_119 = arith.constant 1.000000e+00 : f32
    %295 = vector.broadcast %cst_119 : f32 to vector<8x96xf32>
    %296 = arith.addf %295, %294 : vector<8x96xf32>
    %297 = arith.divf %295, %296 : vector<8x96xf32>
    %298 = vector.extract_strided_slice %291 {offsets = [0, 96], sizes = [8, 32], strides = [1, 1]} : vector<8x128xf32> to vector<8x32xf32>
    %299 = math.tanh %298 : vector<8x32xf32>
    %300 = vector.extract_strided_slice %297 {offsets = [0, 32], sizes = [8, 32], strides = [1, 1]} : vector<8x96xf32> to vector<8x32xf32>
    %301 = arith.mulf %300, %229 : vector<8x32xf32>
    %302 = vector.extract_strided_slice %297 {offsets = [0, 0], sizes = [8, 32], strides = [1, 1]} : vector<8x96xf32> to vector<8x32xf32>
    %303 = arith.mulf %302, %299 : vector<8x32xf32>
    %304 = arith.addf %301, %303 : vector<8x32xf32>
    %305 = vector.extract_strided_slice %297 {offsets = [0, 64], sizes = [8, 32], strides = [1, 1]} : vector<8x96xf32> to vector<8x32xf32>
    %306 = math.tanh %304 : vector<8x32xf32>
    %307 = arith.mulf %305, %306 : vector<8x32xf32>
    %c2_120 = arith.constant 2 : index
    %c0_121 = arith.constant 0 : index
    %c0_122 = arith.constant 0 : index
    %308 = vector.load %arg1[%c2_120, %c0_121, %c0_122] : memref<3x32x128xf32, #tpu.memory_space<vmem>>, vector<1x32x128xf32>
    %309 = vector.shape_cast %308 : vector<1x32x128xf32> to vector<32x128xf32>
    %cst_123 = arith.constant dense<0.000000e+00> : vector<8x128xf32>
    %310 = tpu.matmul %286, %309, %cst_123 {dimension_numbers = #tpu.dot_dimension_numbers<[1], [0], [0], [1], [0, 0, 1, 1], [], []>} : vector<8x32xf32>, vector<32x128xf32>, vector<8x128xf32> -> vector<8x128xf32>
    %c2_124 = arith.constant 2 : index
    %c0_125 = arith.constant 0 : index
    %c0_126 = arith.constant 0 : index
    %311 = vector.load %arg3[%c2_124, %c0_125, %c0_126] : memref<3x1x128xf32, #tpu.memory_space<vmem>>, vector<1x1x128xf32>
    %312 = vector.shape_cast %311 : vector<1x1x128xf32> to vector<1x128xf32>
    %313 = vector.broadcast %312 : vector<1x128xf32> to vector<8x128xf32>
    %314 = arith.addf %310, %313 : vector<8x128xf32>
    %c2_127 = arith.constant 2 : index
    %c0_128 = arith.constant 0 : index
    %c0_129 = arith.constant 0 : index
    %315 = vector.load %arg2[%c2_127, %c0_128, %c0_129] : memref<3x32x128xf32, #tpu.memory_space<vmem>>, vector<1x32x128xf32>
    %316 = vector.shape_cast %315 : vector<1x32x128xf32> to vector<32x128xf32>
    %cst_130 = arith.constant dense<0.000000e+00> : vector<8x128xf32>
    %317 = tpu.matmul %259, %316, %cst_130 {dimension_numbers = #tpu.dot_dimension_numbers<[1], [0], [0], [1], [0, 0, 1, 1], [], []>} : vector<8x32xf32>, vector<32x128xf32>, vector<8x128xf32> -> vector<8x128xf32>
    %318 = arith.addf %317, %314 : vector<8x128xf32>
    %319 = vector.extract_strided_slice %318 {offsets = [0, 0], sizes = [8, 96], strides = [1, 1]} : vector<8x128xf32> to vector<8x96xf32>
    %320 = arith.negf %319 : vector<8x96xf32>
    %321 = math.exp %320 : vector<8x96xf32>
    %cst_131 = arith.constant 1.000000e+00 : f32
    %322 = vector.broadcast %cst_131 : f32 to vector<8x96xf32>
    %323 = arith.addf %322, %321 : vector<8x96xf32>
    %324 = arith.divf %322, %323 : vector<8x96xf32>
    %325 = vector.extract_strided_slice %318 {offsets = [0, 96], sizes = [8, 32], strides = [1, 1]} : vector<8x128xf32> to vector<8x32xf32>
    %326 = math.tanh %325 : vector<8x32xf32>
    %327 = vector.extract_strided_slice %324 {offsets = [0, 32], sizes = [8, 32], strides = [1, 1]} : vector<8x96xf32> to vector<8x32xf32>
    %328 = arith.mulf %327, %256 : vector<8x32xf32>
    %329 = vector.extract_strided_slice %324 {offsets = [0, 0], sizes = [8, 32], strides = [1, 1]} : vector<8x96xf32> to vector<8x32xf32>
    %330 = arith.mulf %329, %326 : vector<8x32xf32>
    %331 = arith.addf %328, %330 : vector<8x32xf32>
    %332 = vector.extract_strided_slice %324 {offsets = [0, 64], sizes = [8, 32], strides = [1, 1]} : vector<8x96xf32> to vector<8x32xf32>
    %333 = math.tanh %331 : vector<8x32xf32>
    %334 = arith.mulf %332, %333 : vector<8x32xf32>
    %c1_132 = arith.constant 1 : index
    %c0_133 = arith.constant 0 : index
    %c0_134 = arith.constant 0 : index
    %335 = vector.load %arg1[%c1_132, %c0_133, %c0_134] : memref<3x32x128xf32, #tpu.memory_space<vmem>>, vector<1x32x128xf32>
    %336 = vector.shape_cast %335 : vector<1x32x128xf32> to vector<32x128xf32>
    %cst_135 = arith.constant dense<0.000000e+00> : vector<8x128xf32>
    %337 = tpu.matmul %307, %336, %cst_135 {dimension_numbers = #tpu.dot_dimension_numbers<[1], [0], [0], [1], [0, 0, 1, 1], [], []>} : vector<8x32xf32>, vector<32x128xf32>, vector<8x128xf32> -> vector<8x128xf32>
    %c1_136 = arith.constant 1 : index
    %c0_137 = arith.constant 0 : index
    %c0_138 = arith.constant 0 : index
    %338 = vector.load %arg3[%c1_136, %c0_137, %c0_138] : memref<3x1x128xf32, #tpu.memory_space<vmem>>, vector<1x1x128xf32>
    %339 = vector.shape_cast %338 : vector<1x1x128xf32> to vector<1x128xf32>
    %340 = vector.broadcast %339 : vector<1x128xf32> to vector<8x128xf32>
    %341 = arith.addf %337, %340 : vector<8x128xf32>
    %c1_139 = arith.constant 1 : index
    %c0_140 = arith.constant 0 : index
    %c0_141 = arith.constant 0 : index
    %342 = vector.load %arg2[%c1_139, %c0_140, %c0_141] : memref<3x32x128xf32, #tpu.memory_space<vmem>>, vector<1x32x128xf32>
    %343 = vector.shape_cast %342 : vector<1x32x128xf32> to vector<32x128xf32>
    %cst_142 = arith.constant dense<0.000000e+00> : vector<8x128xf32>
    %344 = tpu.matmul %286, %343, %cst_142 {dimension_numbers = #tpu.dot_dimension_numbers<[1], [0], [0], [1], [0, 0, 1, 1], [], []>} : vector<8x32xf32>, vector<32x128xf32>, vector<8x128xf32> -> vector<8x128xf32>
    %345 = arith.addf %344, %341 : vector<8x128xf32>
    %346 = vector.extract_strided_slice %345 {offsets = [0, 0], sizes = [8, 96], strides = [1, 1]} : vector<8x128xf32> to vector<8x96xf32>
    %347 = arith.negf %346 : vector<8x96xf32>
    %348 = math.exp %347 : vector<8x96xf32>
    %cst_143 = arith.constant 1.000000e+00 : f32
    %349 = vector.broadcast %cst_143 : f32 to vector<8x96xf32>
    %350 = arith.addf %349, %348 : vector<8x96xf32>
    %351 = arith.divf %349, %350 : vector<8x96xf32>
    %352 = vector.extract_strided_slice %345 {offsets = [0, 96], sizes = [8, 32], strides = [1, 1]} : vector<8x128xf32> to vector<8x32xf32>
    %353 = math.tanh %352 : vector<8x32xf32>
    %354 = vector.extract_strided_slice %351 {offsets = [0, 32], sizes = [8, 32], strides = [1, 1]} : vector<8x96xf32> to vector<8x32xf32>
    %355 = arith.mulf %354, %283 : vector<8x32xf32>
    %356 = vector.extract_strided_slice %351 {offsets = [0, 0], sizes = [8, 32], strides = [1, 1]} : vector<8x96xf32> to vector<8x32xf32>
    %357 = arith.mulf %356, %353 : vector<8x32xf32>
    %358 = arith.addf %355, %357 : vector<8x32xf32>
    %359 = vector.extract_strided_slice %351 {offsets = [0, 64], sizes = [8, 32], strides = [1, 1]} : vector<8x96xf32> to vector<8x32xf32>
    %360 = math.tanh %358 : vector<8x32xf32>
    %361 = arith.mulf %359, %360 : vector<8x32xf32>
    %362 = vector.extract_strided_slice %7 {offsets = [40, 0], sizes = [8, 128], strides = [1, 1]} : vector<64x128xf32> to vector<8x128xf32>
    %c0_144 = arith.constant 0 : index
    %c0_145 = arith.constant 0 : index
    %c0_146 = arith.constant 0 : index
    %363 = vector.load %arg2[%c0_144, %c0_145, %c0_146] : memref<3x32x128xf32, #tpu.memory_space<vmem>>, vector<1x32x128xf32>
    %364 = vector.shape_cast %363 : vector<1x32x128xf32> to vector<32x128xf32>
    %cst_147 = arith.constant dense<0.000000e+00> : vector<8x128xf32>
    %365 = tpu.matmul %307, %364, %cst_147 {dimension_numbers = #tpu.dot_dimension_numbers<[1], [0], [0], [1], [0, 0, 1, 1], [], []>} : vector<8x32xf32>, vector<32x128xf32>, vector<8x128xf32> -> vector<8x128xf32>
    %366 = arith.addf %365, %362 : vector<8x128xf32>
    %367 = vector.extract_strided_slice %366 {offsets = [0, 0], sizes = [8, 96], strides = [1, 1]} : vector<8x128xf32> to vector<8x96xf32>
    %368 = arith.negf %367 : vector<8x96xf32>
    %369 = math.exp %368 : vector<8x96xf32>
    %cst_148 = arith.constant 1.000000e+00 : f32
    %370 = vector.broadcast %cst_148 : f32 to vector<8x96xf32>
    %371 = arith.addf %370, %369 : vector<8x96xf32>
    %372 = arith.divf %370, %371 : vector<8x96xf32>
    %373 = vector.extract_strided_slice %366 {offsets = [0, 96], sizes = [8, 32], strides = [1, 1]} : vector<8x128xf32> to vector<8x32xf32>
    %374 = math.tanh %373 : vector<8x32xf32>
    %375 = vector.extract_strided_slice %372 {offsets = [0, 32], sizes = [8, 32], strides = [1, 1]} : vector<8x96xf32> to vector<8x32xf32>
    %376 = arith.mulf %375, %304 : vector<8x32xf32>
    %377 = vector.extract_strided_slice %372 {offsets = [0, 0], sizes = [8, 32], strides = [1, 1]} : vector<8x96xf32> to vector<8x32xf32>
    %378 = arith.mulf %377, %374 : vector<8x32xf32>
    %379 = arith.addf %376, %378 : vector<8x32xf32>
    %380 = vector.extract_strided_slice %372 {offsets = [0, 64], sizes = [8, 32], strides = [1, 1]} : vector<8x96xf32> to vector<8x32xf32>
    %381 = math.tanh %379 : vector<8x32xf32>
    %382 = arith.mulf %380, %381 : vector<8x32xf32>
    %c2_149 = arith.constant 2 : index
    %c0_150 = arith.constant 0 : index
    %c0_151 = arith.constant 0 : index
    %383 = vector.load %arg1[%c2_149, %c0_150, %c0_151] : memref<3x32x128xf32, #tpu.memory_space<vmem>>, vector<1x32x128xf32>
    %384 = vector.shape_cast %383 : vector<1x32x128xf32> to vector<32x128xf32>
    %cst_152 = arith.constant dense<0.000000e+00> : vector<8x128xf32>
    %385 = tpu.matmul %361, %384, %cst_152 {dimension_numbers = #tpu.dot_dimension_numbers<[1], [0], [0], [1], [0, 0, 1, 1], [], []>} : vector<8x32xf32>, vector<32x128xf32>, vector<8x128xf32> -> vector<8x128xf32>
    %c2_153 = arith.constant 2 : index
    %c0_154 = arith.constant 0 : index
    %c0_155 = arith.constant 0 : index
    %386 = vector.load %arg3[%c2_153, %c0_154, %c0_155] : memref<3x1x128xf32, #tpu.memory_space<vmem>>, vector<1x1x128xf32>
    %387 = vector.shape_cast %386 : vector<1x1x128xf32> to vector<1x128xf32>
    %388 = vector.broadcast %387 : vector<1x128xf32> to vector<8x128xf32>
    %389 = arith.addf %385, %388 : vector<8x128xf32>
    %c2_156 = arith.constant 2 : index
    %c0_157 = arith.constant 0 : index
    %c0_158 = arith.constant 0 : index
    %390 = vector.load %arg2[%c2_156, %c0_157, %c0_158] : memref<3x32x128xf32, #tpu.memory_space<vmem>>, vector<1x32x128xf32>
    %391 = vector.shape_cast %390 : vector<1x32x128xf32> to vector<32x128xf32>
    %cst_159 = arith.constant dense<0.000000e+00> : vector<8x128xf32>
    %392 = tpu.matmul %334, %391, %cst_159 {dimension_numbers = #tpu.dot_dimension_numbers<[1], [0], [0], [1], [0, 0, 1, 1], [], []>} : vector<8x32xf32>, vector<32x128xf32>, vector<8x128xf32> -> vector<8x128xf32>
    %393 = arith.addf %392, %389 : vector<8x128xf32>
    %394 = vector.extract_strided_slice %393 {offsets = [0, 0], sizes = [8, 96], strides = [1, 1]} : vector<8x128xf32> to vector<8x96xf32>
    %395 = arith.negf %394 : vector<8x96xf32>
    %396 = math.exp %395 : vector<8x96xf32>
    %cst_160 = arith.constant 1.000000e+00 : f32
    %397 = vector.broadcast %cst_160 : f32 to vector<8x96xf32>
    %398 = arith.addf %397, %396 : vector<8x96xf32>
    %399 = arith.divf %397, %398 : vector<8x96xf32>
    %400 = vector.extract_strided_slice %393 {offsets = [0, 96], sizes = [8, 32], strides = [1, 1]} : vector<8x128xf32> to vector<8x32xf32>
    %401 = math.tanh %400 : vector<8x32xf32>
    %402 = vector.extract_strided_slice %399 {offsets = [0, 32], sizes = [8, 32], strides = [1, 1]} : vector<8x96xf32> to vector<8x32xf32>
    %403 = arith.mulf %402, %331 : vector<8x32xf32>
    %404 = vector.extract_strided_slice %399 {offsets = [0, 0], sizes = [8, 32], strides = [1, 1]} : vector<8x96xf32> to vector<8x32xf32>
    %405 = arith.mulf %404, %401 : vector<8x32xf32>
    %406 = arith.addf %403, %405 : vector<8x32xf32>
    %407 = vector.extract_strided_slice %399 {offsets = [0, 64], sizes = [8, 32], strides = [1, 1]} : vector<8x96xf32> to vector<8x32xf32>
    %408 = math.tanh %406 : vector<8x32xf32>
    %409 = arith.mulf %407, %408 : vector<8x32xf32>
    %c1_161 = arith.constant 1 : index
    %c0_162 = arith.constant 0 : index
    %c0_163 = arith.constant 0 : index
    %410 = vector.load %arg1[%c1_161, %c0_162, %c0_163] : memref<3x32x128xf32, #tpu.memory_space<vmem>>, vector<1x32x128xf32>
    %411 = vector.shape_cast %410 : vector<1x32x128xf32> to vector<32x128xf32>
    %cst_164 = arith.constant dense<0.000000e+00> : vector<8x128xf32>
    %412 = tpu.matmul %382, %411, %cst_164 {dimension_numbers = #tpu.dot_dimension_numbers<[1], [0], [0], [1], [0, 0, 1, 1], [], []>} : vector<8x32xf32>, vector<32x128xf32>, vector<8x128xf32> -> vector<8x128xf32>
    %c1_165 = arith.constant 1 : index
    %c0_166 = arith.constant 0 : index
    %c0_167 = arith.constant 0 : index
    %413 = vector.load %arg3[%c1_165, %c0_166, %c0_167] : memref<3x1x128xf32, #tpu.memory_space<vmem>>, vector<1x1x128xf32>
    %414 = vector.shape_cast %413 : vector<1x1x128xf32> to vector<1x128xf32>
    %415 = vector.broadcast %414 : vector<1x128xf32> to vector<8x128xf32>
    %416 = arith.addf %412, %415 : vector<8x128xf32>
    %c1_168 = arith.constant 1 : index
    %c0_169 = arith.constant 0 : index
    %c0_170 = arith.constant 0 : index
    %417 = vector.load %arg2[%c1_168, %c0_169, %c0_170] : memref<3x32x128xf32, #tpu.memory_space<vmem>>, vector<1x32x128xf32>
    %418 = vector.shape_cast %417 : vector<1x32x128xf32> to vector<32x128xf32>
    %cst_171 = arith.constant dense<0.000000e+00> : vector<8x128xf32>
    %419 = tpu.matmul %361, %418, %cst_171 {dimension_numbers = #tpu.dot_dimension_numbers<[1], [0], [0], [1], [0, 0, 1, 1], [], []>} : vector<8x32xf32>, vector<32x128xf32>, vector<8x128xf32> -> vector<8x128xf32>
    %420 = arith.addf %419, %416 : vector<8x128xf32>
    %421 = vector.extract_strided_slice %420 {offsets = [0, 0], sizes = [8, 96], strides = [1, 1]} : vector<8x128xf32> to vector<8x96xf32>
    %422 = arith.negf %421 : vector<8x96xf32>
    %423 = math.exp %422 : vector<8x96xf32>
    %cst_172 = arith.constant 1.000000e+00 : f32
    %424 = vector.broadcast %cst_172 : f32 to vector<8x96xf32>
    %425 = arith.addf %424, %423 : vector<8x96xf32>
    %426 = arith.divf %424, %425 : vector<8x96xf32>
    %427 = vector.extract_strided_slice %420 {offsets = [0, 96], sizes = [8, 32], strides = [1, 1]} : vector<8x128xf32> to vector<8x32xf32>
    %428 = math.tanh %427 : vector<8x32xf32>
    %429 = vector.extract_strided_slice %426 {offsets = [0, 32], sizes = [8, 32], strides = [1, 1]} : vector<8x96xf32> to vector<8x32xf32>
    %430 = arith.mulf %429, %358 : vector<8x32xf32>
    %431 = vector.extract_strided_slice %426 {offsets = [0, 0], sizes = [8, 32], strides = [1, 1]} : vector<8x96xf32> to vector<8x32xf32>
    %432 = arith.mulf %431, %428 : vector<8x32xf32>
    %433 = arith.addf %430, %432 : vector<8x32xf32>
    %434 = vector.extract_strided_slice %426 {offsets = [0, 64], sizes = [8, 32], strides = [1, 1]} : vector<8x96xf32> to vector<8x32xf32>
    %435 = math.tanh %433 : vector<8x32xf32>
    %436 = arith.mulf %434, %435 : vector<8x32xf32>
    %437 = vector.extract_strided_slice %7 {offsets = [48, 0], sizes = [8, 128], strides = [1, 1]} : vector<64x128xf32> to vector<8x128xf32>
    %c0_173 = arith.constant 0 : index
    %c0_174 = arith.constant 0 : index
    %c0_175 = arith.constant 0 : index
    %438 = vector.load %arg2[%c0_173, %c0_174, %c0_175] : memref<3x32x128xf32, #tpu.memory_space<vmem>>, vector<1x32x128xf32>
    %439 = vector.shape_cast %438 : vector<1x32x128xf32> to vector<32x128xf32>
    %cst_176 = arith.constant dense<0.000000e+00> : vector<8x128xf32>
    %440 = tpu.matmul %382, %439, %cst_176 {dimension_numbers = #tpu.dot_dimension_numbers<[1], [0], [0], [1], [0, 0, 1, 1], [], []>} : vector<8x32xf32>, vector<32x128xf32>, vector<8x128xf32> -> vector<8x128xf32>
    %441 = arith.addf %440, %437 : vector<8x128xf32>
    %442 = vector.extract_strided_slice %441 {offsets = [0, 0], sizes = [8, 96], strides = [1, 1]} : vector<8x128xf32> to vector<8x96xf32>
    %443 = arith.negf %442 : vector<8x96xf32>
    %444 = math.exp %443 : vector<8x96xf32>
    %cst_177 = arith.constant 1.000000e+00 : f32
    %445 = vector.broadcast %cst_177 : f32 to vector<8x96xf32>
    %446 = arith.addf %445, %444 : vector<8x96xf32>
    %447 = arith.divf %445, %446 : vector<8x96xf32>
    %448 = vector.extract_strided_slice %441 {offsets = [0, 96], sizes = [8, 32], strides = [1, 1]} : vector<8x128xf32> to vector<8x32xf32>
    %449 = math.tanh %448 : vector<8x32xf32>
    %450 = vector.extract_strided_slice %447 {offsets = [0, 32], sizes = [8, 32], strides = [1, 1]} : vector<8x96xf32> to vector<8x32xf32>
    %451 = arith.mulf %450, %379 : vector<8x32xf32>
    %452 = vector.extract_strided_slice %447 {offsets = [0, 0], sizes = [8, 32], strides = [1, 1]} : vector<8x96xf32> to vector<8x32xf32>
    %453 = arith.mulf %452, %449 : vector<8x32xf32>
    %454 = arith.addf %451, %453 : vector<8x32xf32>
    %455 = vector.extract_strided_slice %447 {offsets = [0, 64], sizes = [8, 32], strides = [1, 1]} : vector<8x96xf32> to vector<8x32xf32>
    %456 = math.tanh %454 : vector<8x32xf32>
    %457 = arith.mulf %455, %456 : vector<8x32xf32>
    %c2_178 = arith.constant 2 : index
    %c0_179 = arith.constant 0 : index
    %c0_180 = arith.constant 0 : index
    %458 = vector.load %arg1[%c2_178, %c0_179, %c0_180] : memref<3x32x128xf32, #tpu.memory_space<vmem>>, vector<1x32x128xf32>
    %459 = vector.shape_cast %458 : vector<1x32x128xf32> to vector<32x128xf32>
    %cst_181 = arith.constant dense<0.000000e+00> : vector<8x128xf32>
    %460 = tpu.matmul %436, %459, %cst_181 {dimension_numbers = #tpu.dot_dimension_numbers<[1], [0], [0], [1], [0, 0, 1, 1], [], []>} : vector<8x32xf32>, vector<32x128xf32>, vector<8x128xf32> -> vector<8x128xf32>
    %c2_182 = arith.constant 2 : index
    %c0_183 = arith.constant 0 : index
    %c0_184 = arith.constant 0 : index
    %461 = vector.load %arg3[%c2_182, %c0_183, %c0_184] : memref<3x1x128xf32, #tpu.memory_space<vmem>>, vector<1x1x128xf32>
    %462 = vector.shape_cast %461 : vector<1x1x128xf32> to vector<1x128xf32>
    %463 = vector.broadcast %462 : vector<1x128xf32> to vector<8x128xf32>
    %464 = arith.addf %460, %463 : vector<8x128xf32>
    %c2_185 = arith.constant 2 : index
    %c0_186 = arith.constant 0 : index
    %c0_187 = arith.constant 0 : index
    %465 = vector.load %arg2[%c2_185, %c0_186, %c0_187] : memref<3x32x128xf32, #tpu.memory_space<vmem>>, vector<1x32x128xf32>
    %466 = vector.shape_cast %465 : vector<1x32x128xf32> to vector<32x128xf32>
    %cst_188 = arith.constant dense<0.000000e+00> : vector<8x128xf32>
    %467 = tpu.matmul %409, %466, %cst_188 {dimension_numbers = #tpu.dot_dimension_numbers<[1], [0], [0], [1], [0, 0, 1, 1], [], []>} : vector<8x32xf32>, vector<32x128xf32>, vector<8x128xf32> -> vector<8x128xf32>
    %468 = arith.addf %467, %464 : vector<8x128xf32>
    %469 = vector.extract_strided_slice %468 {offsets = [0, 0], sizes = [8, 96], strides = [1, 1]} : vector<8x128xf32> to vector<8x96xf32>
    %470 = arith.negf %469 : vector<8x96xf32>
    %471 = math.exp %470 : vector<8x96xf32>
    %cst_189 = arith.constant 1.000000e+00 : f32
    %472 = vector.broadcast %cst_189 : f32 to vector<8x96xf32>
    %473 = arith.addf %472, %471 : vector<8x96xf32>
    %474 = arith.divf %472, %473 : vector<8x96xf32>
    %475 = vector.extract_strided_slice %468 {offsets = [0, 96], sizes = [8, 32], strides = [1, 1]} : vector<8x128xf32> to vector<8x32xf32>
    %476 = math.tanh %475 : vector<8x32xf32>
    %477 = vector.extract_strided_slice %474 {offsets = [0, 32], sizes = [8, 32], strides = [1, 1]} : vector<8x96xf32> to vector<8x32xf32>
    %478 = arith.mulf %477, %406 : vector<8x32xf32>
    %479 = vector.extract_strided_slice %474 {offsets = [0, 0], sizes = [8, 32], strides = [1, 1]} : vector<8x96xf32> to vector<8x32xf32>
    %480 = arith.mulf %479, %476 : vector<8x32xf32>
    %481 = arith.addf %478, %480 : vector<8x32xf32>
    %482 = vector.extract_strided_slice %474 {offsets = [0, 64], sizes = [8, 32], strides = [1, 1]} : vector<8x96xf32> to vector<8x32xf32>
    %483 = math.tanh %481 : vector<8x32xf32>
    %484 = arith.mulf %482, %483 : vector<8x32xf32>
    %c1_190 = arith.constant 1 : index
    %c0_191 = arith.constant 0 : index
    %c0_192 = arith.constant 0 : index
    %485 = vector.load %arg1[%c1_190, %c0_191, %c0_192] : memref<3x32x128xf32, #tpu.memory_space<vmem>>, vector<1x32x128xf32>
    %486 = vector.shape_cast %485 : vector<1x32x128xf32> to vector<32x128xf32>
    %cst_193 = arith.constant dense<0.000000e+00> : vector<8x128xf32>
    %487 = tpu.matmul %457, %486, %cst_193 {dimension_numbers = #tpu.dot_dimension_numbers<[1], [0], [0], [1], [0, 0, 1, 1], [], []>} : vector<8x32xf32>, vector<32x128xf32>, vector<8x128xf32> -> vector<8x128xf32>
    %c1_194 = arith.constant 1 : index
    %c0_195 = arith.constant 0 : index
    %c0_196 = arith.constant 0 : index
    %488 = vector.load %arg3[%c1_194, %c0_195, %c0_196] : memref<3x1x128xf32, #tpu.memory_space<vmem>>, vector<1x1x128xf32>
    %489 = vector.shape_cast %488 : vector<1x1x128xf32> to vector<1x128xf32>
    %490 = vector.broadcast %489 : vector<1x128xf32> to vector<8x128xf32>
    %491 = arith.addf %487, %490 : vector<8x128xf32>
    %c1_197 = arith.constant 1 : index
    %c0_198 = arith.constant 0 : index
    %c0_199 = arith.constant 0 : index
    %492 = vector.load %arg2[%c1_197, %c0_198, %c0_199] : memref<3x32x128xf32, #tpu.memory_space<vmem>>, vector<1x32x128xf32>
    %493 = vector.shape_cast %492 : vector<1x32x128xf32> to vector<32x128xf32>
    %cst_200 = arith.constant dense<0.000000e+00> : vector<8x128xf32>
    %494 = tpu.matmul %436, %493, %cst_200 {dimension_numbers = #tpu.dot_dimension_numbers<[1], [0], [0], [1], [0, 0, 1, 1], [], []>} : vector<8x32xf32>, vector<32x128xf32>, vector<8x128xf32> -> vector<8x128xf32>
    %495 = arith.addf %494, %491 : vector<8x128xf32>
    %496 = vector.extract_strided_slice %495 {offsets = [0, 0], sizes = [8, 96], strides = [1, 1]} : vector<8x128xf32> to vector<8x96xf32>
    %497 = arith.negf %496 : vector<8x96xf32>
    %498 = math.exp %497 : vector<8x96xf32>
    %cst_201 = arith.constant 1.000000e+00 : f32
    %499 = vector.broadcast %cst_201 : f32 to vector<8x96xf32>
    %500 = arith.addf %499, %498 : vector<8x96xf32>
    %501 = arith.divf %499, %500 : vector<8x96xf32>
    %502 = vector.extract_strided_slice %495 {offsets = [0, 96], sizes = [8, 32], strides = [1, 1]} : vector<8x128xf32> to vector<8x32xf32>
    %503 = math.tanh %502 : vector<8x32xf32>
    %504 = vector.extract_strided_slice %501 {offsets = [0, 32], sizes = [8, 32], strides = [1, 1]} : vector<8x96xf32> to vector<8x32xf32>
    %505 = arith.mulf %504, %433 : vector<8x32xf32>
    %506 = vector.extract_strided_slice %501 {offsets = [0, 0], sizes = [8, 32], strides = [1, 1]} : vector<8x96xf32> to vector<8x32xf32>
    %507 = arith.mulf %506, %503 : vector<8x32xf32>
    %508 = arith.addf %505, %507 : vector<8x32xf32>
    %509 = vector.extract_strided_slice %501 {offsets = [0, 64], sizes = [8, 32], strides = [1, 1]} : vector<8x96xf32> to vector<8x32xf32>
    %510 = math.tanh %508 : vector<8x32xf32>
    %511 = arith.mulf %509, %510 : vector<8x32xf32>
    %512 = vector.extract_strided_slice %7 {offsets = [56, 0], sizes = [8, 128], strides = [1, 1]} : vector<64x128xf32> to vector<8x128xf32>
    %c0_202 = arith.constant 0 : index
    %c0_203 = arith.constant 0 : index
    %c0_204 = arith.constant 0 : index
    %513 = vector.load %arg2[%c0_202, %c0_203, %c0_204] : memref<3x32x128xf32, #tpu.memory_space<vmem>>, vector<1x32x128xf32>
    %514 = vector.shape_cast %513 : vector<1x32x128xf32> to vector<32x128xf32>
    %cst_205 = arith.constant dense<0.000000e+00> : vector<8x128xf32>
    %515 = tpu.matmul %457, %514, %cst_205 {dimension_numbers = #tpu.dot_dimension_numbers<[1], [0], [0], [1], [0, 0, 1, 1], [], []>} : vector<8x32xf32>, vector<32x128xf32>, vector<8x128xf32> -> vector<8x128xf32>
    %516 = arith.addf %515, %512 : vector<8x128xf32>
    %517 = vector.extract_strided_slice %516 {offsets = [0, 0], sizes = [8, 96], strides = [1, 1]} : vector<8x128xf32> to vector<8x96xf32>
    %518 = arith.negf %517 : vector<8x96xf32>
    %519 = math.exp %518 : vector<8x96xf32>
    %cst_206 = arith.constant 1.000000e+00 : f32
    %520 = vector.broadcast %cst_206 : f32 to vector<8x96xf32>
    %521 = arith.addf %520, %519 : vector<8x96xf32>
    %522 = arith.divf %520, %521 : vector<8x96xf32>
    %523 = vector.extract_strided_slice %516 {offsets = [0, 96], sizes = [8, 32], strides = [1, 1]} : vector<8x128xf32> to vector<8x32xf32>
    %524 = math.tanh %523 : vector<8x32xf32>
    %525 = vector.extract_strided_slice %522 {offsets = [0, 32], sizes = [8, 32], strides = [1, 1]} : vector<8x96xf32> to vector<8x32xf32>
    %526 = arith.mulf %525, %454 : vector<8x32xf32>
    %527 = vector.extract_strided_slice %522 {offsets = [0, 0], sizes = [8, 32], strides = [1, 1]} : vector<8x96xf32> to vector<8x32xf32>
    %528 = arith.mulf %527, %524 : vector<8x32xf32>
    %529 = arith.addf %526, %528 : vector<8x32xf32>
    %530 = vector.extract_strided_slice %522 {offsets = [0, 64], sizes = [8, 32], strides = [1, 1]} : vector<8x96xf32> to vector<8x32xf32>
    %531 = math.tanh %529 : vector<8x32xf32>
    %532 = arith.mulf %530, %531 : vector<8x32xf32>
    %c2_207 = arith.constant 2 : index
    %c0_208 = arith.constant 0 : index
    %c0_209 = arith.constant 0 : index
    %533 = vector.load %arg1[%c2_207, %c0_208, %c0_209] : memref<3x32x128xf32, #tpu.memory_space<vmem>>, vector<1x32x128xf32>
    %534 = vector.shape_cast %533 : vector<1x32x128xf32> to vector<32x128xf32>
    %cst_210 = arith.constant dense<0.000000e+00> : vector<8x128xf32>
    %535 = tpu.matmul %511, %534, %cst_210 {dimension_numbers = #tpu.dot_dimension_numbers<[1], [0], [0], [1], [0, 0, 1, 1], [], []>} : vector<8x32xf32>, vector<32x128xf32>, vector<8x128xf32> -> vector<8x128xf32>
    %c2_211 = arith.constant 2 : index
    %c0_212 = arith.constant 0 : index
    %c0_213 = arith.constant 0 : index
    %536 = vector.load %arg3[%c2_211, %c0_212, %c0_213] : memref<3x1x128xf32, #tpu.memory_space<vmem>>, vector<1x1x128xf32>
    %537 = vector.shape_cast %536 : vector<1x1x128xf32> to vector<1x128xf32>
    %538 = vector.broadcast %537 : vector<1x128xf32> to vector<8x128xf32>
    %539 = arith.addf %535, %538 : vector<8x128xf32>
    %c2_214 = arith.constant 2 : index
    %c0_215 = arith.constant 0 : index
    %c0_216 = arith.constant 0 : index
    %540 = vector.load %arg2[%c2_214, %c0_215, %c0_216] : memref<3x32x128xf32, #tpu.memory_space<vmem>>, vector<1x32x128xf32>
    %541 = vector.shape_cast %540 : vector<1x32x128xf32> to vector<32x128xf32>
    %cst_217 = arith.constant dense<0.000000e+00> : vector<8x128xf32>
    %542 = tpu.matmul %484, %541, %cst_217 {dimension_numbers = #tpu.dot_dimension_numbers<[1], [0], [0], [1], [0, 0, 1, 1], [], []>} : vector<8x32xf32>, vector<32x128xf32>, vector<8x128xf32> -> vector<8x128xf32>
    %543 = arith.addf %542, %539 : vector<8x128xf32>
    %544 = vector.extract_strided_slice %543 {offsets = [0, 0], sizes = [8, 96], strides = [1, 1]} : vector<8x128xf32> to vector<8x96xf32>
    %545 = arith.negf %544 : vector<8x96xf32>
    %546 = math.exp %545 : vector<8x96xf32>
    %cst_218 = arith.constant 1.000000e+00 : f32
    %547 = vector.broadcast %cst_218 : f32 to vector<8x96xf32>
    %548 = arith.addf %547, %546 : vector<8x96xf32>
    %549 = arith.divf %547, %548 : vector<8x96xf32>
    %550 = vector.extract_strided_slice %543 {offsets = [0, 96], sizes = [8, 32], strides = [1, 1]} : vector<8x128xf32> to vector<8x32xf32>
    %551 = math.tanh %550 : vector<8x32xf32>
    %552 = vector.extract_strided_slice %549 {offsets = [0, 32], sizes = [8, 32], strides = [1, 1]} : vector<8x96xf32> to vector<8x32xf32>
    %553 = arith.mulf %552, %481 : vector<8x32xf32>
    %554 = vector.extract_strided_slice %549 {offsets = [0, 0], sizes = [8, 32], strides = [1, 1]} : vector<8x96xf32> to vector<8x32xf32>
    %555 = arith.mulf %554, %551 : vector<8x32xf32>
    %556 = arith.addf %553, %555 : vector<8x32xf32>
    %557 = vector.extract_strided_slice %549 {offsets = [0, 64], sizes = [8, 32], strides = [1, 1]} : vector<8x96xf32> to vector<8x32xf32>
    %558 = math.tanh %556 : vector<8x32xf32>
    %559 = arith.mulf %557, %558 : vector<8x32xf32>
    %c1_219 = arith.constant 1 : index
    %c0_220 = arith.constant 0 : index
    %c0_221 = arith.constant 0 : index
    %560 = vector.load %arg1[%c1_219, %c0_220, %c0_221] : memref<3x32x128xf32, #tpu.memory_space<vmem>>, vector<1x32x128xf32>
    %561 = vector.shape_cast %560 : vector<1x32x128xf32> to vector<32x128xf32>
    %cst_222 = arith.constant dense<0.000000e+00> : vector<8x128xf32>
    %562 = tpu.matmul %532, %561, %cst_222 {dimension_numbers = #tpu.dot_dimension_numbers<[1], [0], [0], [1], [0, 0, 1, 1], [], []>} : vector<8x32xf32>, vector<32x128xf32>, vector<8x128xf32> -> vector<8x128xf32>
    %c1_223 = arith.constant 1 : index
    %c0_224 = arith.constant 0 : index
    %c0_225 = arith.constant 0 : index
    %563 = vector.load %arg3[%c1_223, %c0_224, %c0_225] : memref<3x1x128xf32, #tpu.memory_space<vmem>>, vector<1x1x128xf32>
    %564 = vector.shape_cast %563 : vector<1x1x128xf32> to vector<1x128xf32>
    %565 = vector.broadcast %564 : vector<1x128xf32> to vector<8x128xf32>
    %566 = arith.addf %562, %565 : vector<8x128xf32>
    %c1_226 = arith.constant 1 : index
    %c0_227 = arith.constant 0 : index
    %c0_228 = arith.constant 0 : index
    %567 = vector.load %arg2[%c1_226, %c0_227, %c0_228] : memref<3x32x128xf32, #tpu.memory_space<vmem>>, vector<1x32x128xf32>
    %568 = vector.shape_cast %567 : vector<1x32x128xf32> to vector<32x128xf32>
    %cst_229 = arith.constant dense<0.000000e+00> : vector<8x128xf32>
    %569 = tpu.matmul %511, %568, %cst_229 {dimension_numbers = #tpu.dot_dimension_numbers<[1], [0], [0], [1], [0, 0, 1, 1], [], []>} : vector<8x32xf32>, vector<32x128xf32>, vector<8x128xf32> -> vector<8x128xf32>
    %570 = arith.addf %569, %566 : vector<8x128xf32>
    %571 = vector.extract_strided_slice %570 {offsets = [0, 0], sizes = [8, 96], strides = [1, 1]} : vector<8x128xf32> to vector<8x96xf32>
    %572 = arith.negf %571 : vector<8x96xf32>
    %573 = math.exp %572 : vector<8x96xf32>
    %cst_230 = arith.constant 1.000000e+00 : f32
    %574 = vector.broadcast %cst_230 : f32 to vector<8x96xf32>
    %575 = arith.addf %574, %573 : vector<8x96xf32>
    %576 = arith.divf %574, %575 : vector<8x96xf32>
    %577 = vector.extract_strided_slice %570 {offsets = [0, 96], sizes = [8, 32], strides = [1, 1]} : vector<8x128xf32> to vector<8x32xf32>
    %578 = math.tanh %577 : vector<8x32xf32>
    %579 = vector.extract_strided_slice %576 {offsets = [0, 32], sizes = [8, 32], strides = [1, 1]} : vector<8x96xf32> to vector<8x32xf32>
    %580 = arith.mulf %579, %508 : vector<8x32xf32>
    %581 = vector.extract_strided_slice %576 {offsets = [0, 0], sizes = [8, 32], strides = [1, 1]} : vector<8x96xf32> to vector<8x32xf32>
    %582 = arith.mulf %581, %578 : vector<8x32xf32>
    %583 = arith.addf %580, %582 : vector<8x32xf32>
    %584 = vector.extract_strided_slice %576 {offsets = [0, 64], sizes = [8, 32], strides = [1, 1]} : vector<8x96xf32> to vector<8x32xf32>
    %585 = math.tanh %583 : vector<8x32xf32>
    %586 = arith.mulf %584, %585 : vector<8x32xf32>
    %c2_231 = arith.constant 2 : index
    %c0_232 = arith.constant 0 : index
    %c0_233 = arith.constant 0 : index
    %587 = vector.load %arg1[%c2_231, %c0_232, %c0_233] : memref<3x32x128xf32, #tpu.memory_space<vmem>>, vector<1x32x128xf32>
    %588 = vector.shape_cast %587 : vector<1x32x128xf32> to vector<32x128xf32>
    %cst_234 = arith.constant dense<0.000000e+00> : vector<8x128xf32>
    %589 = tpu.matmul %586, %588, %cst_234 {dimension_numbers = #tpu.dot_dimension_numbers<[1], [0], [0], [1], [0, 0, 1, 1], [], []>} : vector<8x32xf32>, vector<32x128xf32>, vector<8x128xf32> -> vector<8x128xf32>
    %c2_235 = arith.constant 2 : index
    %c0_236 = arith.constant 0 : index
    %c0_237 = arith.constant 0 : index
    %590 = vector.load %arg3[%c2_235, %c0_236, %c0_237] : memref<3x1x128xf32, #tpu.memory_space<vmem>>, vector<1x1x128xf32>
    %591 = vector.shape_cast %590 : vector<1x1x128xf32> to vector<1x128xf32>
    %592 = vector.broadcast %591 : vector<1x128xf32> to vector<8x128xf32>
    %593 = arith.addf %589, %592 : vector<8x128xf32>
    %c2_238 = arith.constant 2 : index
    %c0_239 = arith.constant 0 : index
    %c0_240 = arith.constant 0 : index
    %594 = vector.load %arg2[%c2_238, %c0_239, %c0_240] : memref<3x32x128xf32, #tpu.memory_space<vmem>>, vector<1x32x128xf32>
    %595 = vector.shape_cast %594 : vector<1x32x128xf32> to vector<32x128xf32>
    %cst_241 = arith.constant dense<0.000000e+00> : vector<8x128xf32>
    %596 = tpu.matmul %559, %595, %cst_241 {dimension_numbers = #tpu.dot_dimension_numbers<[1], [0], [0], [1], [0, 0, 1, 1], [], []>} : vector<8x32xf32>, vector<32x128xf32>, vector<8x128xf32> -> vector<8x128xf32>
    %597 = arith.addf %596, %593 : vector<8x128xf32>
    %598 = vector.extract_strided_slice %597 {offsets = [0, 0], sizes = [8, 96], strides = [1, 1]} : vector<8x128xf32> to vector<8x96xf32>
    %599 = arith.negf %598 : vector<8x96xf32>
    %600 = math.exp %599 : vector<8x96xf32>
    %cst_242 = arith.constant 1.000000e+00 : f32
    %601 = vector.broadcast %cst_242 : f32 to vector<8x96xf32>
    %602 = arith.addf %601, %600 : vector<8x96xf32>
    %603 = arith.divf %601, %602 : vector<8x96xf32>
    %604 = vector.extract_strided_slice %597 {offsets = [0, 96], sizes = [8, 32], strides = [1, 1]} : vector<8x128xf32> to vector<8x32xf32>
    %605 = math.tanh %604 : vector<8x32xf32>
    %606 = vector.extract_strided_slice %603 {offsets = [0, 32], sizes = [8, 32], strides = [1, 1]} : vector<8x96xf32> to vector<8x32xf32>
    %607 = arith.mulf %606, %556 : vector<8x32xf32>
    %608 = vector.extract_strided_slice %603 {offsets = [0, 0], sizes = [8, 32], strides = [1, 1]} : vector<8x96xf32> to vector<8x32xf32>
    %609 = arith.mulf %608, %605 : vector<8x32xf32>
    %610 = arith.addf %607, %609 : vector<8x32xf32>
    %611 = vector.extract_strided_slice %603 {offsets = [0, 64], sizes = [8, 32], strides = [1, 1]} : vector<8x96xf32> to vector<8x32xf32>
    %612 = math.tanh %610 : vector<8x32xf32>
    %613 = arith.mulf %611, %612 : vector<8x32xf32>
    %c0_243 = arith.constant 0 : index
    %c0_244 = arith.constant 0 : index
    %614 = vector.load %arg4[%c0_243, %c0_244] : memref<32x3xf32, #tpu.memory_space<vmem>>, vector<32x3xf32>
    %cst_245 = arith.constant dense<0.000000e+00> : vector<8x3xf32>
    %615 = tpu.matmul %613, %614, %cst_245 {dimension_numbers = #tpu.dot_dimension_numbers<[1], [0], [0], [1], [0, 0, 1, 1], [], []>} : vector<8x32xf32>, vector<32x3xf32>, vector<8x3xf32> -> vector<8x3xf32>
    %c0_246 = arith.constant 0 : index
    %c0_247 = arith.constant 0 : index
    %616 = vector.load %arg5[%c0_246, %c0_247] : memref<1x3xf32, #tpu.memory_space<vmem>>, vector<1x3xf32>
    %617 = vector.broadcast %616 : vector<1x3xf32> to vector<8x3xf32>
    %618 = arith.addf %615, %617 : vector<8x3xf32>
    %cst_248 = arith.constant dense<0xFF800000> : vector<8xf32>
    %619 = vector.multi_reduction <maximumf>, %618, %cst_248 [1] : vector<8x3xf32> to vector<8xf32>
    %620 = vector.shape_cast %619 : vector<8xf32> to vector<8x1xf32>
    %621 = vector.broadcast %620 : vector<8x1xf32> to vector<8x3xf32>
    %622 = arith.subf %618, %621 : vector<8x3xf32>
    %623 = math.exp %622 : vector<8x3xf32>
    %cst_249 = arith.constant dense<0.000000e+00> : vector<8xf32>
    %624 = vector.multi_reduction <add>, %623, %cst_249 [1] : vector<8x3xf32> to vector<8xf32>
    %625 = vector.shape_cast %624 : vector<8xf32> to vector<8x1xf32>
    %626 = math.log %625 : vector<8x1xf32>
    %627 = vector.broadcast %626 : vector<8x1xf32> to vector<8x3xf32>
    %628 = arith.subf %622, %627 : vector<8x3xf32>
    %c0_250 = arith.constant 0 : index
    %c0_251 = arith.constant 0 : index
    %629 = vector.load %arg6[%c0_250, %c0_251] : memref<8x3xf32, #tpu.memory_space<vmem>>, vector<8x3xf32>
    tpu.vector_store %arg6[%c0_250, %c0_251], %628 {strides = array<i32>} : memref<8x3xf32, #tpu.memory_space<vmem>>, vector<8x3xf32>,
    return
  }
}

</mosaic_0001>

<llo_original>
// kernel: tpu_custom_call.1
$region0: #{tpu_custom_call.1}
  #allocation0 [shape = 'u32[]', space=smem, size = 0x4, offset = 0x4, fixed_abs, tag = 'smem constant byte address 0x4 - core index']
  #allocation1 [shape = 'u32[144,128]{1,0:T(1,128)}', space=vmem, size = 0x12000, scoped, tag = 'internal scratch']
  %s0 = inlined_call_operand.vmem [shape: f32[64,32], index: 0, kind: input, shape index: {}]
  %s1 = inlined_call_operand.vmem [shape: f32[3,32,128], index: 1, kind: input, shape index: {}]
  %s2 = inlined_call_operand.hbm [shape: f32[3,32,128], index: 2, kind: input, shape index: {}]
  %s3 = inlined_call_operand.vmem [shape: f32[3,1,128], index: 3, kind: input, shape index: {}]
  %s4 = inlined_call_operand.vmem [shape: f32[32,3], index: 4, kind: input, shape index: {}]
  %s5 = inlined_call_operand.vmem [shape: f32[1,3], index: 5, kind: input, shape index: {}]
  %s6 = inlined_call_operand.vmem [shape: f32[8,3], index: 6, kind: output, shape index: {}]
  %s7 = sld [smem:[#allocation0]]
  $region38: #{tpu_custom_call.1} parent=0
    _
  %s9 = ssub.s32 1, %s7
  %s10 = scalar_select 0, %s9, %s7
  $region1: #{tpu_custom_call.1} parent=0
    #allocation2 [shape = 'u8[49152]{0}', space=vmem, size = 0xc000, scoped, tag = 'input window, operand 2, single buffered']
    #allocation3 [shape = 's32[1]{0}', space=sflag, size = 0x4, scoped, tag = 'scoped memory for tpu_custom_call.1']
    %11 = vsyncpa [#allocation3], 0
    // Predicated region
    $region2: #{tpu_custom_call.1} parent=1 // pred_check
      _
    $region3: #{tpu_custom_call.1} parent=1 // pred_check_branch
      %13 = sbr.rel (0) target = $region5
    $region4: #{tpu_custom_call.1} parent=1 // pred_region
      _
    $region5: #{tpu_custom_call.1} parent=1 // pred_fallthru
      _
    // Predicated region
    $region6: #{tpu_custom_call.1} parent=1 // pred_check
      _
    $region7: #{tpu_custom_call.1} parent=1 // pred_check_branch
      %15 = sbr.rel (0) target = $region9
    $region8: #{tpu_custom_call.1} parent=1 // pred_region
      _
    $region9: #{tpu_custom_call.1} parent=1 // pred_fallthru
      _
    // Predicated region
    $region10: #{tpu_custom_call.1} parent=1 // pred_check
      _
    $region11: #{tpu_custom_call.1} parent=1 // pred_check_branch
      %17 = sbr.rel (0) target = $region13
    $region12: #{tpu_custom_call.1} parent=1 // pred_region
      %s19 = ssub.s32 1536, 1536
      %20 = vsyncadd [#allocation3], %s19
      %s21 = sshll.u32 [#allocation2], 4
      %s22 = int_to_ptr.vmem [resolvable:$true] %s21
      %27 = dma.hbm_to_vmem [thread:$0]  %s2, 1536, %s22, [#allocation3], 128, 128, 8
    $region13: #{tpu_custom_call.1} parent=1 // pred_fallthru
      _
    // Predicated region
    $region14: #{tpu_custom_call.1} parent=1 // pred_check
      _
    $region15: #{tpu_custom_call.1} parent=1 // pred_check_branch
      %29 = sbr.rel (0) target = $region17
    $region16: #{tpu_custom_call.1} parent=1 // pred_region
      _
    $region17: #{tpu_custom_call.1} parent=1 // pred_fallthru
      _
    // Predicated region
    $region18: #{tpu_custom_call.1} parent=1 // pred_check
      _
    $region19: #{tpu_custom_call.1} parent=1 // pred_check_branch
      %31 = sbr.rel (0) target = $region21
    $region20: #{tpu_custom_call.1} parent=1 // pred_region
      _
    $region21: #{tpu_custom_call.1} parent=1 // pred_fallthru
      _
    // Predicated region
    $region22: #{tpu_custom_call.1} parent=1 // pred_check
      _
    $region23: #{tpu_custom_call.1} parent=1 // pred_check_branch
      %33 = sbr.rel (0) target = $region25
    $region24: #{tpu_custom_call.1} parent=1 // pred_region
      _
    $region25: #{tpu_custom_call.1} parent=1 // pred_fallthru
      _
    // Predicated region
    $region26: #{tpu_custom_call.1} parent=1 // pred_check
      _
    $region27: #{tpu_custom_call.1} parent=1 // pred_check_branch
      %35 = sbr.rel (0) target = $region29
    $region28: #{tpu_custom_call.1} parent=1 // pred_region
      %36 = dma.done [#allocation3], 1536
    $region29: #{tpu_custom_call.1} parent=1 // pred_fallthru
      _
    %v37 = vld [vmem:[%s0] sm:$0xff]
    %v38 = vld [vmem:[%s0 + $0x8] sm:$0xff]
    %v39 = vld [vmem:[%s0 + $0x10] sm:$0xff]
    %v40 = vld [vmem:[%s0 + $0x18] sm:$0xff]
    %v41 = vld [vmem:[%s0 + $0x20] sm:$0xff]
    %v42 = vld [vmem:[%s0 + $0x28] sm:$0xff]
    %v43 = vld [vmem:[%s0 + $0x30] sm:$0xff]
    %v44 = vld [vmem:[%s0 + $0x38] sm:$0xff]
    %v45 = vld [vmem:[%s1] sm:$0xff]
    %v46 = vld [vmem:[%s1 + $0x8] sm:$0xff]
    %v47 = vld [vmem:[%s1 + $0x10] sm:$0xff]
    %v48 = vld [vmem:[%s1 + $0x18] sm:$0xff]
    %v49 = vld [vmem:[%s3] sm:$0x1]
    %v51 = vlaneseq
    %v52 = vshrl.u32 %v51, 7
    %v53 = vsub.s32 0, %v52
    %v54 = vrot.slane %v49, %v53
    %vm56 = vcmask 261120
    %v58 = vsel %vm56, %v37, 0
    %v61 = vsel %vm56, %v38, 0
    %v64 = vsel %vm56, %v39, 0
    %v67 = vsel %vm56, %v40, 0
    %v70 = vsel %vm56, %v41, 0
    %v73 = vsel %vm56, %v42, 0
    %v76 = vsel %vm56, %v43, 0
    %v79 = vsel %vm56, %v44, 0
    %81 = vmatprep.subr.mxu0 0.0
    %82 = vmatpush1.msra.mxu0 %v45
    %83 = vmatprep.subr.mxu0 0.0
    %84 = vmatpush1.msra.mxu0 %v46
    %85 = vmatprep.subr.mxu0 0.0
    %86 = vmatpush1.msra.mxu0 %v47
    %87 = vmatprep.subr.mxu0 0.0
    %88 = vmatpush1.msra.mxu0 %v48
    %89 = vmatprep.subr.mxu0 0.0
    %90 = vmatpush1.msra.mxu0 0.0
    %91 = vmatprep.subr.mxu0 0.0
    %92 = vmatpush1.msra.mxu0 0.0
    %93 = vmatprep.subr.mxu0 0.0
    %94 = vmatpush1.msra.mxu0 0.0
    %95 = vmatprep.subr.mxu0 0.0
    %96 = vmatpush1.msra.mxu0 0.0
    %97 = vmatprep.subr.mxu0 0.0
    %98 = vmatpush1.msra.mxu0 0.0
    %99 = vmatprep.subr.mxu0 0.0
    %100 = vmatpush1.msra.mxu0 0.0
    %101 = vmatprep.subr.mxu0 0.0
    %102 = vmatpush1.msra.mxu0 0.0
    %103 = vmatprep.subr.mxu0 0.0
    %104 = vmatpush1.msra.mxu0 0.0
    %105 = vmatprep.subr.mxu0 0.0
    %106 = vmatpush1.msra.mxu0 0.0
    %107 = vmatprep.subr.mxu0 0.0
    %108 = vmatpush1.msra.mxu0 0.0
    %109 = vmatprep.subr.mxu0 0.0
    %110 = vmatpush1.msra.mxu0 0.0
    %111 = vmatprep.subr.mxu0 0.0
    %112 = vmatpush1.msra.mxu0 0.0
    %113 = vmatprep.subr.mxu0 0.0
    %114 = vmatpush1.msra.mxu0 0.0
    %115 = vmatprep.subr.mxu0 0.0
    %116 = vmatpush1.msra.mxu0 0.0
    %117 = vmatprep.subr.mxu0 0.0
    %118 = vmatpush1.msra.mxu0 0.0
    %119 = vmatprep.subr.mxu0 0.0
    %120 = vmatpush1.msra.mxu0 0.0
    %121 = vmatprep.subr.mxu0 0.0
    %122 = vmatpush1.msra.mxu0 0.0
    %123 = vmatprep.subr.mxu0 0.0
    %124 = vmatpush1.msra.mxu0 0.0
    %125 = vmatprep.subr.mxu0 0.0
    %126 = vmatpush1.msra.mxu0 0.0
    %127 = vmatprep.subr.mxu0 0.0
    %128 = vmatpush1.msra.mxu0 0.0
    %129 = vmatprep.subr.mxu0 0.0
    %130 = vmatpush1.msra.mxu0 0.0
    %131 = vmatprep.subr.mxu0 0.0
    %132 = vmatpush1.msra.mxu0 0.0
    %133 = vmatprep.subr.mxu0 0.0
    %134 = vmatpush1.msra.mxu0 0.0
    %135 = vmatprep.subr.mxu0 0.0
    %136 = vmatpush1.msra.mxu0 0.0
    %137 = vmatprep.subr.mxu0 0.0
    %138 = vmatpush1.msra.mxu0 0.0
    %139 = vmatprep.subr.mxu0 0.0
    %140 = vmatpush1.msra.mxu0 0.0
    %141 = vmatprep.subr.mxu0 0.0
    %142 = vmatpush1.msra.mxu0 0.0
    %143 = vmatprep.subr.mxu0 0.0
    %144 = vmatpush1.msra.mxu0 0.0
    %145 = vmatprep.mubr.f32.mxu0 0.0
    %146 = vmatmul.mubr.f32.gmra.mrb[0].mxu0 %v58
    %v147 = vpop.f32.mrb[0].mxu0
    %v148 = vadd.f32 %v54, %v147
    %v149 = vpop.f32.mrb[0].mxu0
    %150 = vmatprep.mubr.f32.mxu0 0.0
    %151 = vmatmul.mubr.f32.gmra.mrb[0].mxu0 %v61
    %v152 = vpop.f32.mrb[0].mxu0
    %v153 = vadd.f32 %v54, %v152
    %v154 = vpop.f32.mrb[0].mxu0
    %155 = vmatprep.mubr.f32.mxu0 0.0
    %156 = vmatmul.mubr.f32.gmra.mrb[0].mxu0 %v64
    %v157 = vpop.f32.mrb[0].mxu0
    %v158 = vadd.f32 %v54, %v157
    %v159 = vpop.f32.mrb[0].mxu0
    %160 = vmatprep.mubr.f32.mxu0 0.0
    %161 = vmatmul.mubr.f32.gmra.mrb[0].mxu0 %v67
    %v162 = vpop.f32.mrb[0].mxu0
    %v163 = vadd.f32 %v54, %v162
    %v164 = vpop.f32.mrb[0].mxu0
    %165 = vmatprep.mubr.f32.mxu0 0.0
    %166 = vmatmul.mubr.f32.gmra.mrb[0].mxu0 %v70
    %v167 = vpop.f32.mrb[0].mxu0
    %v168 = vadd.f32 %v54, %v167
    %v169 = vpop.f32.mrb[0].mxu0
    %170 = vmatprep.mubr.f32.mxu0 0.0
    %171 = vmatmul.mubr.f32.gmra.mrb[0].mxu0 %v73
    %v172 = vpop.f32.mrb[0].mxu0
    %v173 = vadd.f32 %v54, %v172
    %v174 = vpop.f32.mrb[0].mxu0
    %175 = vmatprep.mubr.f32.mxu0 0.0
    %176 = vmatmul.mubr.f32.gmra.mrb[0].mxu0 %v76
    %v177 = vpop.f32.mrb[0].mxu0
    %v178 = vadd.f32 %v54, %v177
    %v179 = vpop.f32.mrb[0].mxu0
    %180 = vmatprep.mubr.f32.mxu0 0.0
    %181 = vmatmul.mubr.f32.gmra.mrb[0].mxu0 %v79
    %v182 = vpop.f32.mrb[0].mxu0
    %v183 = vadd.f32 %v54, %v182
    %v184 = vpop.f32.mrb[0].mxu0
    %185 = vdwg.mxu0
    %v186 = vld [vmem:[#allocation2] sm:$0xff]
    %v187 = vld [vmem:[#allocation2 + $0x8] sm:$0xff]
    %v188 = vld [vmem:[#allocation2 + $0x10] sm:$0xff]
    %v189 = vld [vmem:[#allocation2 + $0x18] sm:$0xff]
    %v191 = vsel %vm56, 0.0, 0
    %193 = vmatprep.subr.mxu0 0.0
    %194 = vmatpush1.msra.mxu0 %v186
    %195 = vmatprep.subr.mxu0 0.0
    %196 = vmatpush1.msra.mxu0 %v187
    %197 = vmatprep.subr.mxu0 0.0
    %198 = vmatpush1.msra.mxu0 %v188
    %199 = vmatprep.subr.mxu0 0.0
    %200 = vmatpush1.msra.mxu0 %v189
    %201 = vmatprep.subr.mxu0 0.0
    %202 = vmatpush1.msra.mxu0 0.0
    %203 = vmatprep.subr.mxu0 0.0
    %204 = vmatpush1.msra.mxu0 0.0
    %205 = vmatprep.subr.mxu0 0.0
    %206 = vmatpush1.msra.mxu0 0.0
    %207 = vmatprep.subr.mxu0 0.0
    %208 = vmatpush1.msra.mxu0 0.0
    %209 = vmatprep.subr.mxu0 0.0
    %210 = vmatpush1.msra.mxu0 0.0
    %211 = vmatprep.subr.mxu0 0.0
    %212 = vmatpush1.msra.mxu0 0.0
    %213 = vmatprep.subr.mxu0 0.0
    %214 = vmatpush1.msra.mxu0 0.0
    %215 = vmatprep.subr.mxu0 0.0
    %216 = vmatpush1.msra.mxu0 0.0
    %217 = vmatprep.subr.mxu0 0.0
    %218 = vmatpush1.msra.mxu0 0.0
    %219 = vmatprep.subr.mxu0 0.0
    %220 = vmatpush1.msra.mxu0 0.0
    %221 = vmatprep.subr.mxu0 0.0
    %222 = vmatpush1.msra.mxu0 0.0
    %223 = vmatprep.subr.mxu0 0.0
    %224 = vmatpush1.msra.mxu0 0.0
    %225 = vmatprep.subr.mxu0 0.0
    %226 = vmatpush1.msra.mxu0 0.0
    %227 = vmatprep.subr.mxu0 0.0
    %228 = vmatpush1.msra.mxu0 0.0
    %229 = vmatprep.subr.mxu0 0.0
    %230 = vmatpush1.msra.mxu0 0.0
    %231 = vmatprep.subr.mxu0 0.0
    %232 = vmatpush1.msra.mxu0 0.0
    %233 = vmatprep.subr.mxu0 0.0
    %234 = vmatpush1.msra.mxu0 0.0
    %235 = vmatprep.subr.mxu0 0.0
    %236 = vmatpush1.msra.mxu0 0.0
    %237 = vmatprep.subr.mxu0 0.0
    %238 = vmatpush1.msra.mxu0 0.0
    %239 = vmatprep.subr.mxu0 0.0
    %240 = vmatpush1.msra.mxu0 0.0
    %241 = vmatprep.subr.mxu0 0.0
    %242 = vmatpush1.msra.mxu0 0.0
    %243 = vmatprep.subr.mxu0 0.0
    %244 = vmatpush1.msra.mxu0 0.0
    %245 = vmatprep.subr.mxu0 0.0
    %246 = vmatpush1.msra.mxu0 0.0
    %247 = vmatprep.subr.mxu0 0.0
    %248 = vmatpush1.msra.mxu0 0.0
    %249 = vmatprep.subr.mxu0 0.0
    %250 = vmatpush1.msra.mxu0 0.0
    %251 = vmatprep.subr.mxu0 0.0
    %252 = vmatpush1.msra.mxu0 0.0
    %253 = vmatprep.subr.mxu0 0.0
    %254 = vmatpush1.msra.mxu0 0.0
    %255 = vmatprep.subr.mxu0 0.0
    %256 = vmatpush1.msra.mxu0 0.0
    %257 = vmatprep.mubr.f32.mxu0 0.0
    %258 = vmatmul.mubr.f32.gmra.mrb[0].mxu0 %v191
    %v259 = vpop.f32.mrb[0].mxu0
    %v260 = vadd.f32 %v148, %v259
    %v261 = vpop.f32.mrb[0].mxu0
    %262 = vdwg.mxu0
    %v263 = vxor.u32 %v260, 2147483648
    %v264 = vmul.f32 %v263, 1.442695
    %v265 = vpow.pop %v264
    %v266 = vadd.f32 %v265, 1.0
    %v267 = vrcp.pop %v266
    %v268 = vmul.f32 1.0, %v267
    %v269 = vtanh.pop %v260
    %v270 = vmul.f32 %v268, 0.0
    %272 = vrot.lane.b32.xlu0 %v269, 32
    %v273 = vpop.permute.xlu0 %272
    %v275 = vmul.f32 %v268, %v273
    %277 = vrot.lane.b32.xlu0 %v275, 32
    %v278 = vpop.permute.xlu0 %277
    %v280 = vadd.f32 %v270, %v278
    %v281 = vtanh.pop %v280
    %283 = vrot.lane.b32.xlu0 %v281, 32
    %v284 = vpop.permute.xlu0 %283
    %v286 = vmul.f32 %v268, %v284
    %s287 = scalar_lea.vmem %s1, 32
    %v288 = vld [vmem:[%s287] sm:$0xff]
    %v289 = vld [vmem:[%s287 + $0x8] sm:$0xff]
    %v290 = vld [vmem:[%s287 + $0x10] sm:$0xff]
    %v291 = vld [vmem:[%s287 + $0x18] sm:$0xff]
    %s292 = scalar_lea.vmem %s3, 1
    %v293 = vld [vmem:[%s292] sm:$0x1]
    %v295 = vlaneseq
    %v296 = vshrl.u32 %v295, 7
    %v297 = vsub.s32 0, %v296
    %v298 = vrot.slane %v293, %v297
    %301 = vrot.lane.b32.xlu0 %v286, 64
    %v302 = vpop.permute.xlu0 %301
    %v303 = vsel %vm56, %v302, 0
    %305 = vmatprep.subr.mxu0 0.0
    %306 = vmatpush1.msra.mxu0 %v288
    %307 = vmatprep.subr.mxu0 0.0
    %308 = vmatpush1.msra.mxu0 %v289
    %309 = vmatprep.subr.mxu0 0.0
    %310 = vmatpush1.msra.mxu0 %v290
    %311 = vmatprep.subr.mxu0 0.0
    %312 = vmatpush1.msra.mxu0 %v291
    %313 = vmatprep.subr.mxu0 0.0
    %314 = vmatpush1.msra.mxu0 0.0
    %315 = vmatprep.subr.mxu0 0.0
    %316 = vmatpush1.msra.mxu0 0.0
    %317 = vmatprep.subr.mxu0 0.0
    %318 = vmatpush1.msra.mxu0 0.0
    %319 = vmatprep.subr.mxu0 0.0
    %320 = vmatpush1.msra.mxu0 0.0
    %321 = vmatprep.subr.mxu0 0.0
    %322 = vmatpush1.msra.mxu0 0.0
    %323 = vmatprep.subr.mxu0 0.0
    %324 = vmatpush1.msra.mxu0 0.0
    %325 = vmatprep.subr.mxu0 0.0
    %326 = vmatpush1.msra.mxu0 0.0
    %327 = vmatprep.subr.mxu0 0.0
    %328 = vmatpush1.msra.mxu0 0.0
    %329 = vmatprep.subr.mxu0 0.0
    %330 = vmatpush1.msra.mxu0 0.0
    %331 = vmatprep.subr.mxu0 0.0
    %332 = vmatpush1.msra.mxu0 0.0
    %333 = vmatprep.subr.mxu0 0.0
    %334 = vmatpush1.msra.mxu0 0.0
    %335 = vmatprep.subr.mxu0 0.0
    %336 = vmatpush1.msra.mxu0 0.0
    %337 = vmatprep.subr.mxu0 0.0
    %338 = vmatpush1.msra.mxu0 0.0
    %339 = vmatprep.subr.mxu0 0.0
    %340 = vmatpush1.msra.mxu0 0.0
    %341 = vmatprep.subr.mxu0 0.0
    %342 = vmatpush1.msra.mxu0 0.0
    %343 = vmatprep.subr.mxu0 0.0
    %344 = vmatpush1.msra.mxu0 0.0
    %345 = vmatprep.subr.mxu0 0.0
    %346 = vmatpush1.msra.mxu0 0.0
    %347 = vmatprep.subr.mxu0 0.0
    %348 = vmatpush1.msra.mxu0 0.0
    %349 = vmatprep.subr.mxu0 0.0
    %350 = vmatpush1.msra.mxu0 0.0
    %351 = vmatprep.subr.mxu0 0.0
    %352 = vmatpush1.msra.mxu0 0.0
    %353 = vmatprep.subr.mxu0 0.0
    %354 = vmatpush1.msra.mxu0 0.0
    %355 = vmatprep.subr.mxu0 0.0
    %356 = vmatpush1.msra.mxu0 0.0
    %357 = vmatprep.subr.mxu0 0.0
    %358 = vmatpush1.msra.mxu0 0.0
    %359 = vmatprep.subr.mxu0 0.0
    %360 = vmatpush1.msra.mxu0 0.0
    %361 = vmatprep.subr.mxu0 0.0
    %362 = vmatpush1.msra.mxu0 0.0
    %363 = vmatprep.subr.mxu0 0.0
    %364 = vmatpush1.msra.mxu0 0.0
    %365 = vmatprep.subr.mxu0 0.0
    %366 = vmatpush1.msra.mxu0 0.0
    %367 = vmatprep.subr.mxu0 0.0
    %368 = vmatpush1.msra.mxu0 0.0
    %369 = vmatprep.mubr.f32.mxu0 0.0
    %370 = vmatmul.mubr.f32.gmra.mrb[0].mxu0 %v303
    %v371 = vpop.f32.mrb[0].mxu0
    %v372 = vadd.f32 %v298, %v371
    %v373 = vpop.f32.mrb[0].mxu0
    %374 = vdwg.mxu0
    %s375 = scalar_lea.vmem [#allocation2], 32
    %v376 = vld [vmem:[%s375] sm:$0xff]
    %v377 = vld [vmem:[%s375 + $0x8] sm:$0xff]
    %v378 = vld [vmem:[%s375 + $0x10] sm:$0xff]
    %v379 = vld [vmem:[%s375 + $0x18] sm:$0xff]
    %380 = vmatprep.subr.mxu0 0.0
    %381 = vmatpush1.msra.mxu0 %v376
    %382 = vmatprep.subr.mxu0 0.0
    %383 = vmatpush1.msra.mxu0 %v377
    %384 = vmatprep.subr.mxu0 0.0
    %385 = vmatpush1.msra.mxu0 %v378
    %386 = vmatprep.subr.mxu0 0.0
    %387 = vmatpush1.msra.mxu0 %v379
    %388 = vmatprep.subr.mxu0 0.0
    %389 = vmatpush1.msra.mxu0 0.0
    %390 = vmatprep.subr.mxu0 0.0
    %391 = vmatpush1.msra.mxu0 0.0
    %392 = vmatprep.subr.mxu0 0.0
    %393 = vmatpush1.msra.mxu0 0.0
    %394 = vmatprep.subr.mxu0 0.0
    %395 = vmatpush1.msra.mxu0 0.0
    %396 = vmatprep.subr.mxu0 0.0
    %397 = vmatpush1.msra.mxu0 0.0
    %398 = vmatprep.subr.mxu0 0.0
    %399 = vmatpush1.msra.mxu0 0.0
    %400 = vmatprep.subr.mxu0 0.0
    %401 = vmatpush1.msra.mxu0 0.0
    %402 = vmatprep.subr.mxu0 0.0
    %403 = vmatpush1.msra.mxu0 0.0
    %404 = vmatprep.subr.mxu0 0.0
    %405 = vmatpush1.msra.mxu0 0.0
    %406 = vmatprep.subr.mxu0 0.0
    %407 = vmatpush1.msra.mxu0 0.0
    %408 = vmatprep.subr.mxu0 0.0
    %409 = vmatpush1.msra.mxu0 0.0
    %410 = vmatprep.subr.mxu0 0.0
    %411 = vmatpush1.msra.mxu0 0.0
    %412 = vmatprep.subr.mxu0 0.0
    %413 = vmatpush1.msra.mxu0 0.0
    %414 = vmatprep.subr.mxu0 0.0
    %415 = vmatpush1.msra.mxu0 0.0
    %416 = vmatprep.subr.mxu0 0.0
    %417 = vmatpush1.msra.mxu0 0.0
    %418 = vmatprep.subr.mxu0 0.0
    %419 = vmatpush1.msra.mxu0 0.0
    %420 = vmatprep.subr.mxu0 0.0
    %421 = vmatpush1.msra.mxu0 0.0
    %422 = vmatprep.subr.mxu0 0.0
    %423 = vmatpush1.msra.mxu0 0.0
    %424 = vmatprep.subr.mxu0 0.0
    %425 = vmatpush1.msra.mxu0 0.0
    %426 = vmatprep.subr.mxu0 0.0
    %427 = vmatpush1.msra.mxu0 0.0
    %428 = vmatprep.subr.mxu0 0.0
    %429 = vmatpush1.msra.mxu0 0.0
    %430 = vmatprep.subr.mxu0 0.0
    %431 = vmatpush1.msra.mxu0 0.0
    %432 = vmatprep.subr.mxu0 0.0
    %433 = vmatpush1.msra.mxu0 0.0
    %434 = vmatprep.subr.mxu0 0.0
    %435 = vmatpush1.msra.mxu0 0.0
    %436 = vmatprep.subr.mxu0 0.0
    %437 = vmatpush1.msra.mxu0 0.0
    %438 = vmatprep.subr.mxu0 0.0
    %439 = vmatpush1.msra.mxu0 0.0
    %440 = vmatprep.subr.mxu0 0.0
    %441 = vmatpush1.msra.mxu0 0.0
    %442 = vmatprep.subr.mxu0 0.0
    %443 = vmatpush1.msra.mxu0 0.0
    %444 = vmatprep.mubr.f32.mxu0 0.0
    %445 = vmatmul.mubr.f32.gmra.mrb[0].mxu0 %v191
    %v446 = vpop.f32.mrb[0].mxu0
    %v447 = vadd.f32 %v372, %v446
    %v448 = vpop.f32.mrb[0].mxu0
    %449 = vdwg.mxu0
    %v450 = vxor.u32 %v447, 2147483648
    %v451 = vmul.f32 %v450, 1.442695
    %v452 = vpow.pop %v451
    %v453 = vadd.f32 %v452, 1.0
    %v454 = vrcp.pop %v453
    %v455 = vmul.f32 1.0, %v454
    %v456 = vtanh.pop %v447
    %v457 = vmul.f32 %v455, 0.0
    %459 = vrot.lane.b32.xlu0 %v456, 32
    %v460 = vpop.permute.xlu0 %459
    %v462 = vmul.f32 %v455, %v460
    %464 = vrot.lane.b32.xlu0 %v462, 32
    %v465 = vpop.permute.xlu0 %464
    %v467 = vadd.f32 %v457, %v465
    %v468 = vtanh.pop %v467
    %470 = vrot.lane.b32.xlu0 %v468, 32
    %v471 = vpop.permute.xlu0 %470
    %v473 = vmul.f32 %v455, %v471
    %474 = vmatprep.subr.mxu0 0.0
    %475 = vmatpush1.msra.mxu0 %v186
    %476 = vmatprep.subr.mxu0 0.0
    %477 = vmatpush1.msra.mxu0 %v187
    %478 = vmatprep.subr.mxu0 0.0
    %479 = vmatpush1.msra.mxu0 %v188
    %480 = vmatprep.subr.mxu0 0.0
    %481 = vmatpush1.msra.mxu0 %v189
    %482 = vmatprep.subr.mxu0 0.0
    %483 = vmatpush1.msra.mxu0 0.0
    %484 = vmatprep.subr.mxu0 0.0
    %485 = vmatpush1.msra.mxu0 0.0
    %486 = vmatprep.subr.mxu0 0.0
    %487 = vmatpush1.msra.mxu0 0.0
    %488 = vmatprep.subr.mxu0 0.0
    %489 = vmatpush1.msra.mxu0 0.0
    %490 = vmatprep.subr.mxu0 0.0
    %491 = vmatpush1.msra.mxu0 0.0
    %492 = vmatprep.subr.mxu0 0.0
    %493 = vmatpush1.msra.mxu0 0.0
    %494 = vmatprep.subr.mxu0 0.0
    %495 = vmatpush1.msra.mxu0 0.0
    %496 = vmatprep.subr.mxu0 0.0
    %497 = vmatpush1.msra.mxu0 0.0
    %498 = vmatprep.subr.mxu0 0.0
    %499 = vmatpush1.msra.mxu0 0.0
    %500 = vmatprep.subr.mxu0 0.0
    %501 = vmatpush1.msra.mxu0 0.0
    %502 = vmatprep.subr.mxu0 0.0
    %503 = vmatpush1.msra.mxu0 0.0
    %504 = vmatprep.subr.mxu0 0.0
    %505 = vmatpush1.msra.mxu0 0.0
    %506 = vmatprep.subr.mxu0 0.0
    %507 = vmatpush1.msra.mxu0 0.0
    %508 = vmatprep.subr.mxu0 0.0
    %509 = vmatpush1.msra.mxu0 0.0
    %510 = vmatprep.subr.mxu0 0.0
    %511 = vmatpush1.msra.mxu0 0.0
    %512 = vmatprep.subr.mxu0 0.0
    %513 = vmatpush1.msra.mxu0 0.0
    %514 = vmatprep.subr.mxu0 0.0
    %515 = vmatpush1.msra.mxu0 0.0
    %516 = vmatprep.subr.mxu0 0.0
    %517 = vmatpush1.msra.mxu0 0.0
    %518 = vmatprep.subr.mxu0 0.0
    %519 = vmatpush1.msra.mxu0 0.0
    %520 = vmatprep.subr.mxu0 0.0
    %521 = vmatpush1.msra.mxu0 0.0
    %522 = vmatprep.subr.mxu0 0.0
    %523 = vmatpush1.msra.mxu0 0.0
    %524 = vmatprep.subr.mxu0 0.0
    %525 = vmatpush1.msra.mxu0 0.0
    %526 = vmatprep.subr.mxu0 0.0
    %527 = vmatpush1.msra.mxu0 0.0
    %528 = vmatprep.subr.mxu0 0.0
    %529 = vmatpush1.msra.mxu0 0.0
    %530 = vmatprep.subr.mxu0 0.0
    %531 = vmatpush1.msra.mxu0 0.0
    %532 = vmatprep.subr.mxu0 0.0
    %533 = vmatpush1.msra.mxu0 0.0
    %534 = vmatprep.subr.mxu0 0.0
    %535 = vmatpush1.msra.mxu0 0.0
    %536 = vmatprep.subr.mxu0 0.0
    %537 = vmatpush1.msra.mxu0 0.0
    %538 = vmatprep.mubr.f32.mxu0 0.0
    %539 = vmatmul.mubr.f32.gmra.mrb[0].mxu0 %v303
    %v540 = vpop.f32.mrb[0].mxu0
    %v541 = vadd.f32 %v153, %v540
    %v542 = vpop.f32.mrb[0].mxu0
    %543 = vdwg.mxu0
    %v544 = vxor.u32 %v541, 2147483648
    %v545 = vmul.f32 %v544, 1.442695
    %v546 = vpow.pop %v545
    %v547 = vadd.f32 %v546, 1.0
    %v548 = vrcp.pop %v547
    %v549 = vmul.f32 1.0, %v548
    %v550 = vtanh.pop %v541
    %v551 = vmul.f32 %v549, %v280
    %553 = vrot.lane.b32.xlu0 %v550, 32
    %v554 = vpop.permute.xlu0 %553
    %v556 = vmul.f32 %v549, %v554
    %558 = vrot.lane.b32.xlu0 %v556, 32
    %v559 = vpop.permute.xlu0 %558
    %v561 = vadd.f32 %v551, %v559
    %v562 = vtanh.pop %v561
    %564 = vrot.lane.b32.xlu0 %v562, 32
    %v565 = vpop.permute.xlu0 %564
    %v567 = vmul.f32 %v549, %v565
    %s568 = scalar_lea.vmem %s1, 64
    %v569 = vld [vmem:[%s568] sm:$0xff]
    %v570 = vld [vmem:[%s568 + $0x8] sm:$0xff]
    %v571 = vld [vmem:[%s568 + $0x10] sm:$0xff]
    %v572 = vld [vmem:[%s568 + $0x18] sm:$0xff]
    %s573 = scalar_lea.vmem %s3, 2
    %v574 = vld [vmem:[%s573] sm:$0x1]
    %v576 = vlaneseq
    %v577 = vshrl.u32 %v576, 7
    %v578 = vsub.s32 0, %v577
    %v579 = vrot.slane %v574, %v578
    %582 = vrot.lane.b32.xlu0 %v473, 64
    %v583 = vpop.permute.xlu0 %582
    %v584 = vsel %vm56, %v583, 0
    %586 = vmatprep.subr.mxu0 0.0
    %587 = vmatpush1.msra.mxu0 %v569
    %588 = vmatprep.subr.mxu0 0.0
    %589 = vmatpush1.msra.mxu0 %v570
    %590 = vmatprep.subr.mxu0 0.0
    %591 = vmatpush1.msra.mxu0 %v571
    %592 = vmatprep.subr.mxu0 0.0
    %593 = vmatpush1.msra.mxu0 %v572
    %594 = vmatprep.subr.mxu0 0.0
    %595 = vmatpush1.msra.mxu0 0.0
    %596 = vmatprep.subr.mxu0 0.0
    %597 = vmatpush1.msra.mxu0 0.0
    %598 = vmatprep.subr.mxu0 0.0
    %599 = vmatpush1.msra.mxu0 0.0
    %600 = vmatprep.subr.mxu0 0.0
    %601 = vmatpush1.msra.mxu0 0.0
    %602 = vmatprep.subr.mxu0 0.0
    %603 = vmatpush1.msra.mxu0 0.0
    %604 = vmatprep.subr.mxu0 0.0
    %605 = vmatpush1.msra.mxu0 0.0
    %606 = vmatprep.subr.mxu0 0.0
    %607 = vmatpush1.msra.mxu0 0.0
    %608 = vmatprep.subr.mxu0 0.0
    %609 = vmatpush1.msra.mxu0 0.0
    %610 = vmatprep.subr.mxu0 0.0
    %611 = vmatpush1.msra.mxu0 0.0
    %612 = vmatprep.subr.mxu0 0.0
    %613 = vmatpush1.msra.mxu0 0.0
    %614 = vmatprep.subr.mxu0 0.0
    %615 = vmatpush1.msra.mxu0 0.0
    %616 = vmatprep.subr.mxu0 0.0
    %617 = vmatpush1.msra.mxu0 0.0
    %618 = vmatprep.subr.mxu0 0.0
    %619 = vmatpush1.msra.mxu0 0.0
    %620 = vmatprep.subr.mxu0 0.0
    %621 = vmatpush1.msra.mxu0 0.0
    %622 = vmatprep.subr.mxu0 0.0
    %623 = vmatpush1.msra.mxu0 0.0
    %624 = vmatprep.subr.mxu0 0.0
    %625 = vmatpush1.msra.mxu0 0.0
    %626 = vmatprep.subr.mxu0 0.0
    %627 = vmatpush1.msra.mxu0 0.0
    %628 = vmatprep.subr.mxu0 0.0
    %629 = vmatpush1.msra.mxu0 0.0
    %630 = vmatprep.subr.mxu0 0.0
    %631 = vmatpush1.msra.mxu0 0.0
    %632 = vmatprep.subr.mxu0 0.0
    %633 = vmatpush1.msra.mxu0 0.0
    %634 = vmatprep.subr.mxu0 0.0
    %635 = vmatpush1.msra.mxu0 0.0
    %636 = vmatprep.subr.mxu0 0.0
    %637 = vmatpush1.msra.mxu0 0.0
    %638 = vmatprep.subr.mxu0 0.0
    %639 = vmatpush1.msra.mxu0 0.0
    %640 = vmatprep.subr.mxu0 0.0
    %641 = vmatpush1.msra.mxu0 0.0
    %642 = vmatprep.subr.mxu0 0.0
    %643 = vmatpush1.msra.mxu0 0.0
    %644 = vmatprep.subr.mxu0 0.0
    %645 = vmatpush1.msra.mxu0 0.0
    %646 = vmatprep.subr.mxu0 0.0
    %647 = vmatpush1.msra.mxu0 0.0
    %648 = vmatprep.subr.mxu0 0.0
    %649 = vmatpush1.msra.mxu0 0.0
    %650 = vmatprep.mubr.f32.mxu0 0.0
    %651 = vmatmul.mubr.f32.gmra.mrb[0].mxu0 %v584
    %v652 = vpop.f32.mrb[0].mxu0
    %v653 = vadd.f32 %v579, %v652
    %v654 = vpop.f32.mrb[0].mxu0
    %655 = vdwg.mxu0
    %s656 = scalar_lea.vmem [#allocation2], 64
    %v657 = vld [vmem:[%s656] sm:$0xff]
    %v658 = vld [vmem:[%s656 + $0x8] sm:$0xff]
    %v659 = vld [vmem:[%s656 + $0x10] sm:$0xff]
    %v660 = vld [vmem:[%s656 + $0x18] sm:$0xff]
    %661 = vmatprep.subr.mxu0 0.0
    %662 = vmatpush1.msra.mxu0 %v657
    %663 = vmatprep.subr.mxu0 0.0
    %664 = vmatpush1.msra.mxu0 %v658
    %665 = vmatprep.subr.mxu0 0.0
    %666 = vmatpush1.msra.mxu0 %v659
    %667 = vmatprep.subr.mxu0 0.0
    %668 = vmatpush1.msra.mxu0 %v660
    %669 = vmatprep.subr.mxu0 0.0
    %670 = vmatpush1.msra.mxu0 0.0
    %671 = vmatprep.subr.mxu0 0.0
    %672 = vmatpush1.msra.mxu0 0.0
    %673 = vmatprep.subr.mxu0 0.0
    %674 = vmatpush1.msra.mxu0 0.0
    %675 = vmatprep.subr.mxu0 0.0
    %676 = vmatpush1.msra.mxu0 0.0
    %677 = vmatprep.subr.mxu0 0.0
    %678 = vmatpush1.msra.mxu0 0.0
    %679 = vmatprep.subr.mxu0 0.0
    %680 = vmatpush1.msra.mxu0 0.0
    %681 = vmatprep.subr.mxu0 0.0
    %682 = vmatpush1.msra.mxu0 0.0
    %683 = vmatprep.subr.mxu0 0.0
    %684 = vmatpush1.msra.mxu0 0.0
    %685 = vmatprep.subr.mxu0 0.0
    %686 = vmatpush1.msra.mxu0 0.0
    %687 = vmatprep.subr.mxu0 0.0
    %688 = vmatpush1.msra.mxu0 0.0
    %689 = vmatprep.subr.mxu0 0.0
    %690 = vmatpush1.msra.mxu0 0.0
    %691 = vmatprep.subr.mxu0 0.0
    %692 = vmatpush1.msra.mxu0 0.0
    %693 = vmatprep.subr.mxu0 0.0
    %694 = vmatpush1.msra.mxu0 0.0
    %695 = vmatprep.subr.mxu0 0.0
    %696 = vmatpush1.msra.mxu0 0.0
    %697 = vmatprep.subr.mxu0 0.0
    %698 = vmatpush1.msra.mxu0 0.0
    %699 = vmatprep.subr.mxu0 0.0
    %700 = vmatpush1.msra.mxu0 0.0
    %701 = vmatprep.subr.mxu0 0.0
    %702 = vmatpush1.msra.mxu0 0.0
    %703 = vmatprep.subr.mxu0 0.0
    %704 = vmatpush1.msra.mxu0 0.0
    %705 = vmatprep.subr.mxu0 0.0
    %706 = vmatpush1.msra.mxu0 0.0
    %707 = vmatprep.subr.mxu0 0.0
    %708 = vmatpush1.msra.mxu0 0.0
    %709 = vmatprep.subr.mxu0 0.0
    %710 = vmatpush1.msra.mxu0 0.0
    %711 = vmatprep.subr.mxu0 0.0
    %712 = vmatpush1.msra.mxu0 0.0
    %713 = vmatprep.subr.mxu0 0.0
    %714 = vmatpush1.msra.mxu0 0.0
    %715 = vmatprep.subr.mxu0 0.0
    %716 = vmatpush1.msra.mxu0 0.0
    %717 = vmatprep.subr.mxu0 0.0
    %718 = vmatpush1.msra.mxu0 0.0
    %719 = vmatprep.subr.mxu0 0.0
    %720 = vmatpush1.msra.mxu0 0.0
    %721 = vmatprep.subr.mxu0 0.0
    %722 = vmatpush1.msra.mxu0 0.0
    %723 = vmatprep.subr.mxu0 0.0
    %724 = vmatpush1.msra.mxu0 0.0
    %725 = vmatprep.mubr.f32.mxu0 0.0
    %726 = vmatmul.mubr.f32.gmra.mrb[0].mxu0 %v191
    %v727 = vpop.f32.mrb[0].mxu0
    %v728 = vadd.f32 %v653, %v727
    %v729 = vpop.f32.mrb[0].mxu0
    %730 = vdwg.mxu0
    %v731 = vxor.u32 %v728, 2147483648
    %v732 = vmul.f32 %v731, 1.442695
    %v733 = vpow.pop %v732
    %v734 = vadd.f32 %v733, 1.0
    %v735 = vrcp.pop %v734
    %v736 = vmul.f32 1.0, %v735
    %v737 = vtanh.pop %v728
    %v738 = vmul.f32 %v736, 0.0
    %740 = vrot.lane.b32.xlu0 %v737, 32
    %v741 = vpop.permute.xlu0 %740
    %v743 = vmul.f32 %v736, %v741
    %745 = vrot.lane.b32.xlu0 %v743, 32
    %v746 = vpop.permute.xlu0 %745
    %v748 = vadd.f32 %v738, %v746
    %v749 = vtanh.pop %v748
    %751 = vrot.lane.b32.xlu0 %v749, 32
    %v752 = vpop.permute.xlu0 %751
    %v754 = vmul.f32 %v736, %v752
    %756 = vrot.lane.b32.xlu0 %v567, 64
    %v757 = vpop.permute.xlu0 %756
    %v758 = vsel %vm56, %v757, 0
    %760 = vmatprep.subr.mxu0 0.0
    %761 = vmatpush1.msra.mxu0 %v288
    %762 = vmatprep.subr.mxu0 0.0
    %763 = vmatpush1.msra.mxu0 %v289
    %764 = vmatprep.subr.mxu0 0.0
    %765 = vmatpush1.msra.mxu0 %v290
    %766 = vmatprep.subr.mxu0 0.0
    %767 = vmatpush1.msra.mxu0 %v291
    %768 = vmatprep.subr.mxu0 0.0
    %769 = vmatpush1.msra.mxu0 0.0
    %770 = vmatprep.subr.mxu0 0.0
    %771 = vmatpush1.msra.mxu0 0.0
    %772 = vmatprep.subr.mxu0 0.0
    %773 = vmatpush1.msra.mxu0 0.0
    %774 = vmatprep.subr.mxu0 0.0
    %775 = vmatpush1.msra.mxu0 0.0
    %776 = vmatprep.subr.mxu0 0.0
    %777 = vmatpush1.msra.mxu0 0.0
    %778 = vmatprep.subr.mxu0 0.0
    %779 = vmatpush1.msra.mxu0 0.0
    %780 = vmatprep.subr.mxu0 0.0
    %781 = vmatpush1.msra.mxu0 0.0
    %782 = vmatprep.subr.mxu0 0.0
    %783 = vmatpush1.msra.mxu0 0.0
    %784 = vmatprep.subr.mxu0 0.0
    %785 = vmatpush1.msra.mxu0 0.0
    %786 = vmatprep.subr.mxu0 0.0
    %787 = vmatpush1.msra.mxu0 0.0
    %788 = vmatprep.subr.mxu0 0.0
    %789 = vmatpush1.msra.mxu0 0.0
    %790 = vmatprep.subr.mxu0 0.0
    %791 = vmatpush1.msra.mxu0 0.0
    %792 = vmatprep.subr.mxu0 0.0
    %793 = vmatpush1.msra.mxu0 0.0
    %794 = vmatprep.subr.mxu0 0.0
    %795 = vmatpush1.msra.mxu0 0.0
    %796 = vmatprep.subr.mxu0 0.0
    %797 = vmatpush1.msra.mxu0 0.0
    %798 = vmatprep.subr.mxu0 0.0
    %799 = vmatpush1.msra.mxu0 0.0
    %800 = vmatprep.subr.mxu0 0.0
    %801 = vmatpush1.msra.mxu0 0.0
    %802 = vmatprep.subr.mxu0 0.0
    %803 = vmatpush1.msra.mxu0 0.0
    %804 = vmatprep.subr.mxu0 0.0
    %805 = vmatpush1.msra.mxu0 0.0
    %806 = vmatprep.subr.mxu0 0.0
    %807 = vmatpush1.msra.mxu0 0.0
    %808 = vmatprep.subr.mxu0 0.0
    %809 = vmatpush1.msra.mxu0 0.0
    %810 = vmatprep.subr.mxu0 0.0
    %811 = vmatpush1.msra.mxu0 0.0
    %812 = vmatprep.subr.mxu0 0.0
    %813 = vmatpush1.msra.mxu0 0.0
    %814 = vmatprep.subr.mxu0 0.0
    %815 = vmatpush1.msra.mxu0 0.0
    %816 = vmatprep.subr.mxu0 0.0
    %817 = vmatpush1.msra.mxu0 0.0
    %818 = vmatprep.subr.mxu0 0.0
    %819 = vmatpush1.msra.mxu0 0.0
    %820 = vmatprep.subr.mxu0 0.0
    %821 = vmatpush1.msra.mxu0 0.0
    %822 = vmatprep.subr.mxu0 0.0
    %823 = vmatpush1.msra.mxu0 0.0
    %824 = vmatprep.mubr.f32.mxu0 0.0
    %825 = vmatmul.mubr.f32.gmra.mrb[0].mxu0 %v758
    %v826 = vpop.f32.mrb[0].mxu0
    %v827 = vadd.f32 %v298, %v826
    %v828 = vpop.f32.mrb[0].mxu0
    %829 = vdwg.mxu0
    %830 = vmatprep.subr.mxu0 0.0
    %831 = vmatpush1.msra.mxu0 %v376
    %832 = vmatprep.subr.mxu0 0.0
    %833 = vmatpush1.msra.mxu0 %v377
    %834 = vmatprep.subr.mxu0 0.0
    %835 = vmatpush1.msra.mxu0 %v378
    %836 = vmatprep.subr.mxu0 0.0
    %837 = vmatpush1.msra.mxu0 %v379
    %838 = vmatprep.subr.mxu0 0.0
    %839 = vmatpush1.msra.mxu0 0.0
    %840 = vmatprep.subr.mxu0 0.0
    %841 = vmatpush1.msra.mxu0 0.0
    %842 = vmatprep.subr.mxu0 0.0
    %843 = vmatpush1.msra.mxu0 0.0
    %844 = vmatprep.subr.mxu0 0.0
    %845 = vmatpush1.msra.mxu0 0.0
    %846 = vmatprep.subr.mxu0 0.0
    %847 = vmatpush1.msra.mxu0 0.0
    %848 = vmatprep.subr.mxu0 0.0
    %849 = vmatpush1.msra.mxu0 0.0
    %850 = vmatprep.subr.mxu0 0.0
    %851 = vmatpush1.msra.mxu0 0.0
    %852 = vmatprep.subr.mxu0 0.0
    %853 = vmatpush1.msra.mxu0 0.0
    %854 = vmatprep.subr.mxu0 0.0
    %855 = vmatpush1.msra.mxu0 0.0
    %856 = vmatprep.subr.mxu0 0.0
    %857 = vmatpush1.msra.mxu0 0.0
    %858 = vmatprep.subr.mxu0 0.0
    %859 = vmatpush1.msra.mxu0 0.0
    %860 = vmatprep.subr.mxu0 0.0
    %861 = vmatpush1.msra.mxu0 0.0
    %862 = vmatprep.subr.mxu0 0.0
    %863 = vmatpush1.msra.mxu0 0.0
    %864 = vmatprep.subr.mxu0 0.0
    %865 = vmatpush1.msra.mxu0 0.0
    %866 = vmatprep.subr.mxu0 0.0
    %867 = vmatpush1.msra.mxu0 0.0
    %868 = vmatprep.subr.mxu0 0.0
    %869 = vmatpush1.msra.mxu0 0.0
    %870 = vmatprep.subr.mxu0 0.0
    %871 = vmatpush1.msra.mxu0 0.0
    %872 = vmatprep.subr.mxu0 0.0
    %873 = vmatpush1.msra.mxu0 0.0
    %874 = vmatprep.subr.mxu0 0.0
    %875 = vmatpush1.msra.mxu0 0.0
    %876 = vmatprep.subr.mxu0 0.0
    %877 = vmatpush1.msra.mxu0 0.0
    %878 = vmatprep.subr.mxu0 0.0
    %879 = vmatpush1.msra.mxu0 0.0
    %880 = vmatprep.subr.mxu0 0.0
    %881 = vmatpush1.msra.mxu0 0.0
    %882 = vmatprep.subr.mxu0 0.0
    %883 = vmatpush1.msra.mxu0 0.0
    %884 = vmatprep.subr.mxu0 0.0
    %885 = vmatpush1.msra.mxu0 0.0
    %886 = vmatprep.subr.mxu0 0.0
    %887 = vmatpush1.msra.mxu0 0.0
    %888 = vmatprep.subr.mxu0 0.0
    %889 = vmatpush1.msra.mxu0 0.0
    %890 = vmatprep.subr.mxu0 0.0
    %891 = vmatpush1.msra.mxu0 0.0
    %892 = vmatprep.subr.mxu0 0.0
    %893 = vmatpush1.msra.mxu0 0.0
    %894 = vmatprep.mubr.f32.mxu0 0.0
    %895 = vmatmul.mubr.f32.gmra.mrb[0].mxu0 %v584
    %v896 = vpop.f32.mrb[0].mxu0
    %v897 = vadd.f32 %v827, %v896
    %v898 = vpop.f32.mrb[0].mxu0
    %899 = vdwg.mxu0
    %v900 = vxor.u32 %v897, 2147483648
    %v901 = vmul.f32 %v900, 1.442695
    %v902 = vpow.pop %v901
    %v903 = vadd.f32 %v902, 1.0
    %v904 = vrcp.pop %v903
    %v905 = vmul.f32 1.0, %v904
    %v906 = vtanh.pop %v897
    %v907 = vmul.f32 %v905, %v467
    %909 = vrot.lane.b32.xlu0 %v906, 32
    %v910 = vpop.permute.xlu0 %909
    %v912 = vmul.f32 %v905, %v910
    %914 = vrot.lane.b32.xlu0 %v912, 32
    %v915 = vpop.permute.xlu0 %914
    %v917 = vadd.f32 %v907, %v915
    %v918 = vtanh.pop %v917
    %920 = vrot.lane.b32.xlu0 %v918, 32
    %v921 = vpop.permute.xlu0 %920
    %v923 = vmul.f32 %v905, %v921
    %924 = vmatprep.subr.mxu0 0.0
    %925 = vmatpush1.msra.mxu0 %v186
    %926 = vmatprep.subr.mxu0 0.0
    %927 = vmatpush1.msra.mxu0 %v187
    %928 = vmatprep.subr.mxu0 0.0
    %929 = vmatpush1.msra.mxu0 %v188
    %930 = vmatprep.subr.mxu0 0.0
    %931 = vmatpush1.msra.mxu0 %v189
    %932 = vmatprep.subr.mxu0 0.0
    %933 = vmatpush1.msra.mxu0 0.0
    %934 = vmatprep.subr.mxu0 0.0
    %935 = vmatpush1.msra.mxu0 0.0
    %936 = vmatprep.subr.mxu0 0.0
    %937 = vmatpush1.msra.mxu0 0.0
    %938 = vmatprep.subr.mxu0 0.0
    %939 = vmatpush1.msra.mxu0 0.0
    %940 = vmatprep.subr.mxu0 0.0
    %941 = vmatpush1.msra.mxu0 0.0
    %942 = vmatprep.subr.mxu0 0.0
    %943 = vmatpush1.msra.mxu0 0.0
    %944 = vmatprep.subr.mxu0 0.0
    %945 = vmatpush1.msra.mxu0 0.0
    %946 = vmatprep.subr.mxu0 0.0
    %947 = vmatpush1.msra.mxu0 0.0
    %948 = vmatprep.subr.mxu0 0.0
    %949 = vmatpush1.msra.mxu0 0.0
    %950 = vmatprep.subr.mxu0 0.0
    %951 = vmatpush1.msra.mxu0 0.0
    %952 = vmatprep.subr.mxu0 0.0
    %953 = vmatpush1.msra.mxu0 0.0
    %954 = vmatprep.subr.mxu0 0.0
    %955 = vmatpush1.msra.mxu0 0.0
    %956 = vmatprep.subr.mxu0 0.0
    %957 = vmatpush1.msra.mxu0 0.0
    %958 = vmatprep.subr.mxu0 0.0
    %959 = vmatpush1.msra.mxu0 0.0
    %960 = vmatprep.subr.mxu0 0.0
    %961 = vmatpush1.msra.mxu0 0.0
    %962 = vmatprep.subr.mxu0 0.0
    %963 = vmatpush1.msra.mxu0 0.0
    %964 = vmatprep.subr.mxu0 0.0
    %965 = vmatpush1.msra.mxu0 0.0
    %966 = vmatprep.subr.mxu0 0.0
    %967 = vmatpush1.msra.mxu0 0.0
    %968 = vmatprep.subr.mxu0 0.0
    %969 = vmatpush1.msra.mxu0 0.0
    %970 = vmatprep.subr.mxu0 0.0
    %971 = vmatpush1.msra.mxu0 0.0
    %972 = vmatprep.subr.mxu0 0.0
    %973 = vmatpush1.msra.mxu0 0.0
    %974 = vmatprep.subr.mxu0 0.0
    %975 = vmatpush1.msra.mxu0 0.0
    %976 = vmatprep.subr.mxu0 0.0
    %977 = vmatpush1.msra.mxu0 0.0
    %978 = vmatprep.subr.mxu0 0.0
    %979 = vmatpush1.msra.mxu0 0.0
    %980 = vmatprep.subr.mxu0 0.0
    %981 = vmatpush1.msra.mxu0 0.0
    %982 = vmatprep.subr.mxu0 0.0
    %983 = vmatpush1.msra.mxu0 0.0
    %984 = vmatprep.subr.mxu0 0.0
    %985 = vmatpush1.msra.mxu0 0.0
    %986 = vmatprep.subr.mxu0 0.0
    %987 = vmatpush1.msra.mxu0 0.0
    %988 = vmatprep.mubr.f32.mxu0 0.0
    %989 = vmatmul.mubr.f32.gmra.mrb[0].mxu0 %v758
    %v990 = vpop.f32.mrb[0].mxu0
    %v991 = vadd.f32 %v158, %v990
    %v992 = vpop.f32.mrb[0].mxu0
    %993 = vdwg.mxu0
    %v994 = vxor.u32 %v991, 2147483648
    %v995 = vmul.f32 %v994, 1.442695
    %v996 = vpow.pop %v995
    %v997 = vadd.f32 %v996, 1.0
    %v998 = vrcp.pop %v997
    %v999 = vmul.f32 1.0, %v998
    %v1000 = vtanh.pop %v991
    %v1001 = vmul.f32 %v999, %v561
    %1003 = vrot.lane.b32.xlu0 %v1000, 32
    %v1004 = vpop.permute.xlu0 %1003
    %v1006 = vmul.f32 %v999, %v1004
    %1008 = vrot.lane.b32.xlu0 %v1006, 32
    %v1009 = vpop.permute.xlu0 %1008
    %v1011 = vadd.f32 %v1001, %v1009
    %v1012 = vtanh.pop %v1011
    %1014 = vrot.lane.b32.xlu0 %v1012, 32
    %v1015 = vpop.permute.xlu0 %1014
    %v1017 = vmul.f32 %v999, %v1015
    %1019 = vrot.lane.b32.xlu0 %v923, 64
    %v1020 = vpop.permute.xlu0 %1019
    %v1021 = vsel %vm56, %v1020, 0
    %1023 = vmatprep.subr.mxu0 0.0
    %1024 = vmatpush1.msra.mxu0 %v569
    %1025 = vmatprep.subr.mxu0 0.0
    %1026 = vmatpush1.msra.mxu0 %v570
    %1027 = vmatprep.subr.mxu0 0.0
    %1028 = vmatpush1.msra.mxu0 %v571
    %1029 = vmatprep.subr.mxu0 0.0
    %1030 = vmatpush1.msra.mxu0 %v572
    %1031 = vmatprep.subr.mxu0 0.0
    %1032 = vmatpush1.msra.mxu0 0.0
    %1033 = vmatprep.subr.mxu0 0.0
    %1034 = vmatpush1.msra.mxu0 0.0
    %1035 = vmatprep.subr.mxu0 0.0
    %1036 = vmatpush1.msra.mxu0 0.0
    %1037 = vmatprep.subr.mxu0 0.0
    %1038 = vmatpush1.msra.mxu0 0.0
    %1039 = vmatprep.subr.mxu0 0.0
    %1040 = vmatpush1.msra.mxu0 0.0
    %1041 = vmatprep.subr.mxu0 0.0
    %1042 = vmatpush1.msra.mxu0 0.0
    %1043 = vmatprep.subr.mxu0 0.0
    %1044 = vmatpush1.msra.mxu0 0.0
    %1045 = vmatprep.subr.mxu0 0.0
    %1046 = vmatpush1.msra.mxu0 0.0
    %1047 = vmatprep.subr.mxu0 0.0
    %1048 = vmatpush1.msra.mxu0 0.0
    %1049 = vmatprep.subr.mxu0 0.0
    %1050 = vmatpush1.msra.mxu0 0.0
    %1051 = vmatprep.subr.mxu0 0.0
    %1052 = vmatpush1.msra.mxu0 0.0
    %1053 = vmatprep.subr.mxu0 0.0
    %1054 = vmatpush1.msra.mxu0 0.0
    %1055 = vmatprep.subr.mxu0 0.0
    %1056 = vmatpush1.msra.mxu0 0.0
    %1057 = vmatprep.subr.mxu0 0.0
    %1058 = vmatpush1.msra.mxu0 0.0
    %1059 = vmatprep.subr.mxu0 0.0
    %1060 = vmatpush1.msra.mxu0 0.0
    %1061 = vmatprep.subr.mxu0 0.0
    %1062 = vmatpush1.msra.mxu0 0.0
    %1063 = vmatprep.subr.mxu0 0.0
    %1064 = vmatpush1.msra.mxu0 0.0
    %1065 = vmatprep.subr.mxu0 0.0
    %1066 = vmatpush1.msra.mxu0 0.0
    %1067 = vmatprep.subr.mxu0 0.0
    %1068 = vmatpush1.msra.mxu0 0.0
    %1069 = vmatprep.subr.mxu0 0.0
    %1070 = vmatpush1.msra.mxu0 0.0
    %1071 = vmatprep.subr.mxu0 0.0
    %1072 = vmatpush1.msra.mxu0 0.0
    %1073 = vmatprep.subr.mxu0 0.0
    %1074 = vmatpush1.msra.mxu0 0.0
    %1075 = vmatprep.subr.mxu0 0.0
    %1076 = vmatpush1.msra.mxu0 0.0
    %1077 = vmatprep.subr.mxu0 0.0
    %1078 = vmatpush1.msra.mxu0 0.0
    %1079 = vmatprep.subr.mxu0 0.0
    %1080 = vmatpush1.msra.mxu0 0.0
    %1081 = vmatprep.subr.mxu0 0.0
    %1082 = vmatpush1.msra.mxu0 0.0
    %1083 = vmatprep.subr.mxu0 0.0
    %1084 = vmatpush1.msra.mxu0 0.0
    %1085 = vmatprep.subr.mxu0 0.0
    %1086 = vmatpush1.msra.mxu0 0.0
    %1087 = vmatprep.mubr.f32.mxu0 0.0
    %1088 = vmatmul.mubr.f32.gmra.mrb[0].mxu0 %v1021
    %v1089 = vpop.f32.mrb[0].mxu0
    %v1090 = vadd.f32 %v579, %v1089
    %v1091 = vpop.f32.mrb[0].mxu0
    %1092 = vdwg.mxu0
    %1094 = vrot.lane.b32.xlu0 %v754, 64
    %v1095 = vpop.permute.xlu0 %1094
    %v1096 = vsel %vm56, %v1095, 0
    %1098 = vmatprep.subr.mxu0 0.0
    %1099 = vmatpush1.msra.mxu0 %v657
    %1100 = vmatprep.subr.mxu0 0.0
    %1101 = vmatpush1.msra.mxu0 %v658
    %1102 = vmatprep.subr.mxu0 0.0
    %1103 = vmatpush1.msra.mxu0 %v659
    %1104 = vmatprep.subr.mxu0 0.0
    %1105 = vmatpush1.msra.mxu0 %v660
    %1106 = vmatprep.subr.mxu0 0.0
    %1107 = vmatpush1.msra.mxu0 0.0
    %1108 = vmatprep.subr.mxu0 0.0
    %1109 = vmatpush1.msra.mxu0 0.0
    %1110 = vmatprep.subr.mxu0 0.0
    %1111 = vmatpush1.msra.mxu0 0.0
    %1112 = vmatprep.subr.mxu0 0.0
    %1113 = vmatpush1.msra.mxu0 0.0
    %1114 = vmatprep.subr.mxu0 0.0
    %1115 = vmatpush1.msra.mxu0 0.0
    %1116 = vmatprep.subr.mxu0 0.0
    %1117 = vmatpush1.msra.mxu0 0.0
    %1118 = vmatprep.subr.mxu0 0.0
    %1119 = vmatpush1.msra.mxu0 0.0
    %1120 = vmatprep.subr.mxu0 0.0
    %1121 = vmatpush1.msra.mxu0 0.0
    %1122 = vmatprep.subr.mxu0 0.0
    %1123 = vmatpush1.msra.mxu0 0.0
    %1124 = vmatprep.subr.mxu0 0.0
    %1125 = vmatpush1.msra.mxu0 0.0
    %1126 = vmatprep.subr.mxu0 0.0
    %1127 = vmatpush1.msra.mxu0 0.0
    %1128 = vmatprep.subr.mxu0 0.0
    %1129 = vmatpush1.msra.mxu0 0.0
    %1130 = vmatprep.subr.mxu0 0.0
    %1131 = vmatpush1.msra.mxu0 0.0
    %1132 = vmatprep.subr.mxu0 0.0
    %1133 = vmatpush1.msra.mxu0 0.0
    %1134 = vmatprep.subr.mxu0 0.0
    %1135 = vmatpush1.msra.mxu0 0.0
    %1136 = vmatprep.subr.mxu0 0.0
    %1137 = vmatpush1.msra.mxu0 0.0
    %1138 = vmatprep.subr.mxu0 0.0
    %1139 = vmatpush1.msra.mxu0 0.0
    %1140 = vmatprep.subr.mxu0 0.0
    %1141 = vmatpush1.msra.mxu0 0.0
    %1142 = vmatprep.subr.mxu0 0.0
    %1143 = vmatpush1.msra.mxu0 0.0
    %1144 = vmatprep.subr.mxu0 0.0
    %1145 = vmatpush1.msra.mxu0 0.0
    %1146 = vmatprep.subr.mxu0 0.0
    %1147 = vmatpush1.msra.mxu0 0.0
    %1148 = vmatprep.subr.mxu0 0.0
    %1149 = vmatpush1.msra.mxu0 0.0
    %1150 = vmatprep.subr.mxu0 0.0
    %1151 = vmatpush1.msra.mxu0 0.0
    %1152 = vmatprep.subr.mxu0 0.0
    %1153 = vmatpush1.msra.mxu0 0.0
    %1154 = vmatprep.subr.mxu0 0.0
    %1155 = vmatpush1.msra.mxu0 0.0
    %1156 = vmatprep.subr.mxu0 0.0
    %1157 = vmatpush1.msra.mxu0 0.0
    %1158 = vmatprep.subr.mxu0 0.0
    %1159 = vmatpush1.msra.mxu0 0.0
    %1160 = vmatprep.subr.mxu0 0.0
    %1161 = vmatpush1.msra.mxu0 0.0
    %1162 = vmatprep.mubr.f32.mxu0 0.0
    %1163 = vmatmul.mubr.f32.gmra.mrb[0].mxu0 %v1096
    %v1164 = vpop.f32.mrb[0].mxu0
    %v1165 = vadd.f32 %v1090, %v1164
    %v1166 = vpop.f32.mrb[0].mxu0
    %1167 = vdwg.mxu0
    %v1168 = vxor.u32 %v1165, 2147483648
    %v1169 = vmul.f32 %v1168, 1.442695
    %v1170 = vpow.pop %v1169
    %v1171 = vadd.f32 %v1170, 1.0
    %v1172 = vrcp.pop %v1171
    %v1173 = vmul.f32 1.0, %v1172
    %v1174 = vtanh.pop %v1165
    %v1175 = vmul.f32 %v1173, %v748
    %1177 = vrot.lane.b32.xlu0 %v1174, 32
    %v1178 = vpop.permute.xlu0 %1177
    %v1180 = vmul.f32 %v1173, %v1178
    %1182 = vrot.lane.b32.xlu0 %v1180, 32
    %v1183 = vpop.permute.xlu0 %1182
    %v1185 = vadd.f32 %v1175, %v1183
    %v1186 = vtanh.pop %v1185
    %1188 = vrot.lane.b32.xlu0 %v1186, 32
    %v1189 = vpop.permute.xlu0 %1188
    %v1191 = vmul.f32 %v1173, %v1189
    %1193 = vrot.lane.b32.xlu0 %v1017, 64
    %v1194 = vpop.permute.xlu0 %1193
    %v1195 = vsel %vm56, %v1194, 0
    %1197 = vmatprep.subr.mxu0 0.0
    %1198 = vmatpush1.msra.mxu0 %v288
    %1199 = vmatprep.subr.mxu0 0.0
    %1200 = vmatpush1.msra.mxu0 %v289
    %1201 = vmatprep.subr.mxu0 0.0
    %1202 = vmatpush1.msra.mxu0 %v290
    %1203 = vmatprep.subr.mxu0 0.0
    %1204 = vmatpush1.msra.mxu0 %v291
    %1205 = vmatprep.subr.mxu0 0.0
    %1206 = vmatpush1.msra.mxu0 0.0
    %1207 = vmatprep.subr.mxu0 0.0
    %1208 = vmatpush1.msra.mxu0 0.0
    %1209 = vmatprep.subr.mxu0 0.0
    %1210 = vmatpush1.msra.mxu0 0.0
    %1211 = vmatprep.subr.mxu0 0.0
    %1212 = vmatpush1.msra.mxu0 0.0
    %1213 = vmatprep.subr.mxu0 0.0
    %1214 = vmatpush1.msra.mxu0 0.0
    %1215 = vmatprep.subr.mxu0 0.0
    %1216 = vmatpush1.msra.mxu0 0.0
    %1217 = vmatprep.subr.mxu0 0.0
    %1218 = vmatpush1.msra.mxu0 0.0
    %1219 = vmatprep.subr.mxu0 0.0
    %1220 = vmatpush1.msra.mxu0 0.0
    %1221 = vmatprep.subr.mxu0 0.0
    %1222 = vmatpush1.msra.mxu0 0.0
    %1223 = vmatprep.subr.mxu0 0.0
    %1224 = vmatpush1.msra.mxu0 0.0
    %1225 = vmatprep.subr.mxu0 0.0
    %1226 = vmatpush1.msra.mxu0 0.0
    %1227 = vmatprep.subr.mxu0 0.0
    %1228 = vmatpush1.msra.mxu0 0.0
    %1229 = vmatprep.subr.mxu0 0.0
    %1230 = vmatpush1.msra.mxu0 0.0
    %1231 = vmatprep.subr.mxu0 0.0
    %1232 = vmatpush1.msra.mxu0 0.0
    %1233 = vmatprep.subr.mxu0 0.0
    %1234 = vmatpush1.msra.mxu0 0.0
    %1235 = vmatprep.subr.mxu0 0.0
    %1236 = vmatpush1.msra.mxu0 0.0
    %1237 = vmatprep.subr.mxu0 0.0
    %1238 = vmatpush1.msra.mxu0 0.0
    %1239 = vmatprep.subr.mxu0 0.0
    %1240 = vmatpush1.msra.mxu0 0.0
    %1241 = vmatprep.subr.mxu0 0.0
    %1242 = vmatpush1.msra.mxu0 0.0
    %1243 = vmatprep.subr.mxu0 0.0
    %1244 = vmatpush1.msra.mxu0 0.0
    %1245 = vmatprep.subr.mxu0 0.0
    %1246 = vmatpush1.msra.mxu0 0.0
    %1247 = vmatprep.subr.mxu0 0.0
    %1248 = vmatpush1.msra.mxu0 0.0
    %1249 = vmatprep.subr.mxu0 0.0
    %1250 = vmatpush1.msra.mxu0 0.0
    %1251 = vmatprep.subr.mxu0 0.0
    %1252 = vmatpush1.msra.mxu0 0.0
    %1253 = vmatprep.subr.mxu0 0.0
    %1254 = vmatpush1.msra.mxu0 0.0
    %1255 = vmatprep.subr.mxu0 0.0
    %1256 = vmatpush1.msra.mxu0 0.0
    %1257 = vmatprep.subr.mxu0 0.0
    %1258 = vmatpush1.msra.mxu0 0.0
    %1259 = vmatprep.subr.mxu0 0.0
    %1260 = vmatpush1.msra.mxu0 0.0
    %1261 = vmatprep.mubr.f32.mxu0 0.0
    %1262 = vmatmul.mubr.f32.gmra.mrb[0].mxu0 %v1195
    %v1263 = vpop.f32.mrb[0].mxu0
    %v1264 = vadd.f32 %v298, %v1263
    %v1265 = vpop.f32.mrb[0].mxu0
    %1266 = vdwg.mxu0
    %1267 = vmatprep.subr.mxu0 0.0
    %1268 = vmatpush1.msra.mxu0 %v376
    %1269 = vmatprep.subr.mxu0 0.0
    %1270 = vmatpush1.msra.mxu0 %v377
    %1271 = vmatprep.subr.mxu0 0.0
    %1272 = vmatpush1.msra.mxu0 %v378
    %1273 = vmatprep.subr.mxu0 0.0
    %1274 = vmatpush1.msra.mxu0 %v379
    %1275 = vmatprep.subr.mxu0 0.0
    %1276 = vmatpush1.msra.mxu0 0.0
    %1277 = vmatprep.subr.mxu0 0.0
    %1278 = vmatpush1.msra.mxu0 0.0
    %1279 = vmatprep.subr.mxu0 0.0
    %1280 = vmatpush1.msra.mxu0 0.0
    %1281 = vmatprep.subr.mxu0 0.0
    %1282 = vmatpush1.msra.mxu0 0.0
    %1283 = vmatprep.subr.mxu0 0.0
    %1284 = vmatpush1.msra.mxu0 0.0
    %1285 = vmatprep.subr.mxu0 0.0
    %1286 = vmatpush1.msra.mxu0 0.0
    %1287 = vmatprep.subr.mxu0 0.0
    %1288 = vmatpush1.msra.mxu0 0.0
    %1289 = vmatprep.subr.mxu0 0.0
    %1290 = vmatpush1.msra.mxu0 0.0
    %1291 = vmatprep.subr.mxu0 0.0
    %1292 = vmatpush1.msra.mxu0 0.0
    %1293 = vmatprep.subr.mxu0 0.0
    %1294 = vmatpush1.msra.mxu0 0.0
    %1295 = vmatprep.subr.mxu0 0.0
    %1296 = vmatpush1.msra.mxu0 0.0
    %1297 = vmatprep.subr.mxu0 0.0
    %1298 = vmatpush1.msra.mxu0 0.0
    %1299 = vmatprep.subr.mxu0 0.0
    %1300 = vmatpush1.msra.mxu0 0.0
    %1301 = vmatprep.subr.mxu0 0.0
    %1302 = vmatpush1.msra.mxu0 0.0
    %1303 = vmatprep.subr.mxu0 0.0
    %1304 = vmatpush1.msra.mxu0 0.0
    %1305 = vmatprep.subr.mxu0 0.0
    %1306 = vmatpush1.msra.mxu0 0.0
    %1307 = vmatprep.subr.mxu0 0.0
    %1308 = vmatpush1.msra.mxu0 0.0
    %1309 = vmatprep.subr.mxu0 0.0
    %1310 = vmatpush1.msra.mxu0 0.0
    %1311 = vmatprep.subr.mxu0 0.0
    %1312 = vmatpush1.msra.mxu0 0.0
    %1313 = vmatprep.subr.mxu0 0.0
    %1314 = vmatpush1.msra.mxu0 0.0
    %1315 = vmatprep.subr.mxu0 0.0
    %1316 = vmatpush1.msra.mxu0 0.0
    %1317 = vmatprep.subr.mxu0 0.0
    %1318 = vmatpush1.msra.mxu0 0.0
    %1319 = vmatprep.subr.mxu0 0.0
    %1320 = vmatpush1.msra.mxu0 0.0
    %1321 = vmatprep.subr.mxu0 0.0
    %1322 = vmatpush1.msra.mxu0 0.0
    %1323 = vmatprep.subr.mxu0 0.0
    %1324 = vmatpush1.msra.mxu0 0.0
    %1325 = vmatprep.subr.mxu0 0.0
    %1326 = vmatpush1.msra.mxu0 0.0
    %1327 = vmatprep.subr.mxu0 0.0
    %1328 = vmatpush1.msra.mxu0 0.0
    %1329 = vmatprep.subr.mxu0 0.0
    %1330 = vmatpush1.msra.mxu0 0.0
    %1331 = vmatprep.mubr.f32.mxu0 0.0
    %1332 = vmatmul.mubr.f32.gmra.mrb[0].mxu0 %v1021
    %v1333 = vpop.f32.mrb[0].mxu0
    %v1334 = vadd.f32 %v1264, %v1333
    %v1335 = vpop.f32.mrb[0].mxu0
    %1336 = vdwg.mxu0
    %v1337 = vxor.u32 %v1334, 2147483648
    %v1338 = vmul.f32 %v1337, 1.442695
    %v1339 = vpow.pop %v1338
    %v1340 = vadd.f32 %v1339, 1.0
    %v1341 = vrcp.pop %v1340
    %v1342 = vmul.f32 1.0, %v1341
    %v1343 = vtanh.pop %v1334
    %v1344 = vmul.f32 %v1342, %v917
    %1346 = vrot.lane.b32.xlu0 %v1343, 32
    %v1347 = vpop.permute.xlu0 %1346
    %v1349 = vmul.f32 %v1342, %v1347
    %1351 = vrot.lane.b32.xlu0 %v1349, 32
    %v1352 = vpop.permute.xlu0 %1351
    %v1354 = vadd.f32 %v1344, %v1352
    %v1355 = vtanh.pop %v1354
    %1357 = vrot.lane.b32.xlu0 %v1355, 32
    %v1358 = vpop.permute.xlu0 %1357
    %v1360 = vmul.f32 %v1342, %v1358
    %1361 = vmatprep.subr.mxu0 0.0
    %1362 = vmatpush1.msra.mxu0 %v186
    %1363 = vmatprep.subr.mxu0 0.0
    %1364 = vmatpush1.msra.mxu0 %v187
    %1365 = vmatprep.subr.mxu0 0.0
    %1366 = vmatpush1.msra.mxu0 %v188
    %1367 = vmatprep.subr.mxu0 0.0
    %1368 = vmatpush1.msra.mxu0 %v189
    %1369 = vmatprep.subr.mxu0 0.0
    %1370 = vmatpush1.msra.mxu0 0.0
    %1371 = vmatprep.subr.mxu0 0.0
    %1372 = vmatpush1.msra.mxu0 0.0
    %1373 = vmatprep.subr.mxu0 0.0
    %1374 = vmatpush1.msra.mxu0 0.0
    %1375 = vmatprep.subr.mxu0 0.0
    %1376 = vmatpush1.msra.mxu0 0.0
    %1377 = vmatprep.subr.mxu0 0.0
    %1378 = vmatpush1.msra.mxu0 0.0
    %1379 = vmatprep.subr.mxu0 0.0
    %1380 = vmatpush1.msra.mxu0 0.0
    %1381 = vmatprep.subr.mxu0 0.0
    %1382 = vmatpush1.msra.mxu0 0.0
    %1383 = vmatprep.subr.mxu0 0.0
    %1384 = vmatpush1.msra.mxu0 0.0
    %1385 = vmatprep.subr.mxu0 0.0
    %1386 = vmatpush1.msra.mxu0 0.0
    %1387 = vmatprep.subr.mxu0 0.0
    %1388 = vmatpush1.msra.mxu0 0.0
    %1389 = vmatprep.subr.mxu0 0.0
    %1390 = vmatpush1.msra.mxu0 0.0
    %1391 = vmatprep.subr.mxu0 0.0
    %1392 = vmatpush1.msra.mxu0 0.0
    %1393 = vmatprep.subr.mxu0 0.0
    %1394 = vmatpush1.msra.mxu0 0.0
    %1395 = vmatprep.subr.mxu0 0.0
    %1396 = vmatpush1.msra.mxu0 0.0
    %1397 = vmatprep.subr.mxu0 0.0
    %1398 = vmatpush1.msra.mxu0 0.0
    %1399 = vmatprep.subr.mxu0 0.0
    %1400 = vmatpush1.msra.mxu0 0.0
    %1401 = vmatprep.subr.mxu0 0.0
    %1402 = vmatpush1.msra.mxu0 0.0
    %1403 = vmatprep.subr.mxu0 0.0
    %1404 = vmatpush1.msra.mxu0 0.0
    %1405 = vmatprep.subr.mxu0 0.0
    %1406 = vmatpush1.msra.mxu0 0.0
    %1407 = vmatprep.subr.mxu0 0.0
    %1408 = vmatpush1.msra.mxu0 0.0
    %1409 = vmatprep.subr.mxu0 0.0
    %1410 = vmatpush1.msra.mxu0 0.0
    %1411 = vmatprep.subr.mxu0 0.0
    %1412 = vmatpush1.msra.mxu0 0.0
    %1413 = vmatprep.subr.mxu0 0.0
    %1414 = vmatpush1.msra.mxu0 0.0
    %1415 = vmatprep.subr.mxu0 0.0
    %1416 = vmatpush1.msra.mxu0 0.0
    %1417 = vmatprep.subr.mxu0 0.0
    %1418 = vmatpush1.msra.mxu0 0.0
    %1419 = vmatprep.subr.mxu0 0.0
    %1420 = vmatpush1.msra.mxu0 0.0
    %1421 = vmatprep.subr.mxu0 0.0
    %1422 = vmatpush1.msra.mxu0 0.0
    %1423 = vmatprep.subr.mxu0 0.0
    %1424 = vmatpush1.msra.mxu0 0.0
    %1425 = vmatprep.mubr.f32.mxu0 0.0
    %1426 = vmatmul.mubr.f32.gmra.mrb[0].mxu0 %v1195
    %v1427 = vpop.f32.mrb[0].mxu0
    %v1428 = vadd.f32 %v163, %v1427
    %v1429 = vpop.f32.mrb[0].mxu0
    %1430 = vdwg.mxu0
    %v1431 = vxor.u32 %v1428, 2147483648
    %v1432 = vmul.f32 %v1431, 1.442695
    %v1433 = vpow.pop %v1432
    %v1434 = vadd.f32 %v1433, 1.0
    %v1435 = vrcp.pop %v1434
    %v1436 = vmul.f32 1.0, %v1435
    %v1437 = vtanh.pop %v1428
    %v1438 = vmul.f32 %v1436, %v1011
    %1440 = vrot.lane.b32.xlu0 %v1437, 32
    %v1441 = vpop.permute.xlu0 %1440
    %v1443 = vmul.f32 %v1436, %v1441
    %1445 = vrot.lane.b32.xlu0 %v1443, 32
    %v1446 = vpop.permute.xlu0 %1445
    %v1448 = vadd.f32 %v1438, %v1446
    %v1449 = vtanh.pop %v1448
    %1451 = vrot.lane.b32.xlu0 %v1449, 32
    %v1452 = vpop.permute.xlu0 %1451
    %v1454 = vmul.f32 %v1436, %v1452
    %1456 = vrot.lane.b32.xlu0 %v1360, 64
    %v1457 = vpop.permute.xlu0 %1456
    %v1458 = vsel %vm56, %v1457, 0
    %1460 = vmatprep.subr.mxu0 0.0
    %1461 = vmatpush1.msra.mxu0 %v569
    %1462 = vmatprep.subr.mxu0 0.0
    %1463 = vmatpush1.msra.mxu0 %v570
    %1464 = vmatprep.subr.mxu0 0.0
    %1465 = vmatpush1.msra.mxu0 %v571
    %1466 = vmatprep.subr.mxu0 0.0
    %1467 = vmatpush1.msra.mxu0 %v572
    %1468 = vmatprep.subr.mxu0 0.0
    %1469 = vmatpush1.msra.mxu0 0.0
    %1470 = vmatprep.subr.mxu0 0.0
    %1471 = vmatpush1.msra.mxu0 0.0
    %1472 = vmatprep.subr.mxu0 0.0
    %1473 = vmatpush1.msra.mxu0 0.0
    %1474 = vmatprep.subr.mxu0 0.0
    %1475 = vmatpush1.msra.mxu0 0.0
    %1476 = vmatprep.subr.mxu0 0.0
    %1477 = vmatpush1.msra.mxu0 0.0
    %1478 = vmatprep.subr.mxu0 0.0
    %1479 = vmatpush1.msra.mxu0 0.0
    %1480 = vmatprep.subr.mxu0 0.0
    %1481 = vmatpush1.msra.mxu0 0.0
    %1482 = vmatprep.subr.mxu0 0.0
    %1483 = vmatpush1.msra.mxu0 0.0
    %1484 = vmatprep.subr.mxu0 0.0
    %1485 = vmatpush1.msra.mxu0 0.0
    %1486 = vmatprep.subr.mxu0 0.0
    %1487 = vmatpush1.msra.mxu0 0.0
    %1488 = vmatprep.subr.mxu0 0.0
    %1489 = vmatpush1.msra.mxu0 0.0
    %1490 = vmatprep.subr.mxu0 0.0
    %1491 = vmatpush1.msra.mxu0 0.0
    %1492 = vmatprep.subr.mxu0 0.0
    %1493 = vmatpush1.msra.mxu0 0.0
    %1494 = vmatprep.subr.mxu0 0.0
    %1495 = vmatpush1.msra.mxu0 0.0
    %1496 = vmatprep.subr.mxu0 0.0
    %1497 = vmatpush1.msra.mxu0 0.0
    %1498 = vmatprep.subr.mxu0 0.0
    %1499 = vmatpush1.msra.mxu0 0.0
    %1500 = vmatprep.subr.mxu0 0.0
    %1501 = vmatpush1.msra.mxu0 0.0
    %1502 = vmatprep.subr.mxu0 0.0
    %1503 = vmatpush1.msra.mxu0 0.0
    %1504 = vmatprep.subr.mxu0 0.0
    %1505 = vmatpush1.msra.mxu0 0.0
    %1506 = vmatprep.subr.mxu0 0.0
    %1507 = vmatpush1.msra.mxu0 0.0
    %1508 = vmatprep.subr.mxu0 0.0
    %1509 = vmatpush1.msra.mxu0 0.0
    %1510 = vmatprep.subr.mxu0 0.0
    %1511 = vmatpush1.msra.mxu0 0.0
    %1512 = vmatprep.subr.mxu0 0.0
    %1513 = vmatpush1.msra.mxu0 0.0
    %1514 = vmatprep.subr.mxu0 0.0
    %1515 = vmatpush1.msra.mxu0 0.0
    %1516 = vmatprep.subr.mxu0 0.0
    %1517 = vmatpush1.msra.mxu0 0.0
    %1518 = vmatprep.subr.mxu0 0.0
    %1519 = vmatpush1.msra.mxu0 0.0
    %1520 = vmatprep.subr.mxu0 0.0
    %1521 = vmatpush1.msra.mxu0 0.0
    %1522 = vmatprep.subr.mxu0 0.0
    %1523 = vmatpush1.msra.mxu0 0.0
    %1524 = vmatprep.mubr.f32.mxu0 0.0
    %1525 = vmatmul.mubr.f32.gmra.mrb[0].mxu0 %v1458
    %v1526 = vpop.f32.mrb[0].mxu0
    %v1527 = vadd.f32 %v579, %v1526
    %v1528 = vpop.f32.mrb[0].mxu0
    %1529 = vdwg.mxu0
    %1531 = vrot.lane.b32.xlu0 %v1191, 64
    %v1532 = vpop.permute.xlu0 %1531
    %v1533 = vsel %vm56, %v1532, 0
    %1535 = vmatprep.subr.mxu0 0.0
    %1536 = vmatpush1.msra.mxu0 %v657
    %1537 = vmatprep.subr.mxu0 0.0
    %1538 = vmatpush1.msra.mxu0 %v658
    %1539 = vmatprep.subr.mxu0 0.0
    %1540 = vmatpush1.msra.mxu0 %v659
    %1541 = vmatprep.subr.mxu0 0.0
    %1542 = vmatpush1.msra.mxu0 %v660
    %1543 = vmatprep.subr.mxu0 0.0
    %1544 = vmatpush1.msra.mxu0 0.0
    %1545 = vmatprep.subr.mxu0 0.0
    %1546 = vmatpush1.msra.mxu0 0.0
    %1547 = vmatprep.subr.mxu0 0.0
    %1548 = vmatpush1.msra.mxu0 0.0
    %1549 = vmatprep.subr.mxu0 0.0
    %1550 = vmatpush1.msra.mxu0 0.0
    %1551 = vmatprep.subr.mxu0 0.0
    %1552 = vmatpush1.msra.mxu0 0.0
    %1553 = vmatprep.subr.mxu0 0.0
    %1554 = vmatpush1.msra.mxu0 0.0
    %1555 = vmatprep.subr.mxu0 0.0
    %1556 = vmatpush1.msra.mxu0 0.0
    %1557 = vmatprep.subr.mxu0 0.0
    %1558 = vmatpush1.msra.mxu0 0.0
    %1559 = vmatprep.subr.mxu0 0.0
    %1560 = vmatpush1.msra.mxu0 0.0
    %1561 = vmatprep.subr.mxu0 0.0
    %1562 = vmatpush1.msra.mxu0 0.0
    %1563 = vmatprep.subr.mxu0 0.0
    %1564 = vmatpush1.msra.mxu0 0.0
    %1565 = vmatprep.subr.mxu0 0.0
    %1566 = vmatpush1.msra.mxu0 0.0
    %1567 = vmatprep.subr.mxu0 0.0
    %1568 = vmatpush1.msra.mxu0 0.0
    %1569 = vmatprep.subr.mxu0 0.0
    %1570 = vmatpush1.msra.mxu0 0.0
    %1571 = vmatprep.subr.mxu0 0.0
    %1572 = vmatpush1.msra.mxu0 0.0
    %1573 = vmatprep.subr.mxu0 0.0
    %1574 = vmatpush1.msra.mxu0 0.0
    %1575 = vmatprep.subr.mxu0 0.0
    %1576 = vmatpush1.msra.mxu0 0.0
    %1577 = vmatprep.subr.mxu0 0.0
    %1578 = vmatpush1.msra.mxu0 0.0
    %1579 = vmatprep.subr.mxu0 0.0
    %1580 = vmatpush1.msra.mxu0 0.0
    %1581 = vmatprep.subr.mxu0 0.0
    %1582 = vmatpush1.msra.mxu0 0.0
    %1583 = vmatprep.subr.mxu0 0.0
    %1584 = vmatpush1.msra.mxu0 0.0
    %1585 = vmatprep.subr.mxu0 0.0
    %1586 = vmatpush1.msra.mxu0 0.0
    %1587 = vmatprep.subr.mxu0 0.0
    %1588 = vmatpush1.msra.mxu0 0.0
    %1589 = vmatprep.subr.mxu0 0.0
    %1590 = vmatpush1.msra.mxu0 0.0
    %1591 = vmatprep.subr.mxu0 0.0
    %1592 = vmatpush1.msra.mxu0 0.0
    %1593 = vmatprep.subr.mxu0 0.0
    %1594 = vmatpush1.msra.mxu0 0.0
    %1595 = vmatprep.subr.mxu0 0.0
    %1596 = vmatpush1.msra.mxu0 0.0
    %1597 = vmatprep.subr.mxu0 0.0
    %1598 = vmatpush1.msra.mxu0 0.0
    %1599 = vmatprep.mubr.f32.mxu0 0.0
    %1600 = vmatmul.mubr.f32.gmra.mrb[0].mxu0 %v1533
    %v1601 = vpop.f32.mrb[0].mxu0
    %v1602 = vadd.f32 %v1527, %v1601
    %v1603 = vpop.f32.mrb[0].mxu0
    %1604 = vdwg.mxu0
    %v1605 = vxor.u32 %v1602, 2147483648
    %v1606 = vmul.f32 %v1605, 1.442695
    %v1607 = vpow.pop %v1606
    %v1608 = vadd.f32 %v1607, 1.0
    %v1609 = vrcp.pop %v1608
    %v1610 = vmul.f32 1.0, %v1609
    %v1611 = vtanh.pop %v1602
    %v1612 = vmul.f32 %v1610, %v1185
    %1614 = vrot.lane.b32.xlu0 %v1611, 32
    %v1615 = vpop.permute.xlu0 %1614
    %v1617 = vmul.f32 %v1610, %v1615
    %1619 = vrot.lane.b32.xlu0 %v1617, 32
    %v1620 = vpop.permute.xlu0 %1619
    %v1622 = vadd.f32 %v1612, %v1620
    %v1623 = vtanh.pop %v1622
    %1625 = vrot.lane.b32.xlu0 %v1623, 32
    %v1626 = vpop.permute.xlu0 %1625
    %v1628 = vmul.f32 %v1610, %v1626
    %1630 = vrot.lane.b32.xlu0 %v1454, 64
    %v1631 = vpop.permute.xlu0 %1630
    %v1632 = vsel %vm56, %v1631, 0
    %1634 = vmatprep.subr.mxu0 0.0
    %1635 = vmatpush1.msra.mxu0 %v288
    %1636 = vmatprep.subr.mxu0 0.0
    %1637 = vmatpush1.msra.mxu0 %v289
    %1638 = vmatprep.subr.mxu0 0.0
    %1639 = vmatpush1.msra.mxu0 %v290
    %1640 = vmatprep.subr.mxu0 0.0
    %1641 = vmatpush1.msra.mxu0 %v291
    %1642 = vmatprep.subr.mxu0 0.0
    %1643 = vmatpush1.msra.mxu0 0.0
    %1644 = vmatprep.subr.mxu0 0.0
    %1645 = vmatpush1.msra.mxu0 0.0
    %1646 = vmatprep.subr.mxu0 0.0
    %1647 = vmatpush1.msra.mxu0 0.0
    %1648 = vmatprep.subr.mxu0 0.0
    %1649 = vmatpush1.msra.mxu0 0.0
    %1650 = vmatprep.subr.mxu0 0.0
    %1651 = vmatpush1.msra.mxu0 0.0
    %1652 = vmatprep.subr.mxu0 0.0
    %1653 = vmatpush1.msra.mxu0 0.0
    %1654 = vmatprep.subr.mxu0 0.0
    %1655 = vmatpush1.msra.mxu0 0.0
    %1656 = vmatprep.subr.mxu0 0.0
    %1657 = vmatpush1.msra.mxu0 0.0
    %1658 = vmatprep.subr.mxu0 0.0
    %1659 = vmatpush1.msra.mxu0 0.0
    %1660 = vmatprep.subr.mxu0 0.0
    %1661 = vmatpush1.msra.mxu0 0.0
    %1662 = vmatprep.subr.mxu0 0.0
    %1663 = vmatpush1.msra.mxu0 0.0
    %1664 = vmatprep.subr.mxu0 0.0
    %1665 = vmatpush1.msra.mxu0 0.0
    %1666 = vmatprep.subr.mxu0 0.0
    %1667 = vmatpush1.msra.mxu0 0.0
    %1668 = vmatprep.subr.mxu0 0.0
    %1669 = vmatpush1.msra.mxu0 0.0
    %1670 = vmatprep.subr.mxu0 0.0
    %1671 = vmatpush1.msra.mxu0 0.0
    %1672 = vmatprep.subr.mxu0 0.0
    %1673 = vmatpush1.msra.mxu0 0.0
    %1674 = vmatprep.subr.mxu0 0.0
    %1675 = vmatpush1.msra.mxu0 0.0
    %1676 = vmatprep.subr.mxu0 0.0
    %1677 = vmatpush1.msra.mxu0 0.0
    %1678 = vmatprep.subr.mxu0 0.0
    %1679 = vmatpush1.msra.mxu0 0.0
    %1680 = vmatprep.subr.mxu0 0.0
    %1681 = vmatpush1.msra.mxu0 0.0
    %1682 = vmatprep.subr.mxu0 0.0
    %1683 = vmatpush1.msra.mxu0 0.0
    %1684 = vmatprep.subr.mxu0 0.0
    %1685 = vmatpush1.msra.mxu0 0.0
    %1686 = vmatprep.subr.mxu0 0.0
    %1687 = vmatpush1.msra.mxu0 0.0
    %1688 = vmatprep.subr.mxu0 0.0
    %1689 = vmatpush1.msra.mxu0 0.0
    %1690 = vmatprep.subr.mxu0 0.0
    %1691 = vmatpush1.msra.mxu0 0.0
    %1692 = vmatprep.subr.mxu0 0.0
    %1693 = vmatpush1.msra.mxu0 0.0
    %1694 = vmatprep.subr.mxu0 0.0
    %1695 = vmatpush1.msra.mxu0 0.0
    %1696 = vmatprep.subr.mxu0 0.0
    %1697 = vmatpush1.msra.mxu0 0.0
    %1698 = vmatprep.mubr.f32.mxu0 0.0
    %1699 = vmatmul.mubr.f32.gmra.mrb[0].mxu0 %v1632
    %v1700 = vpop.f32.mrb[0].mxu0
    %v1701 = vadd.f32 %v298, %v1700
    %v1702 = vpop.f32.mrb[0].mxu0
    %1703 = vdwg.mxu0
    %1704 = vmatprep.subr.mxu0 0.0
    %1705 = vmatpush1.msra.mxu0 %v376
    %1706 = vmatprep.subr.mxu0 0.0
    %1707 = vmatpush1.msra.mxu0 %v377
    %1708 = vmatprep.subr.mxu0 0.0
    %1709 = vmatpush1.msra.mxu0 %v378
    %1710 = vmatprep.subr.mxu0 0.0
    %1711 = vmatpush1.msra.mxu0 %v379
    %1712 = vmatprep.subr.mxu0 0.0
    %1713 = vmatpush1.msra.mxu0 0.0
    %1714 = vmatprep.subr.mxu0 0.0
    %1715 = vmatpush1.msra.mxu0 0.0
    %1716 = vmatprep.subr.mxu0 0.0
    %1717 = vmatpush1.msra.mxu0 0.0
    %1718 = vmatprep.subr.mxu0 0.0
    %1719 = vmatpush1.msra.mxu0 0.0
    %1720 = vmatprep.subr.mxu0 0.0
    %1721 = vmatpush1.msra.mxu0 0.0
    %1722 = vmatprep.subr.mxu0 0.0
    %1723 = vmatpush1.msra.mxu0 0.0
    %1724 = vmatprep.subr.mxu0 0.0
    %1725 = vmatpush1.msra.mxu0 0.0
    %1726 = vmatprep.subr.mxu0 0.0
    %1727 = vmatpush1.msra.mxu0 0.0
    %1728 = vmatprep.subr.mxu0 0.0
    %1729 = vmatpush1.msra.mxu0 0.0
    %1730 = vmatprep.subr.mxu0 0.0
    %1731 = vmatpush1.msra.mxu0 0.0
    %1732 = vmatprep.subr.mxu0 0.0
    %1733 = vmatpush1.msra.mxu0 0.0
    %1734 = vmatprep.subr.mxu0 0.0
    %1735 = vmatpush1.msra.mxu0 0.0
    %1736 = vmatprep.subr.mxu0 0.0
    %1737 = vmatpush1.msra.mxu0 0.0
    %1738 = vmatprep.subr.mxu0 0.0
    %1739 = vmatpush1.msra.mxu0 0.0
    %1740 = vmatprep.subr.mxu0 0.0
    %1741 = vmatpush1.msra.mxu0 0.0
    %1742 = vmatprep.subr.mxu0 0.0
    %1743 = vmatpush1.msra.mxu0 0.0
    %1744 = vmatprep.subr.mxu0 0.0
    %1745 = vmatpush1.msra.mxu0 0.0
    %1746 = vmatprep.subr.mxu0 0.0
    %1747 = vmatpush1.msra.mxu0 0.0
    %1748 = vmatprep.subr.mxu0 0.0
    %1749 = vmatpush1.msra.mxu0 0.0
    %1750 = vmatprep.subr.mxu0 0.0
    %1751 = vmatpush1.msra.mxu0 0.0
    %1752 = vmatprep.subr.mxu0 0.0
    %1753 = vmatpush1.msra.mxu0 0.0
    %1754 = vmatprep.subr.mxu0 0.0
    %1755 = vmatpush1.msra.mxu0 0.0
    %1756 = vmatprep.subr.mxu0 0.0
    %1757 = vmatpush1.msra.mxu0 0.0
    %1758 = vmatprep.subr.mxu0 0.0
    %1759 = vmatpush1.msra.mxu0 0.0
    %1760 = vmatprep.subr.mxu0 0.0
    %1761 = vmatpush1.msra.mxu0 0.0
    %1762 = vmatprep.subr.mxu0 0.0
    %1763 = vmatpush1.msra.mxu0 0.0
    %1764 = vmatprep.subr.mxu0 0.0
    %1765 = vmatpush1.msra.mxu0 0.0
    %1766 = vmatprep.subr.mxu0 0.0
    %1767 = vmatpush1.msra.mxu0 0.0
    %1768 = vmatprep.mubr.f32.mxu0 0.0
    %1769 = vmatmul.mubr.f32.gmra.mrb[0].mxu0 %v1458
    %v1770 = vpop.f32.mrb[0].mxu0
    %v1771 = vadd.f32 %v1701, %v1770
    %v1772 = vpop.f32.mrb[0].mxu0
    %1773 = vdwg.mxu0
    %v1774 = vxor.u32 %v1771, 2147483648
    %v1775 = vmul.f32 %v1774, 1.442695
    %v1776 = vpow.pop %v1775
    %v1777 = vadd.f32 %v1776, 1.0
    %v1778 = vrcp.pop %v1777
    %v1779 = vmul.f32 1.0, %v1778
    %v1780 = vtanh.pop %v1771
    %v1781 = vmul.f32 %v1779, %v1354
    %1783 = vrot.lane.b32.xlu0 %v1780, 32
    %v1784 = vpop.permute.xlu0 %1783
    %v1786 = vmul.f32 %v1779, %v1784
    %1788 = vrot.lane.b32.xlu0 %v1786, 32
    %v1789 = vpop.permute.xlu0 %1788
    %v1791 = vadd.f32 %v1781, %v1789
    %v1792 = vtanh.pop %v1791
    %1794 = vrot.lane.b32.xlu0 %v1792, 32
    %v1795 = vpop.permute.xlu0 %1794
    %v1797 = vmul.f32 %v1779, %v1795
    %1798 = vmatprep.subr.mxu0 0.0
    %1799 = vmatpush1.msra.mxu0 %v186
    %1800 = vmatprep.subr.mxu0 0.0
    %1801 = vmatpush1.msra.mxu0 %v187
    %1802 = vmatprep.subr.mxu0 0.0
    %1803 = vmatpush1.msra.mxu0 %v188
    %1804 = vmatprep.subr.mxu0 0.0
    %1805 = vmatpush1.msra.mxu0 %v189
    %1806 = vmatprep.subr.mxu0 0.0
    %1807 = vmatpush1.msra.mxu0 0.0
    %1808 = vmatprep.subr.mxu0 0.0
    %1809 = vmatpush1.msra.mxu0 0.0
    %1810 = vmatprep.subr.mxu0 0.0
    %1811 = vmatpush1.msra.mxu0 0.0
    %1812 = vmatprep.subr.mxu0 0.0
    %1813 = vmatpush1.msra.mxu0 0.0
    %1814 = vmatprep.subr.mxu0 0.0
    %1815 = vmatpush1.msra.mxu0 0.0
    %1816 = vmatprep.subr.mxu0 0.0
    %1817 = vmatpush1.msra.mxu0 0.0
    %1818 = vmatprep.subr.mxu0 0.0
    %1819 = vmatpush1.msra.mxu0 0.0
    %1820 = vmatprep.subr.mxu0 0.0
    %1821 = vmatpush1.msra.mxu0 0.0
    %1822 = vmatprep.subr.mxu0 0.0
    %1823 = vmatpush1.msra.mxu0 0.0
    %1824 = vmatprep.subr.mxu0 0.0
    %1825 = vmatpush1.msra.mxu0 0.0
    %1826 = vmatprep.subr.mxu0 0.0
    %1827 = vmatpush1.msra.mxu0 0.0
    %1828 = vmatprep.subr.mxu0 0.0
    %1829 = vmatpush1.msra.mxu0 0.0
    %1830 = vmatprep.subr.mxu0 0.0
    %1831 = vmatpush1.msra.mxu0 0.0
    %1832 = vmatprep.subr.mxu0 0.0
    %1833 = vmatpush1.msra.mxu0 0.0
    %1834 = vmatprep.subr.mxu0 0.0
    %1835 = vmatpush1.msra.mxu0 0.0
    %1836 = vmatprep.subr.mxu0 0.0
    %1837 = vmatpush1.msra.mxu0 0.0
    %1838 = vmatprep.subr.mxu0 0.0
    %1839 = vmatpush1.msra.mxu0 0.0
    %1840 = vmatprep.subr.mxu0 0.0
    %1841 = vmatpush1.msra.mxu0 0.0
    %1842 = vmatprep.subr.mxu0 0.0
    %1843 = vmatpush1.msra.mxu0 0.0
    %1844 = vmatprep.subr.mxu0 0.0
    %1845 = vmatpush1.msra.mxu0 0.0
    %1846 = vmatprep.subr.mxu0 0.0
    %1847 = vmatpush1.msra.mxu0 0.0
    %1848 = vmatprep.subr.mxu0 0.0
    %1849 = vmatpush1.msra.mxu0 0.0
    %1850 = vmatprep.subr.mxu0 0.0
    %1851 = vmatpush1.msra.mxu0 0.0
    %1852 = vmatprep.subr.mxu0 0.0
    %1853 = vmatpush1.msra.mxu0 0.0
    %1854 = vmatprep.subr.mxu0 0.0
    %1855 = vmatpush1.msra.mxu0 0.0
    %1856 = vmatprep.subr.mxu0 0.0
    %1857 = vmatpush1.msra.mxu0 0.0
    %1858 = vmatprep.subr.mxu0 0.0
    %1859 = vmatpush1.msra.mxu0 0.0
    %1860 = vmatprep.subr.mxu0 0.0
    %1861 = vmatpush1.msra.mxu0 0.0
    %1862 = vmatprep.mubr.f32.mxu0 0.0
    %1863 = vmatmul.mubr.f32.gmra.mrb[0].mxu0 %v1632
    %v1864 = vpop.f32.mrb[0].mxu0
    %v1865 = vadd.f32 %v168, %v1864
    %v1866 = vpop.f32.mrb[0].mxu0
    %1867 = vdwg.mxu0
    %v1868 = vxor.u32 %v1865, 2147483648
    %v1869 = vmul.f32 %v1868, 1.442695
    %v1870 = vpow.pop %v1869
    %v1871 = vadd.f32 %v1870, 1.0
    %v1872 = vrcp.pop %v1871
    %v1873 = vmul.f32 1.0, %v1872
    %v1874 = vtanh.pop %v1865
    %v1875 = vmul.f32 %v1873, %v1448
    %1877 = vrot.lane.b32.xlu0 %v1874, 32
    %v1878 = vpop.permute.xlu0 %1877
    %v1880 = vmul.f32 %v1873, %v1878
    %1882 = vrot.lane.b32.xlu0 %v1880, 32
    %v1883 = vpop.permute.xlu0 %1882
    %v1885 = vadd.f32 %v1875, %v1883
    %v1886 = vtanh.pop %v1885
    %1888 = vrot.lane.b32.xlu0 %v1886, 32
    %v1889 = vpop.permute.xlu0 %1888
    %v1891 = vmul.f32 %v1873, %v1889
    %1893 = vrot.lane.b32.xlu0 %v1797, 64
    %v1894 = vpop.permute.xlu0 %1893
    %v1895 = vsel %vm56, %v1894, 0
    %1897 = vmatprep.subr.mxu0 0.0
    %1898 = vmatpush1.msra.mxu0 %v569
    %1899 = vmatprep.subr.mxu0 0.0
    %1900 = vmatpush1.msra.mxu0 %v570
    %1901 = vmatprep.subr.mxu0 0.0
    %1902 = vmatpush1.msra.mxu0 %v571
    %1903 = vmatprep.subr.mxu0 0.0
    %1904 = vmatpush1.msra.mxu0 %v572
    %1905 = vmatprep.subr.mxu0 0.0
    %1906 = vmatpush1.msra.mxu0 0.0
    %1907 = vmatprep.subr.mxu0 0.0
    %1908 = vmatpush1.msra.mxu0 0.0
    %1909 = vmatprep.subr.mxu0 0.0
    %1910 = vmatpush1.msra.mxu0 0.0
    %1911 = vmatprep.subr.mxu0 0.0
    %1912 = vmatpush1.msra.mxu0 0.0
    %1913 = vmatprep.subr.mxu0 0.0
    %1914 = vmatpush1.msra.mxu0 0.0
    %1915 = vmatprep.subr.mxu0 0.0
    %1916 = vmatpush1.msra.mxu0 0.0
    %1917 = vmatprep.subr.mxu0 0.0
    %1918 = vmatpush1.msra.mxu0 0.0
    %1919 = vmatprep.subr.mxu0 0.0
    %1920 = vmatpush1.msra.mxu0 0.0
    %1921 = vmatprep.subr.mxu0 0.0
    %1922 = vmatpush1.msra.mxu0 0.0
    %1923 = vmatprep.subr.mxu0 0.0
    %1924 = vmatpush1.msra.mxu0 0.0
    %1925 = vmatprep.subr.mxu0 0.0
    %1926 = vmatpush1.msra.mxu0 0.0
    %1927 = vmatprep.subr.mxu0 0.0
    %1928 = vmatpush1.msra.mxu0 0.0
    %1929 = vmatprep.subr.mxu0 0.0
    %1930 = vmatpush1.msra.mxu0 0.0
    %1931 = vmatprep.subr.mxu0 0.0
    %1932 = vmatpush1.msra.mxu0 0.0
    %1933 = vmatprep.subr.mxu0 0.0
    %1934 = vmatpush1.msra.mxu0 0.0
    %1935 = vmatprep.subr.mxu0 0.0
    %1936 = vmatpush1.msra.mxu0 0.0
    %1937 = vmatprep.subr.mxu0 0.0
    %1938 = vmatpush1.msra.mxu0 0.0
    %1939 = vmatprep.subr.mxu0 0.0
    %1940 = vmatpush1.msra.mxu0 0.0
    %1941 = vmatprep.subr.mxu0 0.0
    %1942 = vmatpush1.msra.mxu0 0.0
    %1943 = vmatprep.subr.mxu0 0.0
    %1944 = vmatpush1.msra.mxu0 0.0
    %1945 = vmatprep.subr.mxu0 0.0
    %1946 = vmatpush1.msra.mxu0 0.0
    %1947 = vmatprep.subr.mxu0 0.0
    %1948 = vmatpush1.msra.mxu0 0.0
    %1949 = vmatprep.subr.mxu0 0.0
    %1950 = vmatpush1.msra.mxu0 0.0
    %1951 = vmatprep.subr.mxu0 0.0
    %1952 = vmatpush1.msra.mxu0 0.0
    %1953 = vmatprep.subr.mxu0 0.0
    %1954 = vmatpush1.msra.mxu0 0.0
    %1955 = vmatprep.subr.mxu0 0.0
    %1956 = vmatpush1.msra.mxu0 0.0
    %1957 = vmatprep.subr.mxu0 0.0
    %1958 = vmatpush1.msra.mxu0 0.0
    %1959 = vmatprep.subr.mxu0 0.0
    %1960 = vmatpush1.msra.mxu0 0.0
    %1961 = vmatprep.mubr.f32.mxu0 0.0
    %1962 = vmatmul.mubr.f32.gmra.mrb[0].mxu0 %v1895
    %v1963 = vpop.f32.mrb[0].mxu0
    %v1964 = vadd.f32 %v579, %v1963
    %v1965 = vpop.f32.mrb[0].mxu0
    %1966 = vdwg.mxu0
    %1968 = vrot.lane.b32.xlu0 %v1628, 64
    %v1969 = vpop.permute.xlu0 %1968
    %v1970 = vsel %vm56, %v1969, 0
    %1972 = vmatprep.subr.mxu0 0.0
    %1973 = vmatpush1.msra.mxu0 %v657
    %1974 = vmatprep.subr.mxu0 0.0
    %1975 = vmatpush1.msra.mxu0 %v658
    %1976 = vmatprep.subr.mxu0 0.0
    %1977 = vmatpush1.msra.mxu0 %v659
    %1978 = vmatprep.subr.mxu0 0.0
    %1979 = vmatpush1.msra.mxu0 %v660
    %1980 = vmatprep.subr.mxu0 0.0
    %1981 = vmatpush1.msra.mxu0 0.0
    %1982 = vmatprep.subr.mxu0 0.0
    %1983 = vmatpush1.msra.mxu0 0.0
    %1984 = vmatprep.subr.mxu0 0.0
    %1985 = vmatpush1.msra.mxu0 0.0
    %1986 = vmatprep.subr.mxu0 0.0
    %1987 = vmatpush1.msra.mxu0 0.0
    %1988 = vmatprep.subr.mxu0 0.0
    %1989 = vmatpush1.msra.mxu0 0.0
    %1990 = vmatprep.subr.mxu0 0.0
    %1991 = vmatpush1.msra.mxu0 0.0
    %1992 = vmatprep.subr.mxu0 0.0
    %1993 = vmatpush1.msra.mxu0 0.0
    %1994 = vmatprep.subr.mxu0 0.0
    %1995 = vmatpush1.msra.mxu0 0.0
    %1996 = vmatprep.subr.mxu0 0.0
    %1997 = vmatpush1.msra.mxu0 0.0
    %1998 = vmatprep.subr.mxu0 0.0
    %1999 = vmatpush1.msra.mxu0 0.0
    %2000 = vmatprep.subr.mxu0 0.0
    %2001 = vmatpush1.msra.mxu0 0.0
    %2002 = vmatprep.subr.mxu0 0.0
    %2003 = vmatpush1.msra.mxu0 0.0
    %2004 = vmatprep.subr.mxu0 0.0
    %2005 = vmatpush1.msra.mxu0 0.0
    %2006 = vmatprep.subr.mxu0 0.0
    %2007 = vmatpush1.msra.mxu0 0.0
    %2008 = vmatprep.subr.mxu0 0.0
    %2009 = vmatpush1.msra.mxu0 0.0
    %2010 = vmatprep.subr.mxu0 0.0
    %2011 = vmatpush1.msra.mxu0 0.0
    %2012 = vmatprep.subr.mxu0 0.0
    %2013 = vmatpush1.msra.mxu0 0.0
    %2014 = vmatprep.subr.mxu0 0.0
    %2015 = vmatpush1.msra.mxu0 0.0
    %2016 = vmatprep.subr.mxu0 0.0
    %2017 = vmatpush1.msra.mxu0 0.0
    %2018 = vmatprep.subr.mxu0 0.0
    %2019 = vmatpush1.msra.mxu0 0.0
    %2020 = vmatprep.subr.mxu0 0.0
    %2021 = vmatpush1.msra.mxu0 0.0
    %2022 = vmatprep.subr.mxu0 0.0
    %2023 = vmatpush1.msra.mxu0 0.0
    %2024 = vmatprep.subr.mxu0 0.0
    %2025 = vmatpush1.msra.mxu0 0.0
    %2026 = vmatprep.subr.mxu0 0.0
    %2027 = vmatpush1.msra.mxu0 0.0
    %2028 = vmatprep.subr.mxu0 0.0
    %2029 = vmatpush1.msra.mxu0 0.0
    %2030 = vmatprep.subr.mxu0 0.0
    %2031 = vmatpush1.msra.mxu0 0.0
    %2032 = vmatprep.subr.mxu0 0.0
    %2033 = vmatpush1.msra.mxu0 0.0
    %2034 = vmatprep.subr.mxu0 0.0
    %2035 = vmatpush1.msra.mxu0 0.0
    %2036 = vmatprep.mubr.f32.mxu0 0.0
    %2037 = vmatmul.mubr.f32.gmra.mrb[0].mxu0 %v1970
    %v2038 = vpop.f32.mrb[0].mxu0
    %v2039 = vadd.f32 %v1964, %v2038
    %v2040 = vpop.f32.mrb[0].mxu0
    %2041 = vdwg.mxu0
    %v2042 = vxor.u32 %v2039, 2147483648
    %v2043 = vmul.f32 %v2042, 1.442695
    %v2044 = vpow.pop %v2043
    %v2045 = vadd.f32 %v2044, 1.0
    %v2046 = vrcp.pop %v2045
    %v2047 = vmul.f32 1.0, %v2046
    %v2048 = vtanh.pop %v2039
    %v2049 = vmul.f32 %v2047, %v1622
    %2051 = vrot.lane.b32.xlu0 %v2048, 32
    %v2052 = vpop.permute.xlu0 %2051
    %v2054 = vmul.f32 %v2047, %v2052
    %2056 = vrot.lane.b32.xlu0 %v2054, 32
    %v2057 = vpop.permute.xlu0 %2056
    %v2059 = vadd.f32 %v2049, %v2057
    %v2060 = vtanh.pop %v2059
    %2062 = vrot.lane.b32.xlu0 %v2060, 32
    %v2063 = vpop.permute.xlu0 %2062
    %v2065 = vmul.f32 %v2047, %v2063
    %2067 = vrot.lane.b32.xlu0 %v1891, 64
    %v2068 = vpop.permute.xlu0 %2067
    %v2069 = vsel %vm56, %v2068, 0
    %2071 = vmatprep.subr.mxu0 0.0
    %2072 = vmatpush1.msra.mxu0 %v288
    %2073 = vmatprep.subr.mxu0 0.0
    %2074 = vmatpush1.msra.mxu0 %v289
    %2075 = vmatprep.subr.mxu0 0.0
    %2076 = vmatpush1.msra.mxu0 %v290
    %2077 = vmatprep.subr.mxu0 0.0
    %2078 = vmatpush1.msra.mxu0 %v291
    %2079 = vmatprep.subr.mxu0 0.0
    %2080 = vmatpush1.msra.mxu0 0.0
    %2081 = vmatprep.subr.mxu0 0.0
    %2082 = vmatpush1.msra.mxu0 0.0
    %2083 = vmatprep.subr.mxu0 0.0
    %2084 = vmatpush1.msra.mxu0 0.0
    %2085 = vmatprep.subr.mxu0 0.0
    %2086 = vmatpush1.msra.mxu0 0.0
    %2087 = vmatprep.subr.mxu0 0.0
    %2088 = vmatpush1.msra.mxu0 0.0
    %2089 = vmatprep.subr.mxu0 0.0
    %2090 = vmatpush1.msra.mxu0 0.0
    %2091 = vmatprep.subr.mxu0 0.0
    %2092 = vmatpush1.msra.mxu0 0.0
    %2093 = vmatprep.subr.mxu0 0.0
    %2094 = vmatpush1.msra.mxu0 0.0
    %2095 = vmatprep.subr.mxu0 0.0
    %2096 = vmatpush1.msra.mxu0 0.0
    %2097 = vmatprep.subr.mxu0 0.0
    %2098 = vmatpush1.msra.mxu0 0.0
    %2099 = vmatprep.subr.mxu0 0.0
    %2100 = vmatpush1.msra.mxu0 0.0
    %2101 = vmatprep.subr.mxu0 0.0
    %2102 = vmatpush1.msra.mxu0 0.0
    %2103 = vmatprep.subr.mxu0 0.0
    %2104 = vmatpush1.msra.mxu0 0.0
    %2105 = vmatprep.subr.mxu0 0.0
    %2106 = vmatpush1.msra.mxu0 0.0
    %2107 = vmatprep.subr.mxu0 0.0
    %2108 = vmatpush1.msra.mxu0 0.0
    %2109 = vmatprep.subr.mxu0 0.0
    %2110 = vmatpush1.msra.mxu0 0.0
    %2111 = vmatprep.subr.mxu0 0.0
    %2112 = vmatpush1.msra.mxu0 0.0
    %2113 = vmatprep.subr.mxu0 0.0
    %2114 = vmatpush1.msra.mxu0 0.0
    %2115 = vmatprep.subr.mxu0 0.0
    %2116 = vmatpush1.msra.mxu0 0.0
    %2117 = vmatprep.subr.mxu0 0.0
    %2118 = vmatpush1.msra.mxu0 0.0
    %2119 = vmatprep.subr.mxu0 0.0
    %2120 = vmatpush1.msra.mxu0 0.0
    %2121 = vmatprep.subr.mxu0 0.0
    %2122 = vmatpush1.msra.mxu0 0.0
    %2123 = vmatprep.subr.mxu0 0.0
    %2124 = vmatpush1.msra.mxu0 0.0
    %2125 = vmatprep.subr.mxu0 0.0
    %2126 = vmatpush1.msra.mxu0 0.0
    %2127 = vmatprep.subr.mxu0 0.0
    %2128 = vmatpush1.msra.mxu0 0.0
    %2129 = vmatprep.subr.mxu0 0.0
    %2130 = vmatpush1.msra.mxu0 0.0
    %2131 = vmatprep.subr.mxu0 0.0
    %2132 = vmatpush1.msra.mxu0 0.0
    %2133 = vmatprep.subr.mxu0 0.0
    %2134 = vmatpush1.msra.mxu0 0.0
    %2135 = vmatprep.mubr.f32.mxu0 0.0
    %2136 = vmatmul.mubr.f32.gmra.mrb[0].mxu0 %v2069
    %v2137 = vpop.f32.mrb[0].mxu0
    %v2138 = vadd.f32 %v298, %v2137
    %v2139 = vpop.f32.mrb[0].mxu0
    %2140 = vdwg.mxu0
    %2141 = vmatprep.subr.mxu0 0.0
    %2142 = vmatpush1.msra.mxu0 %v376
    %2143 = vmatprep.subr.mxu0 0.0
    %2144 = vmatpush1.msra.mxu0 %v377
    %2145 = vmatprep.subr.mxu0 0.0
    %2146 = vmatpush1.msra.mxu0 %v378
    %2147 = vmatprep.subr.mxu0 0.0
    %2148 = vmatpush1.msra.mxu0 %v379
    %2149 = vmatprep.subr.mxu0 0.0
    %2150 = vmatpush1.msra.mxu0 0.0
    %2151 = vmatprep.subr.mxu0 0.0
    %2152 = vmatpush1.msra.mxu0 0.0
    %2153 = vmatprep.subr.mxu0 0.0
    %2154 = vmatpush1.msra.mxu0 0.0
    %2155 = vmatprep.subr.mxu0 0.0
    %2156 = vmatpush1.msra.mxu0 0.0
    %2157 = vmatprep.subr.mxu0 0.0
    %2158 = vmatpush1.msra.mxu0 0.0
    %2159 = vmatprep.subr.mxu0 0.0
    %2160 = vmatpush1.msra.mxu0 0.0
    %2161 = vmatprep.subr.mxu0 0.0
    %2162 = vmatpush1.msra.mxu0 0.0
    %2163 = vmatprep.subr.mxu0 0.0
    %2164 = vmatpush1.msra.mxu0 0.0
    %2165 = vmatprep.subr.mxu0 0.0
    %2166 = vmatpush1.msra.mxu0 0.0
    %2167 = vmatprep.subr.mxu0 0.0
    %2168 = vmatpush1.msra.mxu0 0.0
    %2169 = vmatprep.subr.mxu0 0.0
    %2170 = vmatpush1.msra.mxu0 0.0
    %2171 = vmatprep.subr.mxu0 0.0
    %2172 = vmatpush1.msra.mxu0 0.0
    %2173 = vmatprep.subr.mxu0 0.0
    %2174 = vmatpush1.msra.mxu0 0.0
    %2175 = vmatprep.subr.mxu0 0.0
    %2176 = vmatpush1.msra.mxu0 0.0
    %2177 = vmatprep.subr.mxu0 0.0
    %2178 = vmatpush1.msra.mxu0 0.0
    %2179 = vmatprep.subr.mxu0 0.0
    %2180 = vmatpush1.msra.mxu0 0.0
    %2181 = vmatprep.subr.mxu0 0.0
    %2182 = vmatpush1.msra.mxu0 0.0
    %2183 = vmatprep.subr.mxu0 0.0
    %2184 = vmatpush1.msra.mxu0 0.0
    %2185 = vmatprep.subr.mxu0 0.0
    %2186 = vmatpush1.msra.mxu0 0.0
    %2187 = vmatprep.subr.mxu0 0.0
    %2188 = vmatpush1.msra.mxu0 0.0
    %2189 = vmatprep.subr.mxu0 0.0
    %2190 = vmatpush1.msra.mxu0 0.0
    %2191 = vmatprep.subr.mxu0 0.0
    %2192 = vmatpush1.msra.mxu0 0.0
    %2193 = vmatprep.subr.mxu0 0.0
    %2194 = vmatpush1.msra.mxu0 0.0
    %2195 = vmatprep.subr.mxu0 0.0
    %2196 = vmatpush1.msra.mxu0 0.0
    %2197 = vmatprep.subr.mxu0 0.0
    %2198 = vmatpush1.msra.mxu0 0.0
    %2199 = vmatprep.subr.mxu0 0.0
    %2200 = vmatpush1.msra.mxu0 0.0
    %2201 = vmatprep.subr.mxu0 0.0
    %2202 = vmatpush1.msra.mxu0 0.0
    %2203 = vmatprep.subr.mxu0 0.0
    %2204 = vmatpush1.msra.mxu0 0.0
    %2205 = vmatprep.mubr.f32.mxu0 0.0
    %2206 = vmatmul.mubr.f32.gmra.mrb[0].mxu0 %v1895
    %v2207 = vpop.f32.mrb[0].mxu0
    %v2208 = vadd.f32 %v2138, %v2207
    %v2209 = vpop.f32.mrb[0].mxu0
    %2210 = vdwg.mxu0
    %v2211 = vxor.u32 %v2208, 2147483648
    %v2212 = vmul.f32 %v2211, 1.442695
    %v2213 = vpow.pop %v2212
    %v2214 = vadd.f32 %v2213, 1.0
    %v2215 = vrcp.pop %v2214
    %v2216 = vmul.f32 1.0, %v2215
    %v2217 = vtanh.pop %v2208
    %v2218 = vmul.f32 %v2216, %v1791
    %2220 = vrot.lane.b32.xlu0 %v2217, 32
    %v2221 = vpop.permute.xlu0 %2220
    %v2223 = vmul.f32 %v2216, %v2221
    %2225 = vrot.lane.b32.xlu0 %v2223, 32
    %v2226 = vpop.permute.xlu0 %2225
    %v2228 = vadd.f32 %v2218, %v2226
    %v2229 = vtanh.pop %v2228
    %2231 = vrot.lane.b32.xlu0 %v2229, 32
    %v2232 = vpop.permute.xlu0 %2231
    %v2234 = vmul.f32 %v2216, %v2232
    %2235 = vmatprep.subr.mxu0 0.0
    %2236 = vmatpush1.msra.mxu0 %v186
    %2237 = vmatprep.subr.mxu0 0.0
    %2238 = vmatpush1.msra.mxu0 %v187
    %2239 = vmatprep.subr.mxu0 0.0
    %2240 = vmatpush1.msra.mxu0 %v188
    %2241 = vmatprep.subr.mxu0 0.0
    %2242 = vmatpush1.msra.mxu0 %v189
    %2243 = vmatprep.subr.mxu0 0.0
    %2244 = vmatpush1.msra.mxu0 0.0
    %2245 = vmatprep.subr.mxu0 0.0
    %2246 = vmatpush1.msra.mxu0 0.0
    %2247 = vmatprep.subr.mxu0 0.0
    %2248 = vmatpush1.msra.mxu0 0.0
    %2249 = vmatprep.subr.mxu0 0.0
    %2250 = vmatpush1.msra.mxu0 0.0
    %2251 = vmatprep.subr.mxu0 0.0
    %2252 = vmatpush1.msra.mxu0 0.0
    %2253 = vmatprep.subr.mxu0 0.0
    %2254 = vmatpush1.msra.mxu0 0.0
    %2255 = vmatprep.subr.mxu0 0.0
    %2256 = vmatpush1.msra.mxu0 0.0
    %2257 = vmatprep.subr.mxu0 0.0
    %2258 = vmatpush1.msra.mxu0 0.0
    %2259 = vmatprep.subr.mxu0 0.0
    %2260 = vmatpush1.msra.mxu0 0.0
    %2261 = vmatprep.subr.mxu0 0.0
    %2262 = vmatpush1.msra.mxu0 0.0
    %2263 = vmatprep.subr.mxu0 0.0
    %2264 = vmatpush1.msra.mxu0 0.0
    %2265 = vmatprep.subr.mxu0 0.0
    %2266 = vmatpush1.msra.mxu0 0.0
    %2267 = vmatprep.subr.mxu0 0.0
    %2268 = vmatpush1.msra.mxu0 0.0
    %2269 = vmatprep.subr.mxu0 0.0
    %2270 = vmatpush1.msra.mxu0 0.0
    %2271 = vmatprep.subr.mxu0 0.0
    %2272 = vmatpush1.msra.mxu0 0.0
    %2273 = vmatprep.subr.mxu0 0.0
    %2274 = vmatpush1.msra.mxu0 0.0
    %2275 = vmatprep.subr.mxu0 0.0
    %2276 = vmatpush1.msra.mxu0 0.0
    %2277 = vmatprep.subr.mxu0 0.0
    %2278 = vmatpush1.msra.mxu0 0.0
    %2279 = vmatprep.subr.mxu0 0.0
    %2280 = vmatpush1.msra.mxu0 0.0
    %2281 = vmatprep.subr.mxu0 0.0
    %2282 = vmatpush1.msra.mxu0 0.0
    %2283 = vmatprep.subr.mxu0 0.0
    %2284 = vmatpush1.msra.mxu0 0.0
    %2285 = vmatprep.subr.mxu0 0.0
    %2286 = vmatpush1.msra.mxu0 0.0
    %2287 = vmatprep.subr.mxu0 0.0
    %2288 = vmatpush1.msra.mxu0 0.0
    %2289 = vmatprep.subr.mxu0 0.0
    %2290 = vmatpush1.msra.mxu0 0.0
    %2291 = vmatprep.subr.mxu0 0.0
    %2292 = vmatpush1.msra.mxu0 0.0
    %2293 = vmatprep.subr.mxu0 0.0
    %2294 = vmatpush1.msra.mxu0 0.0
    %2295 = vmatprep.subr.mxu0 0.0
    %2296 = vmatpush1.msra.mxu0 0.0
    %2297 = vmatprep.subr.mxu0 0.0
    %2298 = vmatpush1.msra.mxu0 0.0
    %2299 = vmatprep.mubr.f32.mxu0 0.0
    %2300 = vmatmul.mubr.f32.gmra.mrb[0].mxu0 %v2069
    %v2301 = vpop.f32.mrb[0].mxu0
    %v2302 = vadd.f32 %v173, %v2301
    %v2303 = vpop.f32.mrb[0].mxu0
    %2304 = vdwg.mxu0
    %v2305 = vxor.u32 %v2302, 2147483648
    %v2306 = vmul.f32 %v2305, 1.442695
    %v2307 = vpow.pop %v2306
    %v2308 = vadd.f32 %v2307, 1.0
    %v2309 = vrcp.pop %v2308
    %v2310 = vmul.f32 1.0, %v2309
    %v2311 = vtanh.pop %v2302
    %v2312 = vmul.f32 %v2310, %v1885
    %2314 = vrot.lane.b32.xlu0 %v2311, 32
    %v2315 = vpop.permute.xlu0 %2314
    %v2317 = vmul.f32 %v2310, %v2315
    %2319 = vrot.lane.b32.xlu0 %v2317, 32
    %v2320 = vpop.permute.xlu0 %2319
    %v2322 = vadd.f32 %v2312, %v2320
    %v2323 = vtanh.pop %v2322
    %2325 = vrot.lane.b32.xlu0 %v2323, 32
    %v2326 = vpop.permute.xlu0 %2325
    %v2328 = vmul.f32 %v2310, %v2326
    %2330 = vrot.lane.b32.xlu0 %v2234, 64
    %v2331 = vpop.permute.xlu0 %2330
    %v2332 = vsel %vm56, %v2331, 0
    %2334 = vmatprep.subr.mxu0 0.0
    %2335 = vmatpush1.msra.mxu0 %v569
    %2336 = vmatprep.subr.mxu0 0.0
    %2337 = vmatpush1.msra.mxu0 %v570
    %2338 = vmatprep.subr.mxu0 0.0
    %2339 = vmatpush1.msra.mxu0 %v571
    %2340 = vmatprep.subr.mxu0 0.0
    %2341 = vmatpush1.msra.mxu0 %v572
    %2342 = vmatprep.subr.mxu0 0.0
    %2343 = vmatpush1.msra.mxu0 0.0
    %2344 = vmatprep.subr.mxu0 0.0
    %2345 = vmatpush1.msra.mxu0 0.0
    %2346 = vmatprep.subr.mxu0 0.0
    %2347 = vmatpush1.msra.mxu0 0.0
    %2348 = vmatprep.subr.mxu0 0.0
    %2349 = vmatpush1.msra.mxu0 0.0
    %2350 = vmatprep.subr.mxu0 0.0
    %2351 = vmatpush1.msra.mxu0 0.0
    %2352 = vmatprep.subr.mxu0 0.0
    %2353 = vmatpush1.msra.mxu0 0.0
    %2354 = vmatprep.subr.mxu0 0.0
    %2355 = vmatpush1.msra.mxu0 0.0
    %2356 = vmatprep.subr.mxu0 0.0
    %2357 = vmatpush1.msra.mxu0 0.0
    %2358 = vmatprep.subr.mxu0 0.0
    %2359 = vmatpush1.msra.mxu0 0.0
    %2360 = vmatprep.subr.mxu0 0.0
    %2361 = vmatpush1.msra.mxu0 0.0
    %2362 = vmatprep.subr.mxu0 0.0
    %2363 = vmatpush1.msra.mxu0 0.0
    %2364 = vmatprep.subr.mxu0 0.0
    %2365 = vmatpush1.msra.mxu0 0.0
    %2366 = vmatprep.subr.mxu0 0.0
    %2367 = vmatpush1.msra.mxu0 0.0
    %2368 = vmatprep.subr.mxu0 0.0
    %2369 = vmatpush1.msra.mxu0 0.0
    %2370 = vmatprep.subr.mxu0 0.0
    %2371 = vmatpush1.msra.mxu0 0.0
    %2372 = vmatprep.subr.mxu0 0.0
    %2373 = vmatpush1.msra.mxu0 0.0
    %2374 = vmatprep.subr.mxu0 0.0
    %2375 = vmatpush1.msra.mxu0 0.0
    %2376 = vmatprep.subr.mxu0 0.0
    %2377 = vmatpush1.msra.mxu0 0.0
    %2378 = vmatprep.subr.mxu0 0.0
    %2379 = vmatpush1.msra.mxu0 0.0
    %2380 = vmatprep.subr.mxu0 0.0
    %2381 = vmatpush1.msra.mxu0 0.0
    %2382 = vmatprep.subr.mxu0 0.0
    %2383 = vmatpush1.msra.mxu0 0.0
    %2384 = vmatprep.subr.mxu0 0.0
    %2385 = vmatpush1.msra.mxu0 0.0
    %2386 = vmatprep.subr.mxu0 0.0
    %2387 = vmatpush1.msra.mxu0 0.0
    %2388 = vmatprep.subr.mxu0 0.0
    %2389 = vmatpush1.msra.mxu0 0.0
    %2390 = vmatprep.subr.mxu0 0.0
    %2391 = vmatpush1.msra.mxu0 0.0
    %2392 = vmatprep.subr.mxu0 0.0
    %2393 = vmatpush1.msra.mxu0 0.0
    %2394 = vmatprep.subr.mxu0 0.0
    %2395 = vmatpush1.msra.mxu0 0.0
    %2396 = vmatprep.subr.mxu0 0.0
    %2397 = vmatpush1.msra.mxu0 0.0
    %2398 = vmatprep.mubr.f32.mxu0 0.0
    %2399 = vmatmul.mubr.f32.gmra.mrb[0].mxu0 %v2332
    %v2400 = vpop.f32.mrb[0].mxu0
    %v2401 = vadd.f32 %v579, %v2400
    %v2402 = vpop.f32.mrb[0].mxu0
    %2403 = vdwg.mxu0
    %2405 = vrot.lane.b32.xlu0 %v2065, 64
    %v2406 = vpop.permute.xlu0 %2405
    %v2407 = vsel %vm56, %v2406, 0
    %2409 = vmatprep.subr.mxu0 0.0
    %2410 = vmatpush1.msra.mxu0 %v657
    %2411 = vmatprep.subr.mxu0 0.0
    %2412 = vmatpush1.msra.mxu0 %v658
    %2413 = vmatprep.subr.mxu0 0.0
    %2414 = vmatpush1.msra.mxu0 %v659
    %2415 = vmatprep.subr.mxu0 0.0
    %2416 = vmatpush1.msra.mxu0 %v660
    %2417 = vmatprep.subr.mxu0 0.0
    %2418 = vmatpush1.msra.mxu0 0.0
    %2419 = vmatprep.subr.mxu0 0.0
    %2420 = vmatpush1.msra.mxu0 0.0
    %2421 = vmatprep.subr.mxu0 0.0
    %2422 = vmatpush1.msra.mxu0 0.0
    %2423 = vmatprep.subr.mxu0 0.0
    %2424 = vmatpush1.msra.mxu0 0.0
    %2425 = vmatprep.subr.mxu0 0.0
    %2426 = vmatpush1.msra.mxu0 0.0
    %2427 = vmatprep.subr.mxu0 0.0
    %2428 = vmatpush1.msra.mxu0 0.0
    %2429 = vmatprep.subr.mxu0 0.0
    %2430 = vmatpush1.msra.mxu0 0.0
    %2431 = vmatprep.subr.mxu0 0.0
    %2432 = vmatpush1.msra.mxu0 0.0
    %2433 = vmatprep.subr.mxu0 0.0
    %2434 = vmatpush1.msra.mxu0 0.0
    %2435 = vmatprep.subr.mxu0 0.0
    %2436 = vmatpush1.msra.mxu0 0.0
    %2437 = vmatprep.subr.mxu0 0.0
    %2438 = vmatpush1.msra.mxu0 0.0
    %2439 = vmatprep.subr.mxu0 0.0
    %2440 = vmatpush1.msra.mxu0 0.0
    %2441 = vmatprep.subr.mxu0 0.0
    %2442 = vmatpush1.msra.mxu0 0.0
    %2443 = vmatprep.subr.mxu0 0.0
    %2444 = vmatpush1.msra.mxu0 0.0
    %2445 = vmatprep.subr.mxu0 0.0
    %2446 = vmatpush1.msra.mxu0 0.0
    %2447 = vmatprep.subr.mxu0 0.0
    %2448 = vmatpush1.msra.mxu0 0.0
    %2449 = vmatprep.subr.mxu0 0.0
    %2450 = vmatpush1.msra.mxu0 0.0
    %2451 = vmatprep.subr.mxu0 0.0
    %2452 = vmatpush1.msra.mxu0 0.0
    %2453 = vmatprep.subr.mxu0 0.0
    %2454 = vmatpush1.msra.mxu0 0.0
    %2455 = vmatprep.subr.mxu0 0.0
    %2456 = vmatpush1.msra.mxu0 0.0
    %2457 = vmatprep.subr.mxu0 0.0
    %2458 = vmatpush1.msra.mxu0 0.0
    %2459 = vmatprep.subr.mxu0 0.0
    %2460 = vmatpush1.msra.mxu0 0.0
    %2461 = vmatprep.subr.mxu0 0.0
    %2462 = vmatpush1.msra.mxu0 0.0
    %2463 = vmatprep.subr.mxu0 0.0
    %2464 = vmatpush1.msra.mxu0 0.0
    %2465 = vmatprep.subr.mxu0 0.0
    %2466 = vmatpush1.msra.mxu0 0.0
    %2467 = vmatprep.subr.mxu0 0.0
    %2468 = vmatpush1.msra.mxu0 0.0
    %2469 = vmatprep.subr.mxu0 0.0
    %2470 = vmatpush1.msra.mxu0 0.0
    %2471 = vmatprep.subr.mxu0 0.0
    %2472 = vmatpush1.msra.mxu0 0.0
    %2473 = vmatprep.mubr.f32.mxu0 0.0
    %2474 = vmatmul.mubr.f32.gmra.mrb[0].mxu0 %v2407
    %v2475 = vpop.f32.mrb[0].mxu0
    %v2476 = vadd.f32 %v2401, %v2475
    %v2477 = vpop.f32.mrb[0].mxu0
    %2478 = vdwg.mxu0
    %v2479 = vxor.u32 %v2476, 2147483648
    %v2480 = vmul.f32 %v2479, 1.442695
    %v2481 = vpow.pop %v2480
    %v2482 = vadd.f32 %v2481, 1.0
    %v2483 = vrcp.pop %v2482
    %v2484 = vmul.f32 1.0, %v2483
    %v2485 = vtanh.pop %v2476
    %v2486 = vmul.f32 %v2484, %v2059
    %2488 = vrot.lane.b32.xlu0 %v2485, 32
    %v2489 = vpop.permute.xlu0 %2488
    %v2491 = vmul.f32 %v2484, %v2489
    %2493 = vrot.lane.b32.xlu0 %v2491, 32
    %v2494 = vpop.permute.xlu0 %2493
    %v2496 = vadd.f32 %v2486, %v2494
    %v2497 = vtanh.pop %v2496
    %2499 = vrot.lane.b32.xlu0 %v2497, 32
    %v2500 = vpop.permute.xlu0 %2499
    %v2502 = vmul.f32 %v2484, %v2500
    %2504 = vrot.lane.b32.xlu0 %v2328, 64
    %v2505 = vpop.permute.xlu0 %2504
    %v2506 = vsel %vm56, %v2505, 0
    %2508 = vmatprep.subr.mxu0 0.0
    %2509 = vmatpush1.msra.mxu0 %v288
    %2510 = vmatprep.subr.mxu0 0.0
    %2511 = vmatpush1.msra.mxu0 %v289
    %2512 = vmatprep.subr.mxu0 0.0
    %2513 = vmatpush1.msra.mxu0 %v290
    %2514 = vmatprep.subr.mxu0 0.0
    %2515 = vmatpush1.msra.mxu0 %v291
    %2516 = vmatprep.subr.mxu0 0.0
    %2517 = vmatpush1.msra.mxu0 0.0
    %2518 = vmatprep.subr.mxu0 0.0
    %2519 = vmatpush1.msra.mxu0 0.0
    %2520 = vmatprep.subr.mxu0 0.0
    %2521 = vmatpush1.msra.mxu0 0.0
    %2522 = vmatprep.subr.mxu0 0.0
    %2523 = vmatpush1.msra.mxu0 0.0
    %2524 = vmatprep.subr.mxu0 0.0
    %2525 = vmatpush1.msra.mxu0 0.0
    %2526 = vmatprep.subr.mxu0 0.0
    %2527 = vmatpush1.msra.mxu0 0.0
    %2528 = vmatprep.subr.mxu0 0.0
    %2529 = vmatpush1.msra.mxu0 0.0
    %2530 = vmatprep.subr.mxu0 0.0
    %2531 = vmatpush1.msra.mxu0 0.0
    %2532 = vmatprep.subr.mxu0 0.0
    %2533 = vmatpush1.msra.mxu0 0.0
    %2534 = vmatprep.subr.mxu0 0.0
    %2535 = vmatpush1.msra.mxu0 0.0
    %2536 = vmatprep.subr.mxu0 0.0
    %2537 = vmatpush1.msra.mxu0 0.0
    %2538 = vmatprep.subr.mxu0 0.0
    %2539 = vmatpush1.msra.mxu0 0.0
    %2540 = vmatprep.subr.mxu0 0.0
    %2541 = vmatpush1.msra.mxu0 0.0
    %2542 = vmatprep.subr.mxu0 0.0
    %2543 = vmatpush1.msra.mxu0 0.0
    %2544 = vmatprep.subr.mxu0 0.0
    %2545 = vmatpush1.msra.mxu0 0.0
    %2546 = vmatprep.subr.mxu0 0.0
    %2547 = vmatpush1.msra.mxu0 0.0
    %2548 = vmatprep.subr.mxu0 0.0
    %2549 = vmatpush1.msra.mxu0 0.0
    %2550 = vmatprep.subr.mxu0 0.0
    %2551 = vmatpush1.msra.mxu0 0.0
    %2552 = vmatprep.subr.mxu0 0.0
    %2553 = vmatpush1.msra.mxu0 0.0
    %2554 = vmatprep.subr.mxu0 0.0
    %2555 = vmatpush1.msra.mxu0 0.0
    %2556 = vmatprep.subr.mxu0 0.0
    %2557 = vmatpush1.msra.mxu0 0.0
    %2558 = vmatprep.subr.mxu0 0.0
    %2559 = vmatpush1.msra.mxu0 0.0
    %2560 = vmatprep.subr.mxu0 0.0
    %2561 = vmatpush1.msra.mxu0 0.0
    %2562 = vmatprep.subr.mxu0 0.0
    %2563 = vmatpush1.msra.mxu0 0.0
    %2564 = vmatprep.subr.mxu0 0.0
    %2565 = vmatpush1.msra.mxu0 0.0
    %2566 = vmatprep.subr.mxu0 0.0
    %2567 = vmatpush1.msra.mxu0 0.0
    %2568 = vmatprep.subr.mxu0 0.0
    %2569 = vmatpush1.msra.mxu0 0.0
    %2570 = vmatprep.subr.mxu0 0.0
    %2571 = vmatpush1.msra.mxu0 0.0
    %2572 = vmatprep.mubr.f32.mxu0 0.0
    %2573 = vmatmul.mubr.f32.gmra.mrb[0].mxu0 %v2506
    %v2574 = vpop.f32.mrb[0].mxu0
    %v2575 = vadd.f32 %v298, %v2574
    %v2576 = vpop.f32.mrb[0].mxu0
    %2577 = vdwg.mxu0
    %2578 = vmatprep.subr.mxu0 0.0
    %2579 = vmatpush1.msra.mxu0 %v376
    %2580 = vmatprep.subr.mxu0 0.0
    %2581 = vmatpush1.msra.mxu0 %v377
    %2582 = vmatprep.subr.mxu0 0.0
    %2583 = vmatpush1.msra.mxu0 %v378
    %2584 = vmatprep.subr.mxu0 0.0
    %2585 = vmatpush1.msra.mxu0 %v379
    %2586 = vmatprep.subr.mxu0 0.0
    %2587 = vmatpush1.msra.mxu0 0.0
    %2588 = vmatprep.subr.mxu0 0.0
    %2589 = vmatpush1.msra.mxu0 0.0
    %2590 = vmatprep.subr.mxu0 0.0
    %2591 = vmatpush1.msra.mxu0 0.0
    %2592 = vmatprep.subr.mxu0 0.0
    %2593 = vmatpush1.msra.mxu0 0.0
    %2594 = vmatprep.subr.mxu0 0.0
    %2595 = vmatpush1.msra.mxu0 0.0
    %2596 = vmatprep.subr.mxu0 0.0
    %2597 = vmatpush1.msra.mxu0 0.0
    %2598 = vmatprep.subr.mxu0 0.0
    %2599 = vmatpush1.msra.mxu0 0.0
    %2600 = vmatprep.subr.mxu0 0.0
    %2601 = vmatpush1.msra.mxu0 0.0
    %2602 = vmatprep.subr.mxu0 0.0
    %2603 = vmatpush1.msra.mxu0 0.0
    %2604 = vmatprep.subr.mxu0 0.0
    %2605 = vmatpush1.msra.mxu0 0.0
    %2606 = vmatprep.subr.mxu0 0.0
    %2607 = vmatpush1.msra.mxu0 0.0
    %2608 = vmatprep.subr.mxu0 0.0
    %2609 = vmatpush1.msra.mxu0 0.0
    %2610 = vmatprep.subr.mxu0 0.0
    %2611 = vmatpush1.msra.mxu0 0.0
    %2612 = vmatprep.subr.mxu0 0.0
    %2613 = vmatpush1.msra.mxu0 0.0
    %2614 = vmatprep.subr.mxu0 0.0
    %2615 = vmatpush1.msra.mxu0 0.0
    %2616 = vmatprep.subr.mxu0 0.0
    %2617 = vmatpush1.msra.mxu0 0.0
    %2618 = vmatprep.subr.mxu0 0.0
    %2619 = vmatpush1.msra.mxu0 0.0
    %2620 = vmatprep.subr.mxu0 0.0
    %2621 = vmatpush1.msra.mxu0 0.0
    %2622 = vmatprep.subr.mxu0 0.0
    %2623 = vmatpush1.msra.mxu0 0.0
    %2624 = vmatprep.subr.mxu0 0.0
    %2625 = vmatpush1.msra.mxu0 0.0
    %2626 = vmatprep.subr.mxu0 0.0
    %2627 = vmatpush1.msra.mxu0 0.0
    %2628 = vmatprep.subr.mxu0 0.0
    %2629 = vmatpush1.msra.mxu0 0.0
    %2630 = vmatprep.subr.mxu0 0.0
    %2631 = vmatpush1.msra.mxu0 0.0
    %2632 = vmatprep.subr.mxu0 0.0
    %2633 = vmatpush1.msra.mxu0 0.0
    %2634 = vmatprep.subr.mxu0 0.0
    %2635 = vmatpush1.msra.mxu0 0.0
    %2636 = vmatprep.subr.mxu0 0.0
    %2637 = vmatpush1.msra.mxu0 0.0
    %2638 = vmatprep.subr.mxu0 0.0
    %2639 = vmatpush1.msra.mxu0 0.0
    %2640 = vmatprep.subr.mxu0 0.0
    %2641 = vmatpush1.msra.mxu0 0.0
    %2642 = vmatprep.mubr.f32.mxu0 0.0
    %2643 = vmatmul.mubr.f32.gmra.mrb[0].mxu0 %v2332
    %v2644 = vpop.f32.mrb[0].mxu0
    %v2645 = vadd.f32 %v2575, %v2644
    %v2646 = vpop.f32.mrb[0].mxu0
    %2647 = vdwg.mxu0
    %v2648 = vxor.u32 %v2645, 2147483648
    %v2649 = vmul.f32 %v2648, 1.442695
    %v2650 = vpow.pop %v2649
    %v2651 = vadd.f32 %v2650, 1.0
    %v2652 = vrcp.pop %v2651
    %v2653 = vmul.f32 1.0, %v2652
    %v2654 = vtanh.pop %v2645
    %v2655 = vmul.f32 %v2653, %v2228
    %2657 = vrot.lane.b32.xlu0 %v2654, 32
    %v2658 = vpop.permute.xlu0 %2657
    %v2660 = vmul.f32 %v2653, %v2658
    %2662 = vrot.lane.b32.xlu0 %v2660, 32
    %v2663 = vpop.permute.xlu0 %2662
    %v2665 = vadd.f32 %v2655, %v2663
    %v2666 = vtanh.pop %v2665
    %2668 = vrot.lane.b32.xlu0 %v2666, 32
    %v2669 = vpop.permute.xlu0 %2668
    %v2671 = vmul.f32 %v2653, %v2669
    %2672 = vmatprep.subr.mxu0 0.0
    %2673 = vmatpush1.msra.mxu0 %v186
    %2674 = vmatprep.subr.mxu0 0.0
    %2675 = vmatpush1.msra.mxu0 %v187
    %2676 = vmatprep.subr.mxu0 0.0
    %2677 = vmatpush1.msra.mxu0 %v188
    %2678 = vmatprep.subr.mxu0 0.0
    %2679 = vmatpush1.msra.mxu0 %v189
    %2680 = vmatprep.subr.mxu0 0.0
    %2681 = vmatpush1.msra.mxu0 0.0
    %2682 = vmatprep.subr.mxu0 0.0
    %2683 = vmatpush1.msra.mxu0 0.0
    %2684 = vmatprep.subr.mxu0 0.0
    %2685 = vmatpush1.msra.mxu0 0.0
    %2686 = vmatprep.subr.mxu0 0.0
    %2687 = vmatpush1.msra.mxu0 0.0
    %2688 = vmatprep.subr.mxu0 0.0
    %2689 = vmatpush1.msra.mxu0 0.0
    %2690 = vmatprep.subr.mxu0 0.0
    %2691 = vmatpush1.msra.mxu0 0.0
    %2692 = vmatprep.subr.mxu0 0.0
    %2693 = vmatpush1.msra.mxu0 0.0
    %2694 = vmatprep.subr.mxu0 0.0
    %2695 = vmatpush1.msra.mxu0 0.0
    %2696 = vmatprep.subr.mxu0 0.0
    %2697 = vmatpush1.msra.mxu0 0.0
    %2698 = vmatprep.subr.mxu0 0.0
    %2699 = vmatpush1.msra.mxu0 0.0
    %2700 = vmatprep.subr.mxu0 0.0
    %2701 = vmatpush1.msra.mxu0 0.0
    %2702 = vmatprep.subr.mxu0 0.0
    %2703 = vmatpush1.msra.mxu0 0.0
    %2704 = vmatprep.subr.mxu0 0.0
    %2705 = vmatpush1.msra.mxu0 0.0
    %2706 = vmatprep.subr.mxu0 0.0
    %2707 = vmatpush1.msra.mxu0 0.0
    %2708 = vmatprep.subr.mxu0 0.0
    %2709 = vmatpush1.msra.mxu0 0.0
    %2710 = vmatprep.subr.mxu0 0.0
    %2711 = vmatpush1.msra.mxu0 0.0
    %2712 = vmatprep.subr.mxu0 0.0
    %2713 = vmatpush1.msra.mxu0 0.0
    %2714 = vmatprep.subr.mxu0 0.0
    %2715 = vmatpush1.msra.mxu0 0.0
    %2716 = vmatprep.subr.mxu0 0.0
    %2717 = vmatpush1.msra.mxu0 0.0
    %2718 = vmatprep.subr.mxu0 0.0
    %2719 = vmatpush1.msra.mxu0 0.0
    %2720 = vmatprep.subr.mxu0 0.0
    %2721 = vmatpush1.msra.mxu0 0.0
    %2722 = vmatprep.subr.mxu0 0.0
    %2723 = vmatpush1.msra.mxu0 0.0
    %2724 = vmatprep.subr.mxu0 0.0
    %2725 = vmatpush1.msra.mxu0 0.0
    %2726 = vmatprep.subr.mxu0 0.0
    %2727 = vmatpush1.msra.mxu0 0.0
    %2728 = vmatprep.subr.mxu0 0.0
    %2729 = vmatpush1.msra.mxu0 0.0
    %2730 = vmatprep.subr.mxu0 0.0
    %2731 = vmatpush1.msra.mxu0 0.0
    %2732 = vmatprep.subr.mxu0 0.0
    %2733 = vmatpush1.msra.mxu0 0.0
    %2734 = vmatprep.subr.mxu0 0.0
    %2735 = vmatpush1.msra.mxu0 0.0
    %2736 = vmatprep.mubr.f32.mxu0 0.0
    %2737 = vmatmul.mubr.f32.gmra.mrb[0].mxu0 %v2506
    %v2738 = vpop.f32.mrb[0].mxu0
    %v2739 = vadd.f32 %v178, %v2738
    %v2740 = vpop.f32.mrb[0].mxu0
    %2741 = vdwg.mxu0
    %v2742 = vxor.u32 %v2739, 2147483648
    %v2743 = vmul.f32 %v2742, 1.442695
    %v2744 = vpow.pop %v2743
    %v2745 = vadd.f32 %v2744, 1.0
    %v2746 = vrcp.pop %v2745
    %v2747 = vmul.f32 1.0, %v2746
    %v2748 = vtanh.pop %v2739
    %v2749 = vmul.f32 %v2747, %v2322
    %2751 = vrot.lane.b32.xlu0 %v2748, 32
    %v2752 = vpop.permute.xlu0 %2751
    %v2754 = vmul.f32 %v2747, %v2752
    %2756 = vrot.lane.b32.xlu0 %v2754, 32
    %v2757 = vpop.permute.xlu0 %2756
    %v2759 = vadd.f32 %v2749, %v2757
    %v2760 = vtanh.pop %v2759
    %2762 = vrot.lane.b32.xlu0 %v2760, 32
    %v2763 = vpop.permute.xlu0 %2762
    %v2765 = vmul.f32 %v2747, %v2763
    %2767 = vrot.lane.b32.xlu0 %v2671, 64
    %v2768 = vpop.permute.xlu0 %2767
    %v2769 = vsel %vm56, %v2768, 0
    %2771 = vmatprep.subr.mxu0 0.0
    %2772 = vmatpush1.msra.mxu0 %v569
    %2773 = vmatprep.subr.mxu0 0.0
    %2774 = vmatpush1.msra.mxu0 %v570
    %2775 = vmatprep.subr.mxu0 0.0
    %2776 = vmatpush1.msra.mxu0 %v571
    %2777 = vmatprep.subr.mxu0 0.0
    %2778 = vmatpush1.msra.mxu0 %v572
    %2779 = vmatprep.subr.mxu0 0.0
    %2780 = vmatpush1.msra.mxu0 0.0
    %2781 = vmatprep.subr.mxu0 0.0
    %2782 = vmatpush1.msra.mxu0 0.0
    %2783 = vmatprep.subr.mxu0 0.0
    %2784 = vmatpush1.msra.mxu0 0.0
    %2785 = vmatprep.subr.mxu0 0.0
    %2786 = vmatpush1.msra.mxu0 0.0
    %2787 = vmatprep.subr.mxu0 0.0
    %2788 = vmatpush1.msra.mxu0 0.0
    %2789 = vmatprep.subr.mxu0 0.0
    %2790 = vmatpush1.msra.mxu0 0.0
    %2791 = vmatprep.subr.mxu0 0.0
    %2792 = vmatpush1.msra.mxu0 0.0
    %2793 = vmatprep.subr.mxu0 0.0
    %2794 = vmatpush1.msra.mxu0 0.0
    %2795 = vmatprep.subr.mxu0 0.0
    %2796 = vmatpush1.msra.mxu0 0.0
    %2797 = vmatprep.subr.mxu0 0.0
    %2798 = vmatpush1.msra.mxu0 0.0
    %2799 = vmatprep.subr.mxu0 0.0
    %2800 = vmatpush1.msra.mxu0 0.0
    %2801 = vmatprep.subr.mxu0 0.0
    %2802 = vmatpush1.msra.mxu0 0.0
    %2803 = vmatprep.subr.mxu0 0.0
    %2804 = vmatpush1.msra.mxu0 0.0
    %2805 = vmatprep.subr.mxu0 0.0
    %2806 = vmatpush1.msra.mxu0 0.0
    %2807 = vmatprep.subr.mxu0 0.0
    %2808 = vmatpush1.msra.mxu0 0.0
    %2809 = vmatprep.subr.mxu0 0.0
    %2810 = vmatpush1.msra.mxu0 0.0
    %2811 = vmatprep.subr.mxu0 0.0
    %2812 = vmatpush1.msra.mxu0 0.0
    %2813 = vmatprep.subr.mxu0 0.0
    %2814 = vmatpush1.msra.mxu0 0.0
    %2815 = vmatprep.subr.mxu0 0.0
    %2816 = vmatpush1.msra.mxu0 0.0
    %2817 = vmatprep.subr.mxu0 0.0
    %2818 = vmatpush1.msra.mxu0 0.0
    %2819 = vmatprep.subr.mxu0 0.0
    %2820 = vmatpush1.msra.mxu0 0.0
    %2821 = vmatprep.subr.mxu0 0.0
    %2822 = vmatpush1.msra.mxu0 0.0
    %2823 = vmatprep.subr.mxu0 0.0
    %2824 = vmatpush1.msra.mxu0 0.0
    %2825 = vmatprep.subr.mxu0 0.0
    %2826 = vmatpush1.msra.mxu0 0.0
    %2827 = vmatprep.subr.mxu0 0.0
    %2828 = vmatpush1.msra.mxu0 0.0
    %2829 = vmatprep.subr.mxu0 0.0
    %2830 = vmatpush1.msra.mxu0 0.0
    %2831 = vmatprep.subr.mxu0 0.0
    %2832 = vmatpush1.msra.mxu0 0.0
    %2833 = vmatprep.subr.mxu0 0.0
    %2834 = vmatpush1.msra.mxu0 0.0
    %2835 = vmatprep.mubr.f32.mxu0 0.0
    %2836 = vmatmul.mubr.f32.gmra.mrb[0].mxu0 %v2769
    %v2837 = vpop.f32.mrb[0].mxu0
    %v2838 = vadd.f32 %v579, %v2837
    %v2839 = vpop.f32.mrb[0].mxu0
    %2840 = vdwg.mxu0
    %2842 = vrot.lane.b32.xlu0 %v2502, 64
    %v2843 = vpop.permute.xlu0 %2842
    %v2844 = vsel %vm56, %v2843, 0
    %2846 = vmatprep.subr.mxu0 0.0
    %2847 = vmatpush1.msra.mxu0 %v657
    %2848 = vmatprep.subr.mxu0 0.0
    %2849 = vmatpush1.msra.mxu0 %v658
    %2850 = vmatprep.subr.mxu0 0.0
    %2851 = vmatpush1.msra.mxu0 %v659
    %2852 = vmatprep.subr.mxu0 0.0
    %2853 = vmatpush1.msra.mxu0 %v660
    %2854 = vmatprep.subr.mxu0 0.0
    %2855 = vmatpush1.msra.mxu0 0.0
    %2856 = vmatprep.subr.mxu0 0.0
    %2857 = vmatpush1.msra.mxu0 0.0
    %2858 = vmatprep.subr.mxu0 0.0
    %2859 = vmatpush1.msra.mxu0 0.0
    %2860 = vmatprep.subr.mxu0 0.0
    %2861 = vmatpush1.msra.mxu0 0.0
    %2862 = vmatprep.subr.mxu0 0.0
    %2863 = vmatpush1.msra.mxu0 0.0
    %2864 = vmatprep.subr.mxu0 0.0
    %2865 = vmatpush1.msra.mxu0 0.0
    %2866 = vmatprep.subr.mxu0 0.0
    %2867 = vmatpush1.msra.mxu0 0.0
    %2868 = vmatprep.subr.mxu0 0.0
    %2869 = vmatpush1.msra.mxu0 0.0
    %2870 = vmatprep.subr.mxu0 0.0
    %2871 = vmatpush1.msra.mxu0 0.0
    %2872 = vmatprep.subr.mxu0 0.0
    %2873 = vmatpush1.msra.mxu0 0.0
    %2874 = vmatprep.subr.mxu0 0.0
    %2875 = vmatpush1.msra.mxu0 0.0
    %2876 = vmatprep.subr.mxu0 0.0
    %2877 = vmatpush1.msra.mxu0 0.0
    %2878 = vmatprep.subr.mxu0 0.0
    %2879 = vmatpush1.msra.mxu0 0.0
    %2880 = vmatprep.subr.mxu0 0.0
    %2881 = vmatpush1.msra.mxu0 0.0
    %2882 = vmatprep.subr.mxu0 0.0
    %2883 = vmatpush1.msra.mxu0 0.0
    %2884 = vmatprep.subr.mxu0 0.0
    %2885 = vmatpush1.msra.mxu0 0.0
    %2886 = vmatprep.subr.mxu0 0.0
    %2887 = vmatpush1.msra.mxu0 0.0
    %2888 = vmatprep.subr.mxu0 0.0
    %2889 = vmatpush1.msra.mxu0 0.0
    %2890 = vmatprep.subr.mxu0 0.0
    %2891 = vmatpush1.msra.mxu0 0.0
    %2892 = vmatprep.subr.mxu0 0.0
    %2893 = vmatpush1.msra.mxu0 0.0
    %2894 = vmatprep.subr.mxu0 0.0
    %2895 = vmatpush1.msra.mxu0 0.0
    %2896 = vmatprep.subr.mxu0 0.0
    %2897 = vmatpush1.msra.mxu0 0.0
    %2898 = vmatprep.subr.mxu0 0.0
    %2899 = vmatpush1.msra.mxu0 0.0
    %2900 = vmatprep.subr.mxu0 0.0
    %2901 = vmatpush1.msra.mxu0 0.0
    %2902 = vmatprep.subr.mxu0 0.0
    %2903 = vmatpush1.msra.mxu0 0.0
    %2904 = vmatprep.subr.mxu0 0.0
    %2905 = vmatpush1.msra.mxu0 0.0
    %2906 = vmatprep.subr.mxu0 0.0
    %2907 = vmatpush1.msra.mxu0 0.0
    %2908 = vmatprep.subr.mxu0 0.0
    %2909 = vmatpush1.msra.mxu0 0.0
    %2910 = vmatprep.mubr.f32.mxu0 0.0
    %2911 = vmatmul.mubr.f32.gmra.mrb[0].mxu0 %v2844
    %v2912 = vpop.f32.mrb[0].mxu0
    %v2913 = vadd.f32 %v2838, %v2912
    %v2914 = vpop.f32.mrb[0].mxu0
    %2915 = vdwg.mxu0
    %v2916 = vxor.u32 %v2913, 2147483648
    %v2917 = vmul.f32 %v2916, 1.442695
    %v2918 = vpow.pop %v2917
    %v2919 = vadd.f32 %v2918, 1.0
    %v2920 = vrcp.pop %v2919
    %v2921 = vmul.f32 1.0, %v2920
    %v2922 = vtanh.pop %v2913
    %v2923 = vmul.f32 %v2921, %v2496
    %2925 = vrot.lane.b32.xlu0 %v2922, 32
    %v2926 = vpop.permute.xlu0 %2925
    %v2928 = vmul.f32 %v2921, %v2926
    %2930 = vrot.lane.b32.xlu0 %v2928, 32
    %v2931 = vpop.permute.xlu0 %2930
    %v2933 = vadd.f32 %v2923, %v2931
    %v2934 = vtanh.pop %v2933
    %2936 = vrot.lane.b32.xlu0 %v2934, 32
    %v2937 = vpop.permute.xlu0 %2936
    %v2939 = vmul.f32 %v2921, %v2937
    %2941 = vrot.lane.b32.xlu0 %v2765, 64
    %v2942 = vpop.permute.xlu0 %2941
    %v2943 = vsel %vm56, %v2942, 0
    %2945 = vmatprep.subr.mxu0 0.0
    %2946 = vmatpush1.msra.mxu0 %v288
    %2947 = vmatprep.subr.mxu0 0.0
    %2948 = vmatpush1.msra.mxu0 %v289
    %2949 = vmatprep.subr.mxu0 0.0
    %2950 = vmatpush1.msra.mxu0 %v290
    %2951 = vmatprep.subr.mxu0 0.0
    %2952 = vmatpush1.msra.mxu0 %v291
    %2953 = vmatprep.subr.mxu0 0.0
    %2954 = vmatpush1.msra.mxu0 0.0
    %2955 = vmatprep.subr.mxu0 0.0
    %2956 = vmatpush1.msra.mxu0 0.0
    %2957 = vmatprep.subr.mxu0 0.0
    %2958 = vmatpush1.msra.mxu0 0.0
    %2959 = vmatprep.subr.mxu0 0.0
    %2960 = vmatpush1.msra.mxu0 0.0
    %2961 = vmatprep.subr.mxu0 0.0
    %2962 = vmatpush1.msra.mxu0 0.0
    %2963 = vmatprep.subr.mxu0 0.0
    %2964 = vmatpush1.msra.mxu0 0.0
    %2965 = vmatprep.subr.mxu0 0.0
    %2966 = vmatpush1.msra.mxu0 0.0
    %2967 = vmatprep.subr.mxu0 0.0
    %2968 = vmatpush1.msra.mxu0 0.0
    %2969 = vmatprep.subr.mxu0 0.0
    %2970 = vmatpush1.msra.mxu0 0.0
    %2971 = vmatprep.subr.mxu0 0.0
    %2972 = vmatpush1.msra.mxu0 0.0
    %2973 = vmatprep.subr.mxu0 0.0
    %2974 = vmatpush1.msra.mxu0 0.0
    %2975 = vmatprep.subr.mxu0 0.0
    %2976 = vmatpush1.msra.mxu0 0.0
    %2977 = vmatprep.subr.mxu0 0.0
    %2978 = vmatpush1.msra.mxu0 0.0
    %2979 = vmatprep.subr.mxu0 0.0
    %2980 = vmatpush1.msra.mxu0 0.0
    %2981 = vmatprep.subr.mxu0 0.0
    %2982 = vmatpush1.msra.mxu0 0.0
    %2983 = vmatprep.subr.mxu0 0.0
    %2984 = vmatpush1.msra.mxu0 0.0
    %2985 = vmatprep.subr.mxu0 0.0
    %2986 = vmatpush1.msra.mxu0 0.0
    %2987 = vmatprep.subr.mxu0 0.0
    %2988 = vmatpush1.msra.mxu0 0.0
    %2989 = vmatprep.subr.mxu0 0.0
    %2990 = vmatpush1.msra.mxu0 0.0
    %2991 = vmatprep.subr.mxu0 0.0
    %2992 = vmatpush1.msra.mxu0 0.0
    %2993 = vmatprep.subr.mxu0 0.0
    %2994 = vmatpush1.msra.mxu0 0.0
    %2995 = vmatprep.subr.mxu0 0.0
    %2996 = vmatpush1.msra.mxu0 0.0
    %2997 = vmatprep.subr.mxu0 0.0
    %2998 = vmatpush1.msra.mxu0 0.0
    %2999 = vmatprep.subr.mxu0 0.0
    %3000 = vmatpush1.msra.mxu0 0.0
    %3001 = vmatprep.subr.mxu0 0.0
    %3002 = vmatpush1.msra.mxu0 0.0
    %3003 = vmatprep.subr.mxu0 0.0
    %3004 = vmatpush1.msra.mxu0 0.0
    %3005 = vmatprep.subr.mxu0 0.0
    %3006 = vmatpush1.msra.mxu0 0.0
    %3007 = vmatprep.subr.mxu0 0.0
    %3008 = vmatpush1.msra.mxu0 0.0
    %3009 = vmatprep.mubr.f32.mxu0 0.0
    %3010 = vmatmul.mubr.f32.gmra.mrb[0].mxu0 %v2943
    %v3011 = vpop.f32.mrb[0].mxu0
    %v3012 = vadd.f32 %v298, %v3011
    %v3013 = vpop.f32.mrb[0].mxu0
    %3014 = vdwg.mxu0
    %3015 = vmatprep.subr.mxu0 0.0
    %3016 = vmatpush1.msra.mxu0 %v376
    %3017 = vmatprep.subr.mxu0 0.0
    %3018 = vmatpush1.msra.mxu0 %v377
    %3019 = vmatprep.subr.mxu0 0.0
    %3020 = vmatpush1.msra.mxu0 %v378
    %3021 = vmatprep.subr.mxu0 0.0
    %3022 = vmatpush1.msra.mxu0 %v379
    %3023 = vmatprep.subr.mxu0 0.0
    %3024 = vmatpush1.msra.mxu0 0.0
    %3025 = vmatprep.subr.mxu0 0.0
    %3026 = vmatpush1.msra.mxu0 0.0
    %3027 = vmatprep.subr.mxu0 0.0
    %3028 = vmatpush1.msra.mxu0 0.0
    %3029 = vmatprep.subr.mxu0 0.0
    %3030 = vmatpush1.msra.mxu0 0.0
    %3031 = vmatprep.subr.mxu0 0.0
    %3032 = vmatpush1.msra.mxu0 0.0
    %3033 = vmatprep.subr.mxu0 0.0
    %3034 = vmatpush1.msra.mxu0 0.0
    %3035 = vmatprep.subr.mxu0 0.0
    %3036 = vmatpush1.msra.mxu0 0.0
    %3037 = vmatprep.subr.mxu0 0.0
    %3038 = vmatpush1.msra.mxu0 0.0
    %3039 = vmatprep.subr.mxu0 0.0
    %3040 = vmatpush1.msra.mxu0 0.0
    %3041 = vmatprep.subr.mxu0 0.0
    %3042 = vmatpush1.msra.mxu0 0.0
    %3043 = vmatprep.subr.mxu0 0.0
    %3044 = vmatpush1.msra.mxu0 0.0
    %3045 = vmatprep.subr.mxu0 0.0
    %3046 = vmatpush1.msra.mxu0 0.0
    %3047 = vmatprep.subr.mxu0 0.0
    %3048 = vmatpush1.msra.mxu0 0.0
    %3049 = vmatprep.subr.mxu0 0.0
    %3050 = vmatpush1.msra.mxu0 0.0
    %3051 = vmatprep.subr.mxu0 0.0
    %3052 = vmatpush1.msra.mxu0 0.0
    %3053 = vmatprep.subr.mxu0 0.0
    %3054 = vmatpush1.msra.mxu0 0.0
    %3055 = vmatprep.subr.mxu0 0.0
    %3056 = vmatpush1.msra.mxu0 0.0
    %3057 = vmatprep.subr.mxu0 0.0
    %3058 = vmatpush1.msra.mxu0 0.0
    %3059 = vmatprep.subr.mxu0 0.0
    %3060 = vmatpush1.msra.mxu0 0.0
    %3061 = vmatprep.subr.mxu0 0.0
    %3062 = vmatpush1.msra.mxu0 0.0
    %3063 = vmatprep.subr.mxu0 0.0
    %3064 = vmatpush1.msra.mxu0 0.0
    %3065 = vmatprep.subr.mxu0 0.0
    %3066 = vmatpush1.msra.mxu0 0.0
    %3067 = vmatprep.subr.mxu0 0.0
    %3068 = vmatpush1.msra.mxu0 0.0
    %3069 = vmatprep.subr.mxu0 0.0
    %3070 = vmatpush1.msra.mxu0 0.0
    %3071 = vmatprep.subr.mxu0 0.0
    %3072 = vmatpush1.msra.mxu0 0.0
    %3073 = vmatprep.subr.mxu0 0.0
    %3074 = vmatpush1.msra.mxu0 0.0
    %3075 = vmatprep.subr.mxu0 0.0
    %3076 = vmatpush1.msra.mxu0 0.0
    %3077 = vmatprep.subr.mxu0 0.0
    %3078 = vmatpush1.msra.mxu0 0.0
    %3079 = vmatprep.mubr.f32.mxu0 0.0
    %3080 = vmatmul.mubr.f32.gmra.mrb[0].mxu0 %v2769
    %v3081 = vpop.f32.mrb[0].mxu0
    %v3082 = vadd.f32 %v3012, %v3081
    %v3083 = vpop.f32.mrb[0].mxu0
    %3084 = vdwg.mxu0
    %v3085 = vxor.u32 %v3082, 2147483648
    %v3086 = vmul.f32 %v3085, 1.442695
    %v3087 = vpow.pop %v3086
    %v3088 = vadd.f32 %v3087, 1.0
    %v3089 = vrcp.pop %v3088
    %v3090 = vmul.f32 1.0, %v3089
    %v3091 = vtanh.pop %v3082
    %v3092 = vmul.f32 %v3090, %v2665
    %3094 = vrot.lane.b32.xlu0 %v3091, 32
    %v3095 = vpop.permute.xlu0 %3094
    %v3097 = vmul.f32 %v3090, %v3095
    %3099 = vrot.lane.b32.xlu0 %v3097, 32
    %v3100 = vpop.permute.xlu0 %3099
    %v3102 = vadd.f32 %v3092, %v3100
    %v3103 = vtanh.pop %v3102
    %3105 = vrot.lane.b32.xlu0 %v3103, 32
    %v3106 = vpop.permute.xlu0 %3105
    %v3108 = vmul.f32 %v3090, %v3106
    %3109 = vmatprep.subr.mxu0 0.0
    %3110 = vmatpush1.msra.mxu0 %v186
    %3111 = vmatprep.subr.mxu0 0.0
    %3112 = vmatpush1.msra.mxu0 %v187
    %3113 = vmatprep.subr.mxu0 0.0
    %3114 = vmatpush1.msra.mxu0 %v188
    %3115 = vmatprep.subr.mxu0 0.0
    %3116 = vmatpush1.msra.mxu0 %v189
    %3117 = vmatprep.subr.mxu0 0.0
    %3118 = vmatpush1.msra.mxu0 0.0
    %3119 = vmatprep.subr.mxu0 0.0
    %3120 = vmatpush1.msra.mxu0 0.0
    %3121 = vmatprep.subr.mxu0 0.0
    %3122 = vmatpush1.msra.mxu0 0.0
    %3123 = vmatprep.subr.mxu0 0.0
    %3124 = vmatpush1.msra.mxu0 0.0
    %3125 = vmatprep.subr.mxu0 0.0
    %3126 = vmatpush1.msra.mxu0 0.0
    %3127 = vmatprep.subr.mxu0 0.0
    %3128 = vmatpush1.msra.mxu0 0.0
    %3129 = vmatprep.subr.mxu0 0.0
    %3130 = vmatpush1.msra.mxu0 0.0
    %3131 = vmatprep.subr.mxu0 0.0
    %3132 = vmatpush1.msra.mxu0 0.0
    %3133 = vmatprep.subr.mxu0 0.0
    %3134 = vmatpush1.msra.mxu0 0.0
    %3135 = vmatprep.subr.mxu0 0.0
    %3136 = vmatpush1.msra.mxu0 0.0
    %3137 = vmatprep.subr.mxu0 0.0
    %3138 = vmatpush1.msra.mxu0 0.0
    %3139 = vmatprep.subr.mxu0 0.0
    %3140 = vmatpush1.msra.mxu0 0.0
    %3141 = vmatprep.subr.mxu0 0.0
    %3142 = vmatpush1.msra.mxu0 0.0
    %3143 = vmatprep.subr.mxu0 0.0
    %3144 = vmatpush1.msra.mxu0 0.0
    %3145 = vmatprep.subr.mxu0 0.0
    %3146 = vmatpush1.msra.mxu0 0.0
    %3147 = vmatprep.subr.mxu0 0.0
    %3148 = vmatpush1.msra.mxu0 0.0
    %3149 = vmatprep.subr.mxu0 0.0
    %3150 = vmatpush1.msra.mxu0 0.0
    %3151 = vmatprep.subr.mxu0 0.0
    %3152 = vmatpush1.msra.mxu0 0.0
    %3153 = vmatprep.subr.mxu0 0.0
    %3154 = vmatpush1.msra.mxu0 0.0
    %3155 = vmatprep.subr.mxu0 0.0
    %3156 = vmatpush1.msra.mxu0 0.0
    %3157 = vmatprep.subr.mxu0 0.0
    %3158 = vmatpush1.msra.mxu0 0.0
    %3159 = vmatprep.subr.mxu0 0.0
    %3160 = vmatpush1.msra.mxu0 0.0
    %3161 = vmatprep.subr.mxu0 0.0
    %3162 = vmatpush1.msra.mxu0 0.0
    %3163 = vmatprep.subr.mxu0 0.0
    %3164 = vmatpush1.msra.mxu0 0.0
    %3165 = vmatprep.subr.mxu0 0.0
    %3166 = vmatpush1.msra.mxu0 0.0
    %3167 = vmatprep.subr.mxu0 0.0
    %3168 = vmatpush1.msra.mxu0 0.0
    %3169 = vmatprep.subr.mxu0 0.0
    %3170 = vmatpush1.msra.mxu0 0.0
    %3171 = vmatprep.subr.mxu0 0.0
    %3172 = vmatpush1.msra.mxu0 0.0
    %3173 = vmatprep.mubr.f32.mxu0 0.0
    %3174 = vmatmul.mubr.f32.gmra.mrb[0].mxu0 %v2943
    %v3175 = vpop.f32.mrb[0].mxu0
    %v3176 = vadd.f32 %v183, %v3175
    %v3177 = vpop.f32.mrb[0].mxu0
    %3178 = vdwg.mxu0
    %v3179 = vxor.u32 %v3176, 2147483648
    %v3180 = vmul.f32 %v3179, 1.442695
    %v3181 = vpow.pop %v3180
    %v3182 = vadd.f32 %v3181, 1.0
    %v3183 = vrcp.pop %v3182
    %v3184 = vmul.f32 1.0, %v3183
    %v3185 = vtanh.pop %v3176
    %v3186 = vmul.f32 %v3184, %v2759
    %3188 = vrot.lane.b32.xlu0 %v3185, 32
    %v3189 = vpop.permute.xlu0 %3188
    %v3191 = vmul.f32 %v3184, %v3189
    %3193 = vrot.lane.b32.xlu0 %v3191, 32
    %v3194 = vpop.permute.xlu0 %3193
    %v3196 = vadd.f32 %v3186, %v3194
    %v3197 = vtanh.pop %v3196
    %3199 = vrot.lane.b32.xlu0 %v3197, 32
    %v3200 = vpop.permute.xlu0 %3199
    %v3202 = vmul.f32 %v3184, %v3200
    %3204 = vrot.lane.b32.xlu0 %v3108, 64
    %v3205 = vpop.permute.xlu0 %3204
    %v3206 = vsel %vm56, %v3205, 0
    %3208 = vmatprep.subr.mxu0 0.0
    %3209 = vmatpush1.msra.mxu0 %v569
    %3210 = vmatprep.subr.mxu0 0.0
    %3211 = vmatpush1.msra.mxu0 %v570
    %3212 = vmatprep.subr.mxu0 0.0
    %3213 = vmatpush1.msra.mxu0 %v571
    %3214 = vmatprep.subr.mxu0 0.0
    %3215 = vmatpush1.msra.mxu0 %v572
    %3216 = vmatprep.subr.mxu0 0.0
    %3217 = vmatpush1.msra.mxu0 0.0
    %3218 = vmatprep.subr.mxu0 0.0
    %3219 = vmatpush1.msra.mxu0 0.0
    %3220 = vmatprep.subr.mxu0 0.0
    %3221 = vmatpush1.msra.mxu0 0.0
    %3222 = vmatprep.subr.mxu0 0.0
    %3223 = vmatpush1.msra.mxu0 0.0
    %3224 = vmatprep.subr.mxu0 0.0
    %3225 = vmatpush1.msra.mxu0 0.0
    %3226 = vmatprep.subr.mxu0 0.0
    %3227 = vmatpush1.msra.mxu0 0.0
    %3228 = vmatprep.subr.mxu0 0.0
    %3229 = vmatpush1.msra.mxu0 0.0
    %3230 = vmatprep.subr.mxu0 0.0
    %3231 = vmatpush1.msra.mxu0 0.0
    %3232 = vmatprep.subr.mxu0 0.0
    %3233 = vmatpush1.msra.mxu0 0.0
    %3234 = vmatprep.subr.mxu0 0.0
    %3235 = vmatpush1.msra.mxu0 0.0
    %3236 = vmatprep.subr.mxu0 0.0
    %3237 = vmatpush1.msra.mxu0 0.0
    %3238 = vmatprep.subr.mxu0 0.0
    %3239 = vmatpush1.msra.mxu0 0.0
    %3240 = vmatprep.subr.mxu0 0.0
    %3241 = vmatpush1.msra.mxu0 0.0
    %3242 = vmatprep.subr.mxu0 0.0
    %3243 = vmatpush1.msra.mxu0 0.0
    %3244 = vmatprep.subr.mxu0 0.0
    %3245 = vmatpush1.msra.mxu0 0.0
    %3246 = vmatprep.subr.mxu0 0.0
    %3247 = vmatpush1.msra.mxu0 0.0
    %3248 = vmatprep.subr.mxu0 0.0
    %3249 = vmatpush1.msra.mxu0 0.0
    %3250 = vmatprep.subr.mxu0 0.0
    %3251 = vmatpush1.msra.mxu0 0.0
    %3252 = vmatprep.subr.mxu0 0.0
    %3253 = vmatpush1.msra.mxu0 0.0
    %3254 = vmatprep.subr.mxu0 0.0
    %3255 = vmatpush1.msra.mxu0 0.0
    %3256 = vmatprep.subr.mxu0 0.0
    %3257 = vmatpush1.msra.mxu0 0.0
    %3258 = vmatprep.subr.mxu0 0.0
    %3259 = vmatpush1.msra.mxu0 0.0
    %3260 = vmatprep.subr.mxu0 0.0
    %3261 = vmatpush1.msra.mxu0 0.0
    %3262 = vmatprep.subr.mxu0 0.0
    %3263 = vmatpush1.msra.mxu0 0.0
    %3264 = vmatprep.subr.mxu0 0.0
    %3265 = vmatpush1.msra.mxu0 0.0
    %3266 = vmatprep.subr.mxu0 0.0
    %3267 = vmatpush1.msra.mxu0 0.0
    %3268 = vmatprep.subr.mxu0 0.0
    %3269 = vmatpush1.msra.mxu0 0.0
    %3270 = vmatprep.subr.mxu0 0.0
    %3271 = vmatpush1.msra.mxu0 0.0
    %3272 = vmatprep.mubr.f32.mxu0 0.0
    %3273 = vmatmul.mubr.f32.gmra.mrb[0].mxu0 %v3206
    %v3274 = vpop.f32.mrb[0].mxu0
    %v3275 = vadd.f32 %v579, %v3274
    %v3276 = vpop.f32.mrb[0].mxu0
    %3277 = vdwg.mxu0
    %3279 = vrot.lane.b32.xlu0 %v2939, 64
    %v3280 = vpop.permute.xlu0 %3279
    %v3281 = vsel %vm56, %v3280, 0
    %3283 = vmatprep.subr.mxu0 0.0
    %3284 = vmatpush1.msra.mxu0 %v657
    %3285 = vmatprep.subr.mxu0 0.0
    %3286 = vmatpush1.msra.mxu0 %v658
    %3287 = vmatprep.subr.mxu0 0.0
    %3288 = vmatpush1.msra.mxu0 %v659
    %3289 = vmatprep.subr.mxu0 0.0
    %3290 = vmatpush1.msra.mxu0 %v660
    %3291 = vmatprep.subr.mxu0 0.0
    %3292 = vmatpush1.msra.mxu0 0.0
    %3293 = vmatprep.subr.mxu0 0.0
    %3294 = vmatpush1.msra.mxu0 0.0
    %3295 = vmatprep.subr.mxu0 0.0
    %3296 = vmatpush1.msra.mxu0 0.0
    %3297 = vmatprep.subr.mxu0 0.0
    %3298 = vmatpush1.msra.mxu0 0.0
    %3299 = vmatprep.subr.mxu0 0.0
    %3300 = vmatpush1.msra.mxu0 0.0
    %3301 = vmatprep.subr.mxu0 0.0
    %3302 = vmatpush1.msra.mxu0 0.0
    %3303 = vmatprep.subr.mxu0 0.0
    %3304 = vmatpush1.msra.mxu0 0.0
    %3305 = vmatprep.subr.mxu0 0.0
    %3306 = vmatpush1.msra.mxu0 0.0
    %3307 = vmatprep.subr.mxu0 0.0
    %3308 = vmatpush1.msra.mxu0 0.0
    %3309 = vmatprep.subr.mxu0 0.0
    %3310 = vmatpush1.msra.mxu0 0.0
    %3311 = vmatprep.subr.mxu0 0.0
    %3312 = vmatpush1.msra.mxu0 0.0
    %3313 = vmatprep.subr.mxu0 0.0
    %3314 = vmatpush1.msra.mxu0 0.0
    %3315 = vmatprep.subr.mxu0 0.0
    %3316 = vmatpush1.msra.mxu0 0.0
    %3317 = vmatprep.subr.mxu0 0.0
    %3318 = vmatpush1.msra.mxu0 0.0
    %3319 = vmatprep.subr.mxu0 0.0
    %3320 = vmatpush1.msra.mxu0 0.0
    %3321 = vmatprep.subr.mxu0 0.0
    %3322 = vmatpush1.msra.mxu0 0.0
    %3323 = vmatprep.subr.mxu0 0.0
    %3324 = vmatpush1.msra.mxu0 0.0
    %3325 = vmatprep.subr.mxu0 0.0
    %3326 = vmatpush1.msra.mxu0 0.0
    %3327 = vmatprep.subr.mxu0 0.0
    %3328 = vmatpush1.msra.mxu0 0.0
    %3329 = vmatprep.subr.mxu0 0.0
    %3330 = vmatpush1.msra.mxu0 0.0
    %3331 = vmatprep.subr.mxu0 0.0
    %3332 = vmatpush1.msra.mxu0 0.0
    %3333 = vmatprep.subr.mxu0 0.0
    %3334 = vmatpush1.msra.mxu0 0.0
    %3335 = vmatprep.subr.mxu0 0.0
    %3336 = vmatpush1.msra.mxu0 0.0
    %3337 = vmatprep.subr.mxu0 0.0
    %3338 = vmatpush1.msra.mxu0 0.0
    %3339 = vmatprep.subr.mxu0 0.0
    %3340 = vmatpush1.msra.mxu0 0.0
    %3341 = vmatprep.subr.mxu0 0.0
    %3342 = vmatpush1.msra.mxu0 0.0
    %3343 = vmatprep.subr.mxu0 0.0
    %3344 = vmatpush1.msra.mxu0 0.0
    %3345 = vmatprep.subr.mxu0 0.0
    %3346 = vmatpush1.msra.mxu0 0.0
    %3347 = vmatprep.mubr.f32.mxu0 0.0
    %3348 = vmatmul.mubr.f32.gmra.mrb[0].mxu0 %v3281
    %v3349 = vpop.f32.mrb[0].mxu0
    %v3350 = vadd.f32 %v3275, %v3349
    %v3351 = vpop.f32.mrb[0].mxu0
    %3352 = vdwg.mxu0
    %v3353 = vxor.u32 %v3350, 2147483648
    %v3354 = vmul.f32 %v3353, 1.442695
    %v3355 = vpow.pop %v3354
    %v3356 = vadd.f32 %v3355, 1.0
    %v3357 = vrcp.pop %v3356
    %v3358 = vmul.f32 1.0, %v3357
    %v3359 = vtanh.pop %v3350
    %v3360 = vmul.f32 %v3358, %v2933
    %3362 = vrot.lane.b32.xlu0 %v3359, 32
    %v3363 = vpop.permute.xlu0 %3362
    %v3365 = vmul.f32 %v3358, %v3363
    %3367 = vrot.lane.b32.xlu0 %v3365, 32
    %v3368 = vpop.permute.xlu0 %3367
    %v3370 = vadd.f32 %v3360, %v3368
    %v3371 = vtanh.pop %v3370
    %3373 = vrot.lane.b32.xlu0 %v3371, 32
    %v3374 = vpop.permute.xlu0 %3373
    %v3376 = vmul.f32 %v3358, %v3374
    %3378 = vrot.lane.b32.xlu0 %v3202, 64
    %v3379 = vpop.permute.xlu0 %3378
    %v3380 = vsel %vm56, %v3379, 0
    %3382 = vmatprep.subr.mxu0 0.0
    %3383 = vmatpush1.msra.mxu0 %v288
    %3384 = vmatprep.subr.mxu0 0.0
    %3385 = vmatpush1.msra.mxu0 %v289
    %3386 = vmatprep.subr.mxu0 0.0
    %3387 = vmatpush1.msra.mxu0 %v290
    %3388 = vmatprep.subr.mxu0 0.0
    %3389 = vmatpush1.msra.mxu0 %v291
    %3390 = vmatprep.subr.mxu0 0.0
    %3391 = vmatpush1.msra.mxu0 0.0
    %3392 = vmatprep.subr.mxu0 0.0
    %3393 = vmatpush1.msra.mxu0 0.0
    %3394 = vmatprep.subr.mxu0 0.0
    %3395 = vmatpush1.msra.mxu0 0.0
    %3396 = vmatprep.subr.mxu0 0.0
    %3397 = vmatpush1.msra.mxu0 0.0
    %3398 = vmatprep.subr.mxu0 0.0
    %3399 = vmatpush1.msra.mxu0 0.0
    %3400 = vmatprep.subr.mxu0 0.0
    %3401 = vmatpush1.msra.mxu0 0.0
    %3402 = vmatprep.subr.mxu0 0.0
    %3403 = vmatpush1.msra.mxu0 0.0
    %3404 = vmatprep.subr.mxu0 0.0
    %3405 = vmatpush1.msra.mxu0 0.0
    %3406 = vmatprep.subr.mxu0 0.0
    %3407 = vmatpush1.msra.mxu0 0.0
    %3408 = vmatprep.subr.mxu0 0.0
    %3409 = vmatpush1.msra.mxu0 0.0
    %3410 = vmatprep.subr.mxu0 0.0
    %3411 = vmatpush1.msra.mxu0 0.0
    %3412 = vmatprep.subr.mxu0 0.0
    %3413 = vmatpush1.msra.mxu0 0.0
    %3414 = vmatprep.subr.mxu0 0.0
    %3415 = vmatpush1.msra.mxu0 0.0
    %3416 = vmatprep.subr.mxu0 0.0
    %3417 = vmatpush1.msra.mxu0 0.0
    %3418 = vmatprep.subr.mxu0 0.0
    %3419 = vmatpush1.msra.mxu0 0.0
    %3420 = vmatprep.subr.mxu0 0.0
    %3421 = vmatpush1.msra.mxu0 0.0
    %3422 = vmatprep.subr.mxu0 0.0
    %3423 = vmatpush1.msra.mxu0 0.0
    %3424 = vmatprep.subr.mxu0 0.0
    %3425 = vmatpush1.msra.mxu0 0.0
    %3426 = vmatprep.subr.mxu0 0.0
    %3427 = vmatpush1.msra.mxu0 0.0
    %3428 = vmatprep.subr.mxu0 0.0
    %3429 = vmatpush1.msra.mxu0 0.0
    %3430 = vmatprep.subr.mxu0 0.0
    %3431 = vmatpush1.msra.mxu0 0.0
    %3432 = vmatprep.subr.mxu0 0.0
    %3433 = vmatpush1.msra.mxu0 0.0
    %3434 = vmatprep.subr.mxu0 0.0
    %3435 = vmatpush1.msra.mxu0 0.0
    %3436 = vmatprep.subr.mxu0 0.0
    %3437 = vmatpush1.msra.mxu0 0.0
    %3438 = vmatprep.subr.mxu0 0.0
    %3439 = vmatpush1.msra.mxu0 0.0
    %3440 = vmatprep.subr.mxu0 0.0
    %3441 = vmatpush1.msra.mxu0 0.0
    %3442 = vmatprep.subr.mxu0 0.0
    %3443 = vmatpush1.msra.mxu0 0.0
    %3444 = vmatprep.subr.mxu0 0.0
    %3445 = vmatpush1.msra.mxu0 0.0
    %3446 = vmatprep.mubr.f32.mxu0 0.0
    %3447 = vmatmul.mubr.f32.gmra.mrb[0].mxu0 %v3380
    %v3448 = vpop.f32.mrb[0].mxu0
    %v3449 = vadd.f32 %v298, %v3448
    %v3450 = vpop.f32.mrb[0].mxu0
    %3451 = vdwg.mxu0
    %3452 = vmatprep.subr.mxu0 0.0
    %3453 = vmatpush1.msra.mxu0 %v376
    %3454 = vmatprep.subr.mxu0 0.0
    %3455 = vmatpush1.msra.mxu0 %v377
    %3456 = vmatprep.subr.mxu0 0.0
    %3457 = vmatpush1.msra.mxu0 %v378
    %3458 = vmatprep.subr.mxu0 0.0
    %3459 = vmatpush1.msra.mxu0 %v379
    %3460 = vmatprep.subr.mxu0 0.0
    %3461 = vmatpush1.msra.mxu0 0.0
    %3462 = vmatprep.subr.mxu0 0.0
    %3463 = vmatpush1.msra.mxu0 0.0
    %3464 = vmatprep.subr.mxu0 0.0
    %3465 = vmatpush1.msra.mxu0 0.0
    %3466 = vmatprep.subr.mxu0 0.0
    %3467 = vmatpush1.msra.mxu0 0.0
    %3468 = vmatprep.subr.mxu0 0.0
    %3469 = vmatpush1.msra.mxu0 0.0
    %3470 = vmatprep.subr.mxu0 0.0
    %3471 = vmatpush1.msra.mxu0 0.0
    %3472 = vmatprep.subr.mxu0 0.0
    %3473 = vmatpush1.msra.mxu0 0.0
    %3474 = vmatprep.subr.mxu0 0.0
    %3475 = vmatpush1.msra.mxu0 0.0
    %3476 = vmatprep.subr.mxu0 0.0
    %3477 = vmatpush1.msra.mxu0 0.0
    %3478 = vmatprep.subr.mxu0 0.0
    %3479 = vmatpush1.msra.mxu0 0.0
    %3480 = vmatprep.subr.mxu0 0.0
    %3481 = vmatpush1.msra.mxu0 0.0
    %3482 = vmatprep.subr.mxu0 0.0
    %3483 = vmatpush1.msra.mxu0 0.0
    %3484 = vmatprep.subr.mxu0 0.0
    %3485 = vmatpush1.msra.mxu0 0.0
    %3486 = vmatprep.subr.mxu0 0.0
    %3487 = vmatpush1.msra.mxu0 0.0
    %3488 = vmatprep.subr.mxu0 0.0
    %3489 = vmatpush1.msra.mxu0 0.0
    %3490 = vmatprep.subr.mxu0 0.0
    %3491 = vmatpush1.msra.mxu0 0.0
    %3492 = vmatprep.subr.mxu0 0.0
    %3493 = vmatpush1.msra.mxu0 0.0
    %3494 = vmatprep.subr.mxu0 0.0
    %3495 = vmatpush1.msra.mxu0 0.0
    %3496 = vmatprep.subr.mxu0 0.0
    %3497 = vmatpush1.msra.mxu0 0.0
    %3498 = vmatprep.subr.mxu0 0.0
    %3499 = vmatpush1.msra.mxu0 0.0
    %3500 = vmatprep.subr.mxu0 0.0
    %3501 = vmatpush1.msra.mxu0 0.0
    %3502 = vmatprep.subr.mxu0 0.0
    %3503 = vmatpush1.msra.mxu0 0.0
    %3504 = vmatprep.subr.mxu0 0.0
    %3505 = vmatpush1.msra.mxu0 0.0
    %3506 = vmatprep.subr.mxu0 0.0
    %3507 = vmatpush1.msra.mxu0 0.0
    %3508 = vmatprep.subr.mxu0 0.0
    %3509 = vmatpush1.msra.mxu0 0.0
    %3510 = vmatprep.subr.mxu0 0.0
    %3511 = vmatpush1.msra.mxu0 0.0
    %3512 = vmatprep.subr.mxu0 0.0
    %3513 = vmatpush1.msra.mxu0 0.0
    %3514 = vmatprep.subr.mxu0 0.0
    %3515 = vmatpush1.msra.mxu0 0.0
    %3516 = vmatprep.mubr.f32.mxu0 0.0
    %3517 = vmatmul.mubr.f32.gmra.mrb[0].mxu0 %v3206
    %v3518 = vpop.f32.mrb[0].mxu0
    %v3519 = vadd.f32 %v3449, %v3518
    %v3520 = vpop.f32.mrb[0].mxu0
    %3521 = vdwg.mxu0
    %v3522 = vxor.u32 %v3519, 2147483648
    %v3523 = vmul.f32 %v3522, 1.442695
    %v3524 = vpow.pop %v3523
    %v3525 = vadd.f32 %v3524, 1.0
    %v3526 = vrcp.pop %v3525
    %v3527 = vmul.f32 1.0, %v3526
    %v3528 = vtanh.pop %v3519
    %v3529 = vmul.f32 %v3527, %v3102
    %3531 = vrot.lane.b32.xlu0 %v3528, 32
    %v3532 = vpop.permute.xlu0 %3531
    %v3534 = vmul.f32 %v3527, %v3532
    %3536 = vrot.lane.b32.xlu0 %v3534, 32
    %v3537 = vpop.permute.xlu0 %3536
    %v3539 = vadd.f32 %v3529, %v3537
    %v3540 = vtanh.pop %v3539
    %3542 = vrot.lane.b32.xlu0 %v3540, 32
    %v3543 = vpop.permute.xlu0 %3542
    %v3545 = vmul.f32 %v3527, %v3543
    %3547 = vrot.lane.b32.xlu0 %v3545, 64
    %v3548 = vpop.permute.xlu0 %3547
    %v3549 = vsel %vm56, %v3548, 0
    %3551 = vmatprep.subr.mxu0 0.0
    %3552 = vmatpush1.msra.mxu0 %v569
    %3553 = vmatprep.subr.mxu0 0.0
    %3554 = vmatpush1.msra.mxu0 %v570
    %3555 = vmatprep.subr.mxu0 0.0
    %3556 = vmatpush1.msra.mxu0 %v571
    %3557 = vmatprep.subr.mxu0 0.0
    %3558 = vmatpush1.msra.mxu0 %v572
    %3559 = vmatprep.subr.mxu0 0.0
    %3560 = vmatpush1.msra.mxu0 0.0
    %3561 = vmatprep.subr.mxu0 0.0
    %3562 = vmatpush1.msra.mxu0 0.0
    %3563 = vmatprep.subr.mxu0 0.0
    %3564 = vmatpush1.msra.mxu0 0.0
    %3565 = vmatprep.subr.mxu0 0.0
    %3566 = vmatpush1.msra.mxu0 0.0
    %3567 = vmatprep.subr.mxu0 0.0
    %3568 = vmatpush1.msra.mxu0 0.0
    %3569 = vmatprep.subr.mxu0 0.0
    %3570 = vmatpush1.msra.mxu0 0.0
    %3571 = vmatprep.subr.mxu0 0.0
    %3572 = vmatpush1.msra.mxu0 0.0
    %3573 = vmatprep.subr.mxu0 0.0
    %3574 = vmatpush1.msra.mxu0 0.0
    %3575 = vmatprep.subr.mxu0 0.0
    %3576 = vmatpush1.msra.mxu0 0.0
    %3577 = vmatprep.subr.mxu0 0.0
    %3578 = vmatpush1.msra.mxu0 0.0
    %3579 = vmatprep.subr.mxu0 0.0
    %3580 = vmatpush1.msra.mxu0 0.0
    %3581 = vmatprep.subr.mxu0 0.0
    %3582 = vmatpush1.msra.mxu0 0.0
    %3583 = vmatprep.subr.mxu0 0.0
    %3584 = vmatpush1.msra.mxu0 0.0
    %3585 = vmatprep.subr.mxu0 0.0
    %3586 = vmatpush1.msra.mxu0 0.0
    %3587 = vmatprep.subr.mxu0 0.0
    %3588 = vmatpush1.msra.mxu0 0.0
    %3589 = vmatprep.subr.mxu0 0.0
    %3590 = vmatpush1.msra.mxu0 0.0
    %3591 = vmatprep.subr.mxu0 0.0
    %3592 = vmatpush1.msra.mxu0 0.0
    %3593 = vmatprep.subr.mxu0 0.0
    %3594 = vmatpush1.msra.mxu0 0.0
    %3595 = vmatprep.subr.mxu0 0.0
    %3596 = vmatpush1.msra.mxu0 0.0
    %3597 = vmatprep.subr.mxu0 0.0
    %3598 = vmatpush1.msra.mxu0 0.0
    %3599 = vmatprep.subr.mxu0 0.0
    %3600 = vmatpush1.msra.mxu0 0.0
    %3601 = vmatprep.subr.mxu0 0.0
    %3602 = vmatpush1.msra.mxu0 0.0
    %3603 = vmatprep.subr.mxu0 0.0
    %3604 = vmatpush1.msra.mxu0 0.0
    %3605 = vmatprep.subr.mxu0 0.0
    %3606 = vmatpush1.msra.mxu0 0.0
    %3607 = vmatprep.subr.mxu0 0.0
    %3608 = vmatpush1.msra.mxu0 0.0
    %3609 = vmatprep.subr.mxu0 0.0
    %3610 = vmatpush1.msra.mxu0 0.0
    %3611 = vmatprep.subr.mxu0 0.0
    %3612 = vmatpush1.msra.mxu0 0.0
    %3613 = vmatprep.subr.mxu0 0.0
    %3614 = vmatpush1.msra.mxu0 0.0
    %3615 = vmatprep.mubr.f32.mxu0 0.0
    %3616 = vmatmul.mubr.f32.gmra.mrb[0].mxu0 %v3549
    %v3617 = vpop.f32.mrb[0].mxu0
    %v3618 = vadd.f32 %v579, %v3617
    %v3619 = vpop.f32.mrb[0].mxu0
    %3620 = vdwg.mxu0
    %3622 = vrot.lane.b32.xlu0 %v3376, 64
    %v3623 = vpop.permute.xlu0 %3622
    %v3624 = vsel %vm56, %v3623, 0
    %3626 = vmatprep.subr.mxu0 0.0
    %3627 = vmatpush1.msra.mxu0 %v657
    %3628 = vmatprep.subr.mxu0 0.0
    %3629 = vmatpush1.msra.mxu0 %v658
    %3630 = vmatprep.subr.mxu0 0.0
    %3631 = vmatpush1.msra.mxu0 %v659
    %3632 = vmatprep.subr.mxu0 0.0
    %3633 = vmatpush1.msra.mxu0 %v660
    %3634 = vmatprep.subr.mxu0 0.0
    %3635 = vmatpush1.msra.mxu0 0.0
    %3636 = vmatprep.subr.mxu0 0.0
    %3637 = vmatpush1.msra.mxu0 0.0
    %3638 = vmatprep.subr.mxu0 0.0
    %3639 = vmatpush1.msra.mxu0 0.0
    %3640 = vmatprep.subr.mxu0 0.0
    %3641 = vmatpush1.msra.mxu0 0.0
    %3642 = vmatprep.subr.mxu0 0.0
    %3643 = vmatpush1.msra.mxu0 0.0
    %3644 = vmatprep.subr.mxu0 0.0
    %3645 = vmatpush1.msra.mxu0 0.0
    %3646 = vmatprep.subr.mxu0 0.0
    %3647 = vmatpush1.msra.mxu0 0.0
    %3648 = vmatprep.subr.mxu0 0.0
    %3649 = vmatpush1.msra.mxu0 0.0
    %3650 = vmatprep.subr.mxu0 0.0
    %3651 = vmatpush1.msra.mxu0 0.0
    %3652 = vmatprep.subr.mxu0 0.0
    %3653 = vmatpush1.msra.mxu0 0.0
    %3654 = vmatprep.subr.mxu0 0.0
    %3655 = vmatpush1.msra.mxu0 0.0
    %3656 = vmatprep.subr.mxu0 0.0
    %3657 = vmatpush1.msra.mxu0 0.0
    %3658 = vmatprep.subr.mxu0 0.0
    %3659 = vmatpush1.msra.mxu0 0.0
    %3660 = vmatprep.subr.mxu0 0.0
    %3661 = vmatpush1.msra.mxu0 0.0
    %3662 = vmatprep.subr.mxu0 0.0
    %3663 = vmatpush1.msra.mxu0 0.0
    %3664 = vmatprep.subr.mxu0 0.0
    %3665 = vmatpush1.msra.mxu0 0.0
    %3666 = vmatprep.subr.mxu0 0.0
    %3667 = vmatpush1.msra.mxu0 0.0
    %3668 = vmatprep.subr.mxu0 0.0
    %3669 = vmatpush1.msra.mxu0 0.0
    %3670 = vmatprep.subr.mxu0 0.0
    %3671 = vmatpush1.msra.mxu0 0.0
    %3672 = vmatprep.subr.mxu0 0.0
    %3673 = vmatpush1.msra.mxu0 0.0
    %3674 = vmatprep.subr.mxu0 0.0
    %3675 = vmatpush1.msra.mxu0 0.0
    %3676 = vmatprep.subr.mxu0 0.0
    %3677 = vmatpush1.msra.mxu0 0.0
    %3678 = vmatprep.subr.mxu0 0.0
    %3679 = vmatpush1.msra.mxu0 0.0
    %3680 = vmatprep.subr.mxu0 0.0
    %3681 = vmatpush1.msra.mxu0 0.0
    %3682 = vmatprep.subr.mxu0 0.0
    %3683 = vmatpush1.msra.mxu0 0.0
    %3684 = vmatprep.subr.mxu0 0.0
    %3685 = vmatpush1.msra.mxu0 0.0
    %3686 = vmatprep.subr.mxu0 0.0
    %3687 = vmatpush1.msra.mxu0 0.0
    %3688 = vmatprep.subr.mxu0 0.0
    %3689 = vmatpush1.msra.mxu0 0.0
    %3690 = vmatprep.mubr.f32.mxu0 0.0
    %3691 = vmatmul.mubr.f32.gmra.mrb[0].mxu0 %v3624
    %v3692 = vpop.f32.mrb[0].mxu0
    %v3693 = vadd.f32 %v3618, %v3692
    %v3694 = vpop.f32.mrb[0].mxu0
    %3695 = vdwg.mxu0
    %v3696 = vxor.u32 %v3693, 2147483648
    %v3697 = vmul.f32 %v3696, 1.442695
    %v3698 = vpow.pop %v3697
    %v3699 = vadd.f32 %v3698, 1.0
    %v3700 = vrcp.pop %v3699
    %v3701 = vmul.f32 1.0, %v3700
    %v3702 = vtanh.pop %v3693
    %v3703 = vmul.f32 %v3701, %v3370
    %3705 = vrot.lane.b32.xlu0 %v3702, 32
    %v3706 = vpop.permute.xlu0 %3705
    %v3708 = vmul.f32 %v3701, %v3706
    %3710 = vrot.lane.b32.xlu0 %v3708, 32
    %v3711 = vpop.permute.xlu0 %3710
    %v3713 = vadd.f32 %v3703, %v3711
    %v3714 = vtanh.pop %v3713
    %3716 = vrot.lane.b32.xlu0 %v3714, 32
    %v3717 = vpop.permute.xlu0 %3716
    %v3719 = vmul.f32 %v3701, %v3717
    %v3720 = vld [vmem:[%s4] sm:$0xff]
    %v3721 = vld [vmem:[%s4 + $0x8] sm:$0xff]
    %v3722 = vld [vmem:[%s4 + $0x10] sm:$0xff]
    %v3723 = vld [vmem:[%s4 + $0x18] sm:$0xff]
    %v3724 = vld [vmem:[%s5] sm:$0x1]
    %v3726 = vlaneseq
    %v3727 = vshrl.u32 %v3726, 7
    %v3728 = vsub.s32 0, %v3727
    %v3729 = vrot.slane %v3724, %v3728
    %3732 = vrot.lane.b32.xlu0 %v3719, 64
    %v3733 = vpop.permute.xlu0 %3732
    %v3734 = vsel %vm56, %v3733, 0
    %3736 = vmatprep.subr.mxu0 0.0
    %3737 = vmatpush1.msra.mxu0 %v3720
    %3738 = vmatprep.subr.mxu0 0.0
    %3739 = vmatpush1.msra.mxu0 %v3721
    %3740 = vmatprep.subr.mxu0 0.0
    %3741 = vmatpush1.msra.mxu0 %v3722
    %3742 = vmatprep.subr.mxu0 0.0
    %3743 = vmatpush1.msra.mxu0 %v3723
    %3744 = vmatprep.subr.mxu0 0.0
    %3745 = vmatpush1.msra.mxu0 0.0
    %3746 = vmatprep.subr.mxu0 0.0
    %3747 = vmatpush1.msra.mxu0 0.0
    %3748 = vmatprep.subr.mxu0 0.0
    %3749 = vmatpush1.msra.mxu0 0.0
    %3750 = vmatprep.subr.mxu0 0.0
    %3751 = vmatpush1.msra.mxu0 0.0
    %3752 = vmatprep.subr.mxu0 0.0
    %3753 = vmatpush1.msra.mxu0 0.0
    %3754 = vmatprep.subr.mxu0 0.0
    %3755 = vmatpush1.msra.mxu0 0.0
    %3756 = vmatprep.subr.mxu0 0.0
    %3757 = vmatpush1.msra.mxu0 0.0
    %3758 = vmatprep.subr.mxu0 0.0
    %3759 = vmatpush1.msra.mxu0 0.0
    %3760 = vmatprep.subr.mxu0 0.0
    %3761 = vmatpush1.msra.mxu0 0.0
    %3762 = vmatprep.subr.mxu0 0.0
    %3763 = vmatpush1.msra.mxu0 0.0
    %3764 = vmatprep.subr.mxu0 0.0
    %3765 = vmatpush1.msra.mxu0 0.0
    %3766 = vmatprep.subr.mxu0 0.0
    %3767 = vmatpush1.msra.mxu0 0.0
    %3768 = vmatprep.subr.mxu0 0.0
    %3769 = vmatpush1.msra.mxu0 0.0
    %3770 = vmatprep.subr.mxu0 0.0
    %3771 = vmatpush1.msra.mxu0 0.0
    %3772 = vmatprep.subr.mxu0 0.0
    %3773 = vmatpush1.msra.mxu0 0.0
    %3774 = vmatprep.subr.mxu0 0.0
    %3775 = vmatpush1.msra.mxu0 0.0
    %3776 = vmatprep.subr.mxu0 0.0
    %3777 = vmatpush1.msra.mxu0 0.0
    %3778 = vmatprep.subr.mxu0 0.0
    %3779 = vmatpush1.msra.mxu0 0.0
    %3780 = vmatprep.subr.mxu0 0.0
    %3781 = vmatpush1.msra.mxu0 0.0
    %3782 = vmatprep.subr.mxu0 0.0
    %3783 = vmatpush1.msra.mxu0 0.0
    %3784 = vmatprep.subr.mxu0 0.0
    %3785 = vmatpush1.msra.mxu0 0.0
    %3786 = vmatprep.subr.mxu0 0.0
    %3787 = vmatpush1.msra.mxu0 0.0
    %3788 = vmatprep.subr.mxu0 0.0
    %3789 = vmatpush1.msra.mxu0 0.0
    %3790 = vmatprep.subr.mxu0 0.0
    %3791 = vmatpush1.msra.mxu0 0.0
    %3792 = vmatprep.subr.mxu0 0.0
    %3793 = vmatpush1.msra.mxu0 0.0
    %3794 = vmatprep.subr.mxu0 0.0
    %3795 = vmatpush1.msra.mxu0 0.0
    %3796 = vmatprep.subr.mxu0 0.0
    %3797 = vmatpush1.msra.mxu0 0.0
    %3798 = vmatprep.subr.mxu0 0.0
    %3799 = vmatpush1.msra.mxu0 0.0
    %3800 = vmatprep.mubr.f32.mxu0 0.0
    %3801 = vmatmul.mubr.f32.gmra.mrb[0].mxu0 %v3734
    %v3802 = vpop.f32.mrb[0].mxu0
    %v3803 = vadd.f32 %v3729, %v3802
    %v3804 = vpop.f32.mrb[0].mxu0
    %3805 = vdwg.mxu0
    %vm3806 = vcmask 23552
    %v3807 = vsel %vm3806, %v3803, -inf
    %3808 = vmax.xlane.f32.xlu0 %v3807
    %v3809 = vpop.xlane.xlu0 %3808
    %v3810 = vsub.f32 %v3803, %v3809
    %v3811 = vmul.f32 %v3810, 1.442695
    %v3812 = vpow.pop %v3811
    %v3813 = vsel %vm3806, %v3812, 0.0
    %3814 = vadd.xlane.f32.xlu0 %v3813
    %v3815 = vpop.xlane.xlu0 %3814
    %v3816 = vlog2.pop %v3815
    %v3817 = vmul.f32 %v3816, 0.6931472
    %v3818 = vsub.f32 %v3810, %v3817
    %3819 = vst.msk [vmem:[%s6] sm:$0xff] %vm3806, %v3818
    // Predicated region
    $region30: #{tpu_custom_call.1} parent=1 // pred_check
      _
    $region31: #{tpu_custom_call.1} parent=1 // pred_check_branch
      %3821 = sbr.rel (0) target = $region33
    $region32: #{tpu_custom_call.1} parent=1 // pred_region
      _
    $region33: #{tpu_custom_call.1} parent=1 // pred_fallthru
      _
    // Predicated region
    $region34: #{tpu_custom_call.1} parent=1 // pred_check
      _
    $region35: #{tpu_custom_call.1} parent=1 // pred_check_branch
      %3823 = sbr.rel (0) target = $region37
    $region36: #{tpu_custom_call.1} parent=1 // pred_region
      _
    $region37: #{tpu_custom_call.1} parent=1 // pred_fallthru
      _
    %3824 = vsyncpa [#allocation3], 1

</llo_original>
